<compile_context>
chip_gen: v7x
topology: tpu7x:2x2x1
jax: 0.10.0
libtpu: 0.0.40
codegen_flags: <defaults>
</compile_context>

<pallas_src>
import functools
import math

import jax
import jax.numpy as jnp
from jax.experimental import pallas as pl
from jax.experimental.pallas import tpu as pltpu

_LANES = 128          # vreg lane width
_TILE_GRANULE = 1024  # batch-tile granularity: 8 sublanes x 128 lanes of packed outputs


def _round_up(x: int, m: int) -> int:
    return (x + m - 1) // m * m


# ---------------------------------------------------------------------------
# Kernels
# ---------------------------------------------------------------------------

def _row_dot_lane_packed(x_ref, w_ref):
    """sum_d x[i, d] * w[0, d] for every row of the block, returned lane-dense.

    Result shape is (block_b // 128, 128) float32: 128 consecutive row results are packed
    across the lanes of one output row, so the downstream bias/sigmoid/cast/store run on
    dense vregs and the store is an unmasked `vst` (review: lane-dense out_spec).
    """
    block_b, d = x_ref.shape
    g = block_b // _LANES
    if d > _LANES and d % _LANES == 0:
        # Consume the feature dim in 128-lane chunks accumulated on the VPU: no full
        # (block_b, d) f32 temp is materialized and only one cross-lane reduce remains.
        acc = (x_ref[:, 0:_LANES].astype(jnp.float32)
               * w_ref[:, 0:_LANES].astype(jnp.float32))
        for c in range(1, d // _LANES):
            lo = c * _LANES
            acc = acc + (x_ref[:, lo:lo + _LANES].astype(jnp.float32)
                         * w_ref[:, lo:lo + _LANES].astype(jnp.float32))
    else:
        acc = x_ref[...].astype(jnp.float32) * w_ref[...].astype(jnp.float32)
    # Layout-preserving split of the batch dim, then a single lane reduce whose result
    # comes out lane-dense (128 row results per output row).
    # TODO(synk): if a bundle dump shows the XLU reduce as the binding slot (very small
    #             input_dim), switch this final reduce to a ones-matmul on the idle MXU.
    acc3 = acc.reshape(g, _LANES, acc.shape[-1])
    return jnp.sum(acc3, axis=-1)                     # (g, 128) float32


def _lf_kernel(x_ref, w_ref, b_ref, o_ref, *, apply_sigmoid: bool):
    """LogisticClassifier: h = x @ w.T + b, optional sigmoid. Lane-dense output."""
    h = _row_dot_lane_packed(x_ref, w_ref) + b_ref[0]   # scalar bias from SMEM
    if apply_sigmoid:
        h = jax.nn.sigmoid(h)                            # EUP, on dense vregs
    o_ref[...] = h.astype(o_ref.dtype)


def _mlp_kernel(x_ref, w1t_ref, b1_ref, w2_ref, b2_ref, o_ref, *, apply_sigmoid: bool):
    """MLPClassifier: h = tanh(x @ W1.T + b1) @ w2.T + b2, optional sigmoid."""
    block_b = x_ref.shape[0]
    g = block_b // _LANES
    x = x_ref[...].astype(jnp.float32)
    w1t = w1t_ref[...].astype(jnp.float32)                        # (D, H)
    hidden = jnp.dot(x, w1t, preferred_element_type=jnp.float32)  # MXU, (block_b, H)
    hidden = jnp.tanh(hidden + b1_ref[...].astype(jnp.float32))   # EUP
    acc = hidden * w2_ref[...].astype(jnp.float32)                # (block_b, H)
    h = jnp.sum(acc.reshape(g, _LANES, acc.shape[-1]), axis=-1) + b2_ref[0]
    if apply_sigmoid:
        h = jax.nn.sigmoid(h)
    o_ref[...] = h.astype(o_ref.dtype)


# ---------------------------------------------------------------------------
# Wrapper plumbing
# ---------------------------------------------------------------------------

def _prepare_batch(x):
    """Pad only tiny / cheap ragged batches to a multiple of 128 rows.

    Large ragged batches are NOT padded (jnp.pad would re-stream the whole array through
    HBM, ~2-3x traffic on a bandwidth-bound op); their ragged last block is handled by
    Pallas OOB masking, which is safe because every output depends only on its own row.
    """
    b, d = x.shape
    itemsize = jnp.dtype(x.dtype).itemsize
    if b % _LANES != 0 and (b < _TILE_GRANULE or b * d * itemsize <= (4 << 20)):
        b_eff = _round_up(b, _LANES)
        x = jnp.pad(x, ((0, b_eff - b), (0, 0)))
    else:
        b_eff = b
    return x, b_eff


def _pick_tile_and_vmem(b_eff: int, d: int, in_itemsize: int, out_itemsize: int):
    """Choose the batch tile from the VMEM budget, accounting for 128-lane padding."""
    try:
        vmem_cap = int(pltpu.get_tpu_info().vmem_capacity_bytes)
    except Exception:                    # conservative fallback: v7x per-core VMEM
        vmem_cap = 64 << 20
    # ~48 MiB limit on v7x (64 MiB physical), ~96 MiB on v5e/v6e (128 MiB physical).
    vmem_limit = max(min((vmem_cap * 3) // 4, 96 << 20), 32 << 20)

    d_pad = _round_up(d, _LANES)         # the x block is lane-padded in VMEM
    # Per batch row: double-buffered x block + double-buffered packed out block
    # + in-kernel f32 temps (acc / hidden intermediates).
    per_row = 2 * d_pad * in_itemsize + 2 * out_itemsize + 2 * _LANES * 4
    budget = max(vmem_limit - (4 << 20), 1 << 20)    # resident weights + headroom
    tile = budget // per_row
    # Cap each x block at ~16 MiB: per-step DMA stays far above the ~0.35 us pipeline
    # overhead on v5e/v6e/v7x without hogging VMEM.  (pipeline_mode=pl.Buffered(3) is a
    # possible further sweep on v7x; kept at the default 2 buffers here.)
    tile = min(tile, (16 << 20) // max(1, d_pad * in_itemsize))
    tile = max(_TILE_GRANULE, (tile // _TILE_GRANULE) * _TILE_GRANULE)
    # TODO(synk): add a feature-dim grid axis for extremely large input_dim where even a
    #             1024-row block would not fit the VMEM budget.

    if b_eff < _TILE_GRANULE:
        tile = b_eff                     # single full block (multiple of 128 by prep)
    else:
        tile = min(tile, (b_eff // _TILE_GRANULE) * _TILE_GRANULE)
        if b_eff >= 2 * _TILE_GRANULE:
            # >= 2 grid steps so ("parallel",) can shard tiles over both v7x TensorCores.
            tile = min(tile, _round_up(pl.cdiv(b_eff, 2), _TILE_GRANULE))
    return tile, vmem_limit


def _unpack_output(out2d, batch):
    # (out_rows, 128) lane-packed -> (batch, 1); tiny array, negligible wrapper cost.
    return out2d.reshape(-1)[:batch].reshape(batch, 1)


def logistic_classifier_forward(x, w, b, *, sigmoid=False):
    """LogisticClassifier.forward: x (B, D), w (1, D) [PyTorch layout], b (1,) -> (B, 1)."""
    batch, d = x.shape
    assert w.shape == (1, d), w.shape
    w = jnp.asarray(w)
    bias = jnp.asarray(b, jnp.float32).reshape((1,))

    x_eff, b_eff = _prepare_batch(x)
    in_item = jnp.dtype(x.dtype).itemsize
    out_item = in_item
    tile, vmem_limit = _pick_tile_and_vmem(b_eff, d, in_item, out_item)
    grid = (pl.cdiv(b_eff, tile),)
    out_rows = pl.cdiv(b_eff, _LANES)

    out2d = pl.pallas_call(
        functools.partial(_lf_kernel, apply_sigmoid=sigmoid),
        out_shape=jax.ShapeDtypeStruct((out_rows, _LANES), x.dtype),
        grid=grid,
        in_specs=[
            # x: batch-tiled, double-buffered HBM->VMEM by the BlockSpec pipeline.
            pl.BlockSpec((tile, d), lambda i: (i, 0)),
            # w: constant index_map -> fetched once, stays resident across grid steps.
            pl.BlockSpec((1, d), lambda i: (0, 0)),
            # bias: scalar in SMEM (no per-step VMEM DMA).
            pl.BlockSpec(memory_space=pltpu.MemorySpace.SMEM),
        ],
        # Lane-dense output: 128 row results per output row -> unmasked stores.
        out_specs=pl.BlockSpec((tile // _LANES, _LANES), lambda i: (i, 0)),
        compiler_params=pltpu.CompilerParams(
            dimension_semantics=("parallel",),
            vmem_limit_bytes=int(vmem_limit),
        ),
        cost_estimate=pl.CostEstimate(
            flops=2 * b_eff * d,
            transcendentals=b_eff if sigmoid else 0,
            bytes_accessed=b_eff * d * in_item + out_rows * _LANES * out_item + d * 4 + 4,
        ),
    )(x_eff, w, bias)
    return _unpack_output(out2d, batch)


def mlp_classifier_forward(x, w1, b1, w2, b2, *, sigmoid=False):
    """MLPClassifier.forward: Linear(D,H) -> Tanh -> Linear(H,1), PyTorch weight layouts."""
    batch, d = x.shape
    h_dim = w1.shape[0]
    assert w1.shape == (h_dim, d) and w2.shape == (1, h_dim)
    w1t = jnp.asarray(w1).T                               # (D, H): tiny one-off transpose
    b1v = jnp.asarray(b1, jnp.float32).reshape((1, h_dim))
    w2v = jnp.asarray(w2)
    b2v = jnp.asarray(b2, jnp.float32).reshape((1,))

    x_eff, b_eff = _prepare_batch(x)
    in_item = jnp.dtype(x.dtype).itemsize
    out_item = in_item
    tile, vmem_limit = _pick_tile_and_vmem(b_eff, d, in_item, out_item)
    grid = (pl.cdiv(b_eff, tile),)
    out_rows = pl.cdiv(b_eff, _LANES)

    out2d = pl.pallas_call(
        functools.partial(_mlp_kernel, apply_sigmoid=sigmoid),
        out_shape=jax.ShapeDtypeStruct((out_rows, _LANES), x.dtype),
        grid=grid,
        in_specs=[
            pl.BlockSpec((tile, d), lambda i: (i, 0)),         # x (tiled)
            pl.BlockSpec((d, h_dim), lambda i: (0, 0)),        # W1^T (resident)
            pl.BlockSpec((1, h_dim), lambda i: (0, 0)),        # b1  (resident)
            pl.BlockSpec((1, h_dim), lambda i: (0, 0)),        # w2  (resident)
            pl.BlockSpec(memory_space=pltpu.MemorySpace.SMEM), # b2 scalar
        ],
        out_specs=pl.BlockSpec((tile // _LANES, _LANES), lambda i: (i, 0)),
        compiler_params=pltpu.CompilerParams(
            dimension_semantics=("parallel",),
            vmem_limit_bytes=int(vmem_limit),
        ),
        cost_estimate=pl.CostEstimate(
            flops=2 * b_eff * d * h_dim + 4 * b_eff * h_dim,
            transcendentals=b_eff * (h_dim + (1 if sigmoid else 0)),
            bytes_accessed=(b_eff * d * in_item + out_rows * _LANES * out_item
                            + (d * h_dim + 2 * h_dim + 1) * 4),
        ),
    )(x_eff, w1t, b1v, w2v, b2v)
    return _unpack_output(out2d, batch)


def lbe_forward(x, params, kind="MLP"):
    """LBE.forward(x) = sigmoid(h(x)) for the chosen classifier kind."""
    if kind == "LF":
        return logistic_classifier_forward(x, params["w"], params["b"], sigmoid=True)
    if kind == "MLP":
        return mlp_classifier_forward(x, params["w1"], params["b1"],
                                      params["w2"], params["b2"], sigmoid=True)
    raise ValueError(f"unknown kind: {kind}")


# ---------------------------------------------------------------------------
# Demo / correctness checks
# ---------------------------------------------------------------------------

if __name__ == "__main__":
    key = jax.random.PRNGKey(0)
    ks = jax.random.split(key, 10)
    HIGH = jax.lax.Precision.HIGHEST

    # ---- kind='MLP' (module default): sigmoid(Linear(H,1)(tanh(Linear(D,H)(x)))) ----
    batch, input_dim, hidden_dim = 2048, 32, 10
    x = jax.random.normal(ks[0], (batch, input_dim), jnp.float32)
    bnd1 = 1.0 / math.sqrt(input_dim)
    bnd2 = 1.0 / math.sqrt(hidden_dim)
    w1 = jax.random.uniform(ks[1], (hidden_dim, input_dim), jnp.float32, -bnd1, bnd1)
    b1 = jax.random.uniform(ks[2], (hidden_dim,), jnp.float32, -bnd1, bnd1)
    w2 = jax.random.uniform(ks[3], (1, hidden_dim), jnp.float32, -bnd2, bnd2)
    b2 = jax.random.uniform(ks[4], (1,), jnp.float32, -bnd2, bnd2)

    out_mlp = lbe_forward(x, dict(w1=w1, b1=b1, w2=w2, b2=b2), kind="MLP")
    jax.block_until_ready(out_mlp)
    hid_ref = jnp.tanh(jnp.matmul(x, w1.T, precision=HIGH) + b1)
    ref_mlp = jax.nn.sigmoid(jnp.matmul(hid_ref, w2.T, precision=HIGH) + b2)
    assert out_mlp.shape == (batch, 1)
    assert jnp.allclose(out_mlp, ref_mlp, atol=1e-4, rtol=1e-4)

    # ---- kind='LF': sigmoid(Linear(D,1)(x)); also check the raw-logit path ----
    w = jax.random.uniform(ks[5], (1, input_dim), jnp.float32, -bnd1, bnd1)
    b = jax.random.uniform(ks[6], (1,), jnp.float32, -bnd1, bnd1)
    out_lf = lbe_forward(x, dict(w=w, b=b), kind="LF")
    logits = logistic_classifier_forward(x, w, b, sigmoid=False)
    jax.block_until_ready(out_lf)
    jax.block_until_ready(logits)
    ref_logits = jnp.matmul(x, w.T, precision=HIGH) + b
    assert jnp.allclose(logits, ref_logits, atol=1e-4, rtol=1e-4)
    assert jnp.allclose(out_lf, jax.nn.sigmoid(ref_logits), atol=1e-4, rtol=1e-4)

    # ---- ragged batch + chunked feature reduction (D > 128) ----
    batch2, input_dim2 = 2000, 256
    x2 = jax.random.normal(ks[7], (batch2, input_dim2), jnp.float32)
    bnd = 1.0 / math.sqrt(input_dim2)
    wr = jax.random.uniform(ks[8], (1, input_dim2), jnp.float32, -bnd, bnd)
    br = jax.random.uniform(ks[9], (1,), jnp.float32, -bnd, bnd)
    out2 = logistic_classifier_forward(x2, wr, br, sigmoid=True)
    jax.block_until_ready(out2)
    ref2 = jax.nn.sigmoid(jnp.matmul(x2, wr.T, precision=HIGH) + br)
    assert out2.shape == (batch2, 1)
    assert jnp.allclose(out2, ref2, atol=1e-4, rtol=1e-4)

    # ---- tiny batch (single padded 128-row block) ----
    x3 = x[:8]
    out3 = logistic_classifier_forward(x3, w, b, sigmoid=True)
    jax.block_until_ready(out3)
    ref3 = jax.nn.sigmoid(jnp.matmul(x3, w.T, precision=HIGH) + b)
    assert out3.shape == (8, 1)
    assert jnp.allclose(out3, ref3, atol=1e-4, rtol=1e-4)

    print("KERNEL_OK")
</pallas_src>

<mosaic_0001>
module attributes {stable_mosaic.version = 11 : i64} {
  func.func @_mlp_kernel(%arg0: i32, %arg1: memref<1024x32xf32, #tpu.memory_space<vmem>>, %arg2: memref<32x10xf32, #tpu.memory_space<vmem>>, %arg3: memref<1x10xf32, #tpu.memory_space<vmem>>, %arg4: memref<1x10xf32, #tpu.memory_space<vmem>>, %arg5: memref<1xf32, #tpu.memory_space<smem>>, %arg6: memref<8x128xf32, #tpu.memory_space<vmem>>) attributes {dimension_semantics = [#tpu.dimension_semantics<parallel>], iteration_bounds = array<i64: 2>, scalar_prefetch = 0 : i64, scratch_operands = 0 : i64, tpu.core_type = #tpu.core_type<tc>, window_params = [{transform_indices = @transform_0, window_bounds = array<i64: 1024, 32>}, {pipeline_mode = #tpu.pipeline_mode<synchronous>, transform_indices = @transform_1, window_bounds = array<i64: 32, 10>}, {pipeline_mode = #tpu.pipeline_mode<synchronous>, transform_indices = @transform_2, window_bounds = array<i64: 1, 10>}, {pipeline_mode = #tpu.pipeline_mode<synchronous>, transform_indices = @transform_3, window_bounds = array<i64: 1, 10>}, {transform_indices = @transform_4, window_bounds = array<i64: 1>}, {transform_indices = @transform_5, window_bounds = array<i64: 8, 128>}]} {
    %c0 = arith.constant 0 : index
    %c0_0 = arith.constant 0 : index
    %0 = vector.load %arg1[%c0, %c0_0] : memref<1024x32xf32, #tpu.memory_space<vmem>>, vector<1024x32xf32>
    %c0_1 = arith.constant 0 : index
    %c0_2 = arith.constant 0 : index
    %1 = vector.load %arg2[%c0_1, %c0_2] : memref<32x10xf32, #tpu.memory_space<vmem>>, vector<32x10xf32>
    %cst = arith.constant dense<0.000000e+00> : vector<1024x10xf32>
    %2 = tpu.matmul %0, %1, %cst {dimension_numbers = #tpu.dot_dimension_numbers<[1], [0], [0], [1], [0, 0, 1, 1], [], []>} : vector<1024x32xf32>, vector<32x10xf32>, vector<1024x10xf32> -> vector<1024x10xf32>
    %c0_3 = arith.constant 0 : index
    %c0_4 = arith.constant 0 : index
    %3 = vector.load %arg3[%c0_3, %c0_4] : memref<1x10xf32, #tpu.memory_space<vmem>>, vector<1x10xf32>
    %4 = vector.broadcast %3 : vector<1x10xf32> to vector<1024x10xf32>
    %5 = arith.addf %2, %4 : vector<1024x10xf32>
    %6 = math.tanh %5 : vector<1024x10xf32>
    %c0_5 = arith.constant 0 : index
    %c0_6 = arith.constant 0 : index
    %7 = vector.load %arg4[%c0_5, %c0_6] : memref<1x10xf32, #tpu.memory_space<vmem>>, vector<1x10xf32>
    %8 = vector.broadcast %7 : vector<1x10xf32> to vector<1024x10xf32>
    %9 = arith.mulf %6, %8 : vector<1024x10xf32>
    %10 = vector.shape_cast %9 : vector<1024x10xf32> to vector<8x128x10xf32>
    %cst_7 = arith.constant dense<0.000000e+00> : vector<8x128xf32>
    %11 = vector.multi_reduction <add>, %10, %cst_7 [2] : vector<8x128x10xf32> to vector<8x128xf32>
    %c0_8 = arith.constant 0 : index
    %12 = memref.load %arg5[%c0_8] : memref<1xf32, #tpu.memory_space<smem>>
    %13 = vector.broadcast %12 : f32 to vector<8x128xf32>
    %14 = arith.addf %11, %13 : vector<8x128xf32>
    %15 = arith.negf %14 : vector<8x128xf32>
    %16 = math.exp %15 : vector<8x128xf32>
    %cst_9 = arith.constant 1.000000e+00 : f32
    %17 = vector.broadcast %cst_9 : f32 to vector<8x128xf32>
    %18 = arith.addf %17, %16 : vector<8x128xf32>
    %19 = arith.divf %17, %18 : vector<8x128xf32>
    %c0_10 = arith.constant 0 : index
    %c0_11 = arith.constant 0 : index
    %20 = vector.load %arg6[%c0_10, %c0_11] : memref<8x128xf32, #tpu.memory_space<vmem>>, vector<8x128xf32>
    tpu.vector_store %arg6[%c0_10, %c0_11], %19 {strides = array<i32>} : memref<8x128xf32, #tpu.memory_space<vmem>>, vector<8x128xf32>,
    return
  }
  func.func @transform_0(%arg0: i32) -> (i32, i32) {
    %c0_i32 = arith.constant 0 : i32
    %c0_i32_0 = arith.constant 0 : i32
    return %arg0, %c0_i32 : i32, i32
  }
  func.func @transform_1(%arg0: i32) -> (i32, i32) {
    %c0_i32 = arith.constant 0 : i32
    %c0_i32_0 = arith.constant 0 : i32
    %c0_i32_1 = arith.constant 0 : i32
    return %c0_i32, %c0_i32_0 : i32, i32
  }
  func.func @transform_2(%arg0: i32) -> (i32, i32) {
    %c0_i32 = arith.constant 0 : i32
    %c0_i32_0 = arith.constant 0 : i32
    %c0_i32_1 = arith.constant 0 : i32
    return %c0_i32, %c0_i32_0 : i32, i32
  }
  func.func @transform_3(%arg0: i32) -> (i32, i32) {
    %c0_i32 = arith.constant 0 : i32
    %c0_i32_0 = arith.constant 0 : i32
    %c0_i32_1 = arith.constant 0 : i32
    return %c0_i32, %c0_i32_0 : i32, i32
  }
  func.func @transform_4(%arg0: i32) -> i32 {
    %c0_i32 = arith.constant 0 : i32
    %c0_i32_0 = arith.constant 0 : i32
    return %c0_i32 : i32
  }
  func.func @transform_5(%arg0: i32) -> (i32, i32) {
    %c0_i32 = arith.constant 0 : i32
    %c0_i32_0 = arith.constant 0 : i32
    return %arg0, %c0_i32 : i32, i32
  }
}

</mosaic_0001>

<llo_original>
// kernel: tpu_custom_call.1
$region0: #{tpu_custom_call.1}
  #allocation0 [shape = 'u32[]', space=smem, size = 0x4, offset = 0x4, fixed_abs, tag = 'smem constant byte address 0x4 - core index']
  #allocation1 [shape = 'u32[144,128]{1,0:T(1,128)}', space=vmem, size = 0x12000, scoped, tag = 'internal scratch']
  #allocation2 [shape = 'f32[1]{0:T(128)S(6)}', space=smem, size = 0x200, scoped, tag = 'scoped memory for tpu_custom_call.1']
  %s0 = inlined_call_operand.vmem [shape: f32[2048,32], index: 0, kind: input, shape index: {}]
  %s1 = inlined_call_operand.vmem [shape: f32[32,10], index: 1, kind: input, shape index: {}]
  %s2 = inlined_call_operand.vmem [shape: f32[1,10], index: 2, kind: input, shape index: {}]
  %s3 = inlined_call_operand.vmem [shape: f32[1,10], index: 3, kind: input, shape index: {}]
  %s4 = inlined_call_operand.<no memory space> [shape: f32[1], index: 4, kind: input, shape index: {}]
  %s5 = inlined_call_operand.hbm [shape: f32[16,128], index: 5, kind: output, shape index: {}]
  %s6 = sld [smem:[#allocation0]]
  $region53: #{tpu_custom_call.1} parent=0
    _
  %s8 = ssub.s32 1, %s6
  %s9 = scalar_select 0, %s8, %s6
  %10 = sst [smem:[#allocation2]] %s4
  $region1: #{tpu_custom_call.1} parent=0
    #allocation3 [shape = 'u8[8192]{0}', space=vmem, size = 0x2000, scoped, tag = 'output window, operand 0']
    #allocation4 [shape = 's32[2]{0}', space=sflag, size = 0x8, scoped, tag = 'scoped memory for tpu_custom_call.1']
    %11 = vsyncpa [#allocation4], 0
    %s12 = scalar_lea.sflag [#allocation4], 1
    %13 = vsyncpa %s12, 0
    loop: start=0, step=1, limit=4
    $region2: #{tpu_custom_call.1} parent=1 // loop_pre_header
      _
    $region3: #{tpu_custom_call.1} parent=1 // loop_header
      %s15 = sphi 0, %s19
      %p16 = scmp.ge.s32.totalorder %s15, 4
      %s25 = sphi 0, %s27
      %s28 = sphi 0, %s25
      %s29 = sphi 0, %s28
      %s45 = sphi 0, %s29
      %s49 = sphi 0, %s49
      %s51 = sphi 0, %s49
      %s52 = sphi 0, %s51
      %s66 = sphi 0, %s52
      %s70 = sphi 0, %s70
      %s72 = sphi 0, %s70
      %s73 = sphi 0, %s72
      %s87 = sphi 0, %s73
      %s91 = sphi 0, %s91
      %s93 = sphi 0, %s91
      %s94 = sphi 0, %s93
      %s108 = sphi 0, %s94
      %s112 = sphi 0, %s112
      %s114 = sphi 0, %s112
      %s115 = sphi 0, %s114
      %s129 = sphi 0, %s115
      %s135 = sphi 0, %s137
      %s138 = sphi 0, %s135
      %s139 = sphi 0, %s138
      %s155 = sphi 0, %s139
    $region4: #{tpu_custom_call.1} parent=1 // loop_header_branch
      %18 = sbr.rel (%p16) target = $region8
    $region5: #{tpu_custom_call.1} parent=1 // loop_body
      %s20 = ssub.s32 %s15, 1
      %s21 = ssub.s32 %s15, 2
      %s22 = sadd.s32 %s15, 1
      %s23 = ssub.s32 %s15, %s22
      %p24 = scmp.eq.s32.totalorder %s23, 0
      %s26 = sadd.s32 %s25, 1
      %s27 = scalar_select %p24, %s25, %s26
      %p30 = pneg %p24
      %p31 = scmp.eq.s32.totalorder %s15, 1
      %p32 = por %p30, %p31
      %p33 = scmp.ne.s32.totalorder %s25, %s28
      %p34 = scmp.eq.s32.totalorder %s15, 0
      %p35 = por %p33, %p34
      %p36 = scmp.ne.s32.totalorder %s25, %s28
      %p37 = scmp.eq.s32.totalorder %s20, 1
      %p38 = por %p36, %p37
      %p39 = scmp.ne.s32.totalorder %s28, %s29
      %p40 = scmp.eq.s32.totalorder %s20, 0
      %p41 = por %p39, %p40
      %p42 = scmp.ne.s32.totalorder %s28, %s29
      %p43 = scmp.eq.s32.totalorder %s21, 1
      %p44 = por %p42, %p43
      %p46 = scmp.ne.s32.totalorder %s29, %s45
      %p47 = scmp.eq.s32.totalorder %s21, 0
      %p48 = por %p46, %p47
      %s50 = sadd.s32 %s49, 1
      %p53 = scmp.eq.s32.totalorder %s15, 1
      %p54 = scmp.ne.s32.totalorder %s49, %s51
      %p55 = scmp.eq.s32.totalorder %s15, 0
      %p56 = por %p54, %p55
      %p57 = scmp.ne.s32.totalorder %s49, %s51
      %p58 = scmp.eq.s32.totalorder %s20, 1
      %p59 = por %p57, %p58
      %p60 = scmp.ne.s32.totalorder %s51, %s52
      %p61 = scmp.eq.s32.totalorder %s20, 0
      %p62 = por %p60, %p61
      %p63 = scmp.ne.s32.totalorder %s51, %s52
      %p64 = scmp.eq.s32.totalorder %s21, 1
      %p65 = por %p63, %p64
      %p67 = scmp.ne.s32.totalorder %s52, %s66
      %p68 = scmp.eq.s32.totalorder %s21, 0
      %p69 = por %p67, %p68
      %s71 = sadd.s32 %s70, 1
      %p74 = scmp.eq.s32.totalorder %s15, 1
      %p75 = scmp.ne.s32.totalorder %s70, %s72
      %p76 = scmp.eq.s32.totalorder %s15, 0
      %p77 = por %p75, %p76
      %p78 = scmp.ne.s32.totalorder %s70, %s72
      %p79 = scmp.eq.s32.totalorder %s20, 1
      %p80 = por %p78, %p79
      %p81 = scmp.ne.s32.totalorder %s72, %s73
      %p82 = scmp.eq.s32.totalorder %s20, 0
      %p83 = por %p81, %p82
      %p84 = scmp.ne.s32.totalorder %s72, %s73
      %p85 = scmp.eq.s32.totalorder %s21, 1
      %p86 = por %p84, %p85
      %p88 = scmp.ne.s32.totalorder %s73, %s87
      %p89 = scmp.eq.s32.totalorder %s21, 0
      %p90 = por %p88, %p89
      %s92 = sadd.s32 %s91, 1
      %p95 = scmp.eq.s32.totalorder %s15, 1
      %p96 = scmp.ne.s32.totalorder %s91, %s93
      %p97 = scmp.eq.s32.totalorder %s15, 0
      %p98 = por %p96, %p97
      %p99 = scmp.ne.s32.totalorder %s91, %s93
      %p100 = scmp.eq.s32.totalorder %s20, 1
      %p101 = por %p99, %p100
      %p102 = scmp.ne.s32.totalorder %s93, %s94
      %p103 = scmp.eq.s32.totalorder %s20, 0
      %p104 = por %p102, %p103
      %p105 = scmp.ne.s32.totalorder %s93, %s94
      %p106 = scmp.eq.s32.totalorder %s21, 1
      %p107 = por %p105, %p106
      %p109 = scmp.ne.s32.totalorder %s94, %s108
      %p110 = scmp.eq.s32.totalorder %s21, 0
      %p111 = por %p109, %p110
      %s113 = sadd.s32 %s112, 1
      %p116 = scmp.eq.s32.totalorder %s15, 1
      %p117 = scmp.ne.s32.totalorder %s112, %s114
      %p118 = scmp.eq.s32.totalorder %s15, 0
      %p119 = por %p117, %p118
      %p120 = scmp.ne.s32.totalorder %s112, %s114
      %p121 = scmp.eq.s32.totalorder %s20, 1
      %p122 = por %p120, %p121
      %p123 = scmp.ne.s32.totalorder %s114, %s115
      %p124 = scmp.eq.s32.totalorder %s20, 0
      %p125 = por %p123, %p124
      %p126 = scmp.ne.s32.totalorder %s114, %s115
      %p127 = scmp.eq.s32.totalorder %s21, 1
      %p128 = por %p126, %p127
      %p130 = scmp.ne.s32.totalorder %s115, %s129
      %p131 = scmp.eq.s32.totalorder %s21, 0
      %p132 = por %p130, %p131
      %s133 = ssub.s32 %s15, %s22
      %p134 = scmp.eq.s32.totalorder %s133, 0
      %s136 = sadd.s32 %s135, 1
      %s137 = scalar_select %p134, %s135, %s136
      %p140 = pneg %p134
      %p141 = scmp.eq.s32.totalorder %s15, 1
      %p142 = por %p140, %p141
      %p143 = scmp.ne.s32.totalorder %s135, %s138
      %p144 = scmp.eq.s32.totalorder %s15, 0
      %p145 = por %p143, %p144
      %p146 = scmp.ne.s32.totalorder %s135, %s138
      %p147 = scmp.eq.s32.totalorder %s20, 1
      %p148 = por %p146, %p147
      %p149 = scmp.ne.s32.totalorder %s138, %s139
      %p150 = scmp.eq.s32.totalorder %s20, 0
      %p151 = por %p149, %p150
      %p152 = scmp.ne.s32.totalorder %s138, %s139
      %p153 = scmp.eq.s32.totalorder %s21, 1
      %p154 = por %p152, %p153
      %p156 = scmp.ne.s32.totalorder %s139, %s155
      %p157 = scmp.eq.s32.totalorder %s21, 0
      %p158 = por %p156, %p157
      %p159 = scmp.le.s32.totalorder 1, %s15
      %p160 = scmp.lt.s32.totalorder %s15, 3
      %p161 = pnand %p159, %p160
      %p162 = pneg %p161
      // Predicated region
      $region9: #{tpu_custom_call.1} parent=5 // pred_check
        _
      $region10: #{tpu_custom_call.1} parent=5 // pred_check_branch
        %164 = sbr.rel (%p161) target = $region12
      $region11: #{tpu_custom_call.1} parent=5 // pred_region
        %s165 = ssub.s32 %s15, 1
        // Predicated region
        $region13: #{tpu_custom_call.1} parent=11 // pred_check
          %p166 = pneg %p62
        $region14: #{tpu_custom_call.1} parent=11 // pred_check_branch
          %168 = sbr.rel (%p166) target = $region16
        $region15: #{tpu_custom_call.1} parent=11 // pred_region
          _
        $region16: #{tpu_custom_call.1} parent=11 // pred_fallthru
          _
        // Predicated region
        $region17: #{tpu_custom_call.1} parent=11 // pred_check
          %p169 = pneg %p83
        $region18: #{tpu_custom_call.1} parent=11 // pred_check_branch
          %171 = sbr.rel (%p169) target = $region20
        $region19: #{tpu_custom_call.1} parent=11 // pred_region
          _
        $region20: #{tpu_custom_call.1} parent=11 // pred_fallthru
          _
        // Predicated region
        $region21: #{tpu_custom_call.1} parent=11 // pred_check
          %p172 = pneg %p104
        $region22: #{tpu_custom_call.1} parent=11 // pred_check_branch
          %174 = sbr.rel (%p172) target = $region24
        $region23: #{tpu_custom_call.1} parent=11 // pred_region
          _
        $region24: #{tpu_custom_call.1} parent=11 // pred_fallthru
          _
        // Predicated region
        $region25: #{tpu_custom_call.1} parent=11 // pred_check
          %p175 = pneg %p125
        $region26: #{tpu_custom_call.1} parent=11 // pred_check_branch
          %177 = sbr.rel (%p175) target = $region28
        $region27: #{tpu_custom_call.1} parent=11 // pred_region
          _
        $region28: #{tpu_custom_call.1} parent=11 // pred_fallthru
          _
      $region12: #{tpu_custom_call.1} parent=5 // pred_fallthru
        _
      %p178 = scmp.lt.s32.totalorder %s15, 2
      // Predicated region
      $region29: #{tpu_custom_call.1} parent=5 // pred_check
        %p179 = pneg %p178
      $region30: #{tpu_custom_call.1} parent=5 // pred_check_branch
        %181 = sbr.rel (%p179) target = $region32
      $region31: #{tpu_custom_call.1} parent=5 // pred_region
        // Predicated region
        $region33: #{tpu_custom_call.1} parent=31 // pred_check
          %p182 = pneg %p35
        $region34: #{tpu_custom_call.1} parent=31 // pred_check_branch
          %184 = sbr.rel (%p182) target = $region36
        $region35: #{tpu_custom_call.1} parent=31 // pred_region
          %s185 = smul.u32 128, %s15
          %p186 = scmp.lt.s32.totalorder %s185, 255
          %s187 = scalar_select %p186, %s185, 255
          %s188 = smul.addr %s187, 8
          %s189 = scalar_lea.vmem %s0, %s188
          %s190 = smul.u32 128, %s15
        $region36: #{tpu_custom_call.1} parent=31 // pred_fallthru
          _
      $region32: #{tpu_custom_call.1} parent=5 // pred_fallthru
        _
      %p191 = scmp.le.s32.totalorder 1, %s15
      %p192 = scmp.lt.s32.totalorder %s15, 3
      %p193 = pnand %p191, %p192
      %p194 = pneg %p193
      // Predicated region
      $region37: #{tpu_custom_call.1} parent=5 // pred_check
        _
      $region38: #{tpu_custom_call.1} parent=5 // pred_check_branch
        %196 = sbr.rel (%p193) target = $region40
      $region39: #{tpu_custom_call.1} parent=5 // pred_region
        %s197 = ssub.s32 %s15, 1
        %s198 = smul.u32 128, %s20
        %p199 = scmp.lt.s32.totalorder %s198, 255
        %s200 = scalar_select %p199, %s198, 255
        %s201 = smul.addr %s200, 8
        %s202 = scalar_lea.vmem %s0, %s201
        %p203 = pneg %p41
        %p204 = pneg %p38
        %p205 = pneg %p62
        %p206 = pneg %p59
        %p207 = pneg %p83
        %p208 = pneg %p80
        %p209 = pneg %p104
        %p210 = pneg %p101
        %p211 = pneg %p125
        %p212 = pneg %p122
        %p213 = pneg %p151
        %p214 = pneg %p148
        %s215 = sand.u32 %s138, 1
        %s216 = scalar_lea.sflag [#allocation4], %s215
        %s217 = sand.u32 %s138, 1
        %s218 = smul.addr %s217, 8
        %s219 = scalar_lea.vmem [#allocation3], %s218
        %s220 = smul.u32 128, %s20
        %p221 = scmp.lt.s32.totalorder %s220, 255
        %s222 = scalar_select %p221, %s220, 255
        %s223 = smul.addr %s222, 8
        %s224 = scalar_lea.vmem %s0, %s223
        %s225 = smul.u32 128, %s20
        %v226 = vld [vmem:[%s224] sm:$0xff]
        %v227 = vld [vmem:[%s224 + $0x8] sm:$0xff]
        %v228 = vld [vmem:[%s224 + $0x10] sm:$0xff]
        %v229 = vld [vmem:[%s224 + $0x18] sm:$0xff]
        %v230 = vld [vmem:[%s224 + $0x20] sm:$0xff]
        %v231 = vld [vmem:[%s224 + $0x28] sm:$0xff]
        %v232 = vld [vmem:[%s224 + $0x30] sm:$0xff]
        %v233 = vld [vmem:[%s224 + $0x38] sm:$0xff]
        %v234 = vld [vmem:[%s224 + $0x40] sm:$0xff]
        %v235 = vld [vmem:[%s224 + $0x48] sm:$0xff]
        %v236 = vld [vmem:[%s224 + $0x50] sm:$0xff]
        %v237 = vld [vmem:[%s224 + $0x58] sm:$0xff]
        %v238 = vld [vmem:[%s224 + $0x60] sm:$0xff]
        %v239 = vld [vmem:[%s224 + $0x68] sm:$0xff]
        %v240 = vld [vmem:[%s224 + $0x70] sm:$0xff]
        %v241 = vld [vmem:[%s224 + $0x78] sm:$0xff]
        %v242 = vld [vmem:[%s224 + $0x80] sm:$0xff]
        %v243 = vld [vmem:[%s224 + $0x88] sm:$0xff]
        %v244 = vld [vmem:[%s224 + $0x90] sm:$0xff]
        %v245 = vld [vmem:[%s224 + $0x98] sm:$0xff]
        %v246 = vld [vmem:[%s224 + $0xa0] sm:$0xff]
        %v247 = vld [vmem:[%s224 + $0xa8] sm:$0xff]
        %v248 = vld [vmem:[%s224 + $0xb0] sm:$0xff]
        %v249 = vld [vmem:[%s224 + $0xb8] sm:$0xff]
        %v250 = vld [vmem:[%s224 + $0xc0] sm:$0xff]
        %v251 = vld [vmem:[%s224 + $0xc8] sm:$0xff]
        %v252 = vld [vmem:[%s224 + $0xd0] sm:$0xff]
        %v253 = vld [vmem:[%s224 + $0xd8] sm:$0xff]
        %v254 = vld [vmem:[%s224 + $0xe0] sm:$0xff]
        %v255 = vld [vmem:[%s224 + $0xe8] sm:$0xff]
        %v256 = vld [vmem:[%s224 + $0xf0] sm:$0xff]
        %v257 = vld [vmem:[%s224 + $0xf8] sm:$0xff]
        %v258 = vld [vmem:[%s224 + $0x100] sm:$0xff]
        %v259 = vld [vmem:[%s224 + $0x108] sm:$0xff]
        %v260 = vld [vmem:[%s224 + $0x110] sm:$0xff]
        %v261 = vld [vmem:[%s224 + $0x118] sm:$0xff]
        %v262 = vld [vmem:[%s224 + $0x120] sm:$0xff]
        %v263 = vld [vmem:[%s224 + $0x128] sm:$0xff]
        %v264 = vld [vmem:[%s224 + $0x130] sm:$0xff]
        %v265 = vld [vmem:[%s224 + $0x138] sm:$0xff]
        %v266 = vld [vmem:[%s224 + $0x140] sm:$0xff]
        %v267 = vld [vmem:[%s224 + $0x148] sm:$0xff]
        %v268 = vld [vmem:[%s224 + $0x150] sm:$0xff]
        %v269 = vld [vmem:[%s224 + $0x158] sm:$0xff]
        %v270 = vld [vmem:[%s224 + $0x160] sm:$0xff]
        %v271 = vld [vmem:[%s224 + $0x168] sm:$0xff]
        %v272 = vld [vmem:[%s224 + $0x170] sm:$0xff]
        %v273 = vld [vmem:[%s224 + $0x178] sm:$0xff]
        %v274 = vld [vmem:[%s224 + $0x180] sm:$0xff]
        %v275 = vld [vmem:[%s224 + $0x188] sm:$0xff]
        %v276 = vld [vmem:[%s224 + $0x190] sm:$0xff]
        %v277 = vld [vmem:[%s224 + $0x198] sm:$0xff]
        %v278 = vld [vmem:[%s224 + $0x1a0] sm:$0xff]
        %v279 = vld [vmem:[%s224 + $0x1a8] sm:$0xff]
        %v280 = vld [vmem:[%s224 + $0x1b0] sm:$0xff]
        %v281 = vld [vmem:[%s224 + $0x1b8] sm:$0xff]
        %v282 = vld [vmem:[%s224 + $0x1c0] sm:$0xff]
        %v283 = vld [vmem:[%s224 + $0x1c8] sm:$0xff]
        %v284 = vld [vmem:[%s224 + $0x1d0] sm:$0xff]
        %v285 = vld [vmem:[%s224 + $0x1d8] sm:$0xff]
        %v286 = vld [vmem:[%s224 + $0x1e0] sm:$0xff]
        %v287 = vld [vmem:[%s224 + $0x1e8] sm:$0xff]
        %v288 = vld [vmem:[%s224 + $0x1f0] sm:$0xff]
        %v289 = vld [vmem:[%s224 + $0x1f8] sm:$0xff]
        %v290 = vld [vmem:[%s224 + $0x200] sm:$0xff]
        %v291 = vld [vmem:[%s224 + $0x208] sm:$0xff]
        %v292 = vld [vmem:[%s224 + $0x210] sm:$0xff]
        %v293 = vld [vmem:[%s224 + $0x218] sm:$0xff]
        %v294 = vld [vmem:[%s224 + $0x220] sm:$0xff]
        %v295 = vld [vmem:[%s224 + $0x228] sm:$0xff]
        %v296 = vld [vmem:[%s224 + $0x230] sm:$0xff]
        %v297 = vld [vmem:[%s224 + $0x238] sm:$0xff]
        %v298 = vld [vmem:[%s224 + $0x240] sm:$0xff]
        %v299 = vld [vmem:[%s224 + $0x248] sm:$0xff]
        %v300 = vld [vmem:[%s224 + $0x250] sm:$0xff]
        %v301 = vld [vmem:[%s224 + $0x258] sm:$0xff]
        %v302 = vld [vmem:[%s224 + $0x260] sm:$0xff]
        %v303 = vld [vmem:[%s224 + $0x268] sm:$0xff]
        %v304 = vld [vmem:[%s224 + $0x270] sm:$0xff]
        %v305 = vld [vmem:[%s224 + $0x278] sm:$0xff]
        %v306 = vld [vmem:[%s224 + $0x280] sm:$0xff]
        %v307 = vld [vmem:[%s224 + $0x288] sm:$0xff]
        %v308 = vld [vmem:[%s224 + $0x290] sm:$0xff]
        %v309 = vld [vmem:[%s224 + $0x298] sm:$0xff]
        %v310 = vld [vmem:[%s224 + $0x2a0] sm:$0xff]
        %v311 = vld [vmem:[%s224 + $0x2a8] sm:$0xff]
        %v312 = vld [vmem:[%s224 + $0x2b0] sm:$0xff]
        %v313 = vld [vmem:[%s224 + $0x2b8] sm:$0xff]
        %v314 = vld [vmem:[%s224 + $0x2c0] sm:$0xff]
        %v315 = vld [vmem:[%s224 + $0x2c8] sm:$0xff]
        %v316 = vld [vmem:[%s224 + $0x2d0] sm:$0xff]
        %v317 = vld [vmem:[%s224 + $0x2d8] sm:$0xff]
        %v318 = vld [vmem:[%s224 + $0x2e0] sm:$0xff]
        %v319 = vld [vmem:[%s224 + $0x2e8] sm:$0xff]
        %v320 = vld [vmem:[%s224 + $0x2f0] sm:$0xff]
        %v321 = vld [vmem:[%s224 + $0x2f8] sm:$0xff]
        %v322 = vld [vmem:[%s224 + $0x300] sm:$0xff]
        %v323 = vld [vmem:[%s224 + $0x308] sm:$0xff]
        %v324 = vld [vmem:[%s224 + $0x310] sm:$0xff]
        %v325 = vld [vmem:[%s224 + $0x318] sm:$0xff]
        %v326 = vld [vmem:[%s224 + $0x320] sm:$0xff]
        %v327 = vld [vmem:[%s224 + $0x328] sm:$0xff]
        %v328 = vld [vmem:[%s224 + $0x330] sm:$0xff]
        %v329 = vld [vmem:[%s224 + $0x338] sm:$0xff]
        %v330 = vld [vmem:[%s224 + $0x340] sm:$0xff]
        %v331 = vld [vmem:[%s224 + $0x348] sm:$0xff]
        %v332 = vld [vmem:[%s224 + $0x350] sm:$0xff]
        %v333 = vld [vmem:[%s224 + $0x358] sm:$0xff]
        %v334 = vld [vmem:[%s224 + $0x360] sm:$0xff]
        %v335 = vld [vmem:[%s224 + $0x368] sm:$0xff]
        %v336 = vld [vmem:[%s224 + $0x370] sm:$0xff]
        %v337 = vld [vmem:[%s224 + $0x378] sm:$0xff]
        %v338 = vld [vmem:[%s224 + $0x380] sm:$0xff]
        %v339 = vld [vmem:[%s224 + $0x388] sm:$0xff]
        %v340 = vld [vmem:[%s224 + $0x390] sm:$0xff]
        %v341 = vld [vmem:[%s224 + $0x398] sm:$0xff]
        %v342 = vld [vmem:[%s224 + $0x3a0] sm:$0xff]
        %v343 = vld [vmem:[%s224 + $0x3a8] sm:$0xff]
        %v344 = vld [vmem:[%s224 + $0x3b0] sm:$0xff]
        %v345 = vld [vmem:[%s224 + $0x3b8] sm:$0xff]
        %v346 = vld [vmem:[%s224 + $0x3c0] sm:$0xff]
        %v347 = vld [vmem:[%s224 + $0x3c8] sm:$0xff]
        %v348 = vld [vmem:[%s224 + $0x3d0] sm:$0xff]
        %v349 = vld [vmem:[%s224 + $0x3d8] sm:$0xff]
        %v350 = vld [vmem:[%s224 + $0x3e0] sm:$0xff]
        %v351 = vld [vmem:[%s224 + $0x3e8] sm:$0xff]
        %v352 = vld [vmem:[%s224 + $0x3f0] sm:$0xff]
        %v353 = vld [vmem:[%s224 + $0x3f8] sm:$0xff]
        %v354 = vld [vmem:[%s1] sm:$0xff]
        %v355 = vld [vmem:[%s1 + $0x8] sm:$0xff]
        %v356 = vld [vmem:[%s1 + $0x10] sm:$0xff]
        %v357 = vld [vmem:[%s1 + $0x18] sm:$0xff]
        %v358 = vld [vmem:[%s2] sm:$0x1]
        %v360 = vlaneseq
        %v361 = vshrl.u32 %v360, 7
        %v362 = vsub.s32 0, %v361
        %v363 = vrot.slane %v358, %v362
        %vm365 = vcmask 261120
        %v367 = vsel %vm365, %v226, 0
        %v370 = vsel %vm365, %v227, 0
        %v373 = vsel %vm365, %v228, 0
        %v376 = vsel %vm365, %v229, 0
        %v379 = vsel %vm365, %v230, 0
        %v382 = vsel %vm365, %v231, 0
        %v385 = vsel %vm365, %v232, 0
        %v388 = vsel %vm365, %v233, 0
        %v391 = vsel %vm365, %v234, 0
        %v394 = vsel %vm365, %v235, 0
        %v397 = vsel %vm365, %v236, 0
        %v400 = vsel %vm365, %v237, 0
        %v403 = vsel %vm365, %v238, 0
        %v406 = vsel %vm365, %v239, 0
        %v409 = vsel %vm365, %v240, 0
        %v412 = vsel %vm365, %v241, 0
        %v415 = vsel %vm365, %v242, 0
        %v418 = vsel %vm365, %v243, 0
        %v421 = vsel %vm365, %v244, 0
        %v424 = vsel %vm365, %v245, 0
        %v427 = vsel %vm365, %v246, 0
        %v430 = vsel %vm365, %v247, 0
        %v433 = vsel %vm365, %v248, 0
        %v436 = vsel %vm365, %v249, 0
        %v439 = vsel %vm365, %v250, 0
        %v442 = vsel %vm365, %v251, 0
        %v445 = vsel %vm365, %v252, 0
        %v448 = vsel %vm365, %v253, 0
        %v451 = vsel %vm365, %v254, 0
        %v454 = vsel %vm365, %v255, 0
        %v457 = vsel %vm365, %v256, 0
        %v460 = vsel %vm365, %v257, 0
        %v463 = vsel %vm365, %v258, 0
        %v466 = vsel %vm365, %v259, 0
        %v469 = vsel %vm365, %v260, 0
        %v472 = vsel %vm365, %v261, 0
        %v475 = vsel %vm365, %v262, 0
        %v478 = vsel %vm365, %v263, 0
        %v481 = vsel %vm365, %v264, 0
        %v484 = vsel %vm365, %v265, 0
        %v487 = vsel %vm365, %v266, 0
        %v490 = vsel %vm365, %v267, 0
        %v493 = vsel %vm365, %v268, 0
        %v496 = vsel %vm365, %v269, 0
        %v499 = vsel %vm365, %v270, 0
        %v502 = vsel %vm365, %v271, 0
        %v505 = vsel %vm365, %v272, 0
        %v508 = vsel %vm365, %v273, 0
        %v511 = vsel %vm365, %v274, 0
        %v514 = vsel %vm365, %v275, 0
        %v517 = vsel %vm365, %v276, 0
        %v520 = vsel %vm365, %v277, 0
        %v523 = vsel %vm365, %v278, 0
        %v526 = vsel %vm365, %v279, 0
        %v529 = vsel %vm365, %v280, 0
        %v532 = vsel %vm365, %v281, 0
        %v535 = vsel %vm365, %v282, 0
        %v538 = vsel %vm365, %v283, 0
        %v541 = vsel %vm365, %v284, 0
        %v544 = vsel %vm365, %v285, 0
        %v547 = vsel %vm365, %v286, 0
        %v550 = vsel %vm365, %v287, 0
        %v553 = vsel %vm365, %v288, 0
        %v556 = vsel %vm365, %v289, 0
        %v559 = vsel %vm365, %v290, 0
        %v562 = vsel %vm365, %v291, 0
        %v565 = vsel %vm365, %v292, 0
        %v568 = vsel %vm365, %v293, 0
        %v571 = vsel %vm365, %v294, 0
        %v574 = vsel %vm365, %v295, 0
        %v577 = vsel %vm365, %v296, 0
        %v580 = vsel %vm365, %v297, 0
        %v583 = vsel %vm365, %v298, 0
        %v586 = vsel %vm365, %v299, 0
        %v589 = vsel %vm365, %v300, 0
        %v592 = vsel %vm365, %v301, 0
        %v595 = vsel %vm365, %v302, 0
        %v598 = vsel %vm365, %v303, 0
        %v601 = vsel %vm365, %v304, 0
        %v604 = vsel %vm365, %v305, 0
        %v607 = vsel %vm365, %v306, 0
        %v610 = vsel %vm365, %v307, 0
        %v613 = vsel %vm365, %v308, 0
        %v616 = vsel %vm365, %v309, 0
        %v619 = vsel %vm365, %v310, 0
        %v622 = vsel %vm365, %v311, 0
        %v625 = vsel %vm365, %v312, 0
        %v628 = vsel %vm365, %v313, 0
        %v631 = vsel %vm365, %v314, 0
        %v634 = vsel %vm365, %v315, 0
        %v637 = vsel %vm365, %v316, 0
        %v640 = vsel %vm365, %v317, 0
        %v643 = vsel %vm365, %v318, 0
        %v646 = vsel %vm365, %v319, 0
        %v649 = vsel %vm365, %v320, 0
        %v652 = vsel %vm365, %v321, 0
        %v655 = vsel %vm365, %v322, 0
        %v658 = vsel %vm365, %v323, 0
        %v661 = vsel %vm365, %v324, 0
        %v664 = vsel %vm365, %v325, 0
        %v667 = vsel %vm365, %v326, 0
        %v670 = vsel %vm365, %v327, 0
        %v673 = vsel %vm365, %v328, 0
        %v676 = vsel %vm365, %v329, 0
        %v679 = vsel %vm365, %v330, 0
        %v682 = vsel %vm365, %v331, 0
        %v685 = vsel %vm365, %v332, 0
        %v688 = vsel %vm365, %v333, 0
        %v691 = vsel %vm365, %v334, 0
        %v694 = vsel %vm365, %v335, 0
        %v697 = vsel %vm365, %v336, 0
        %v700 = vsel %vm365, %v337, 0
        %v703 = vsel %vm365, %v338, 0
        %v706 = vsel %vm365, %v339, 0
        %v709 = vsel %vm365, %v340, 0
        %v712 = vsel %vm365, %v341, 0
        %v715 = vsel %vm365, %v342, 0
        %v718 = vsel %vm365, %v343, 0
        %v721 = vsel %vm365, %v344, 0
        %v724 = vsel %vm365, %v345, 0
        %v727 = vsel %vm365, %v346, 0
        %v730 = vsel %vm365, %v347, 0
        %v733 = vsel %vm365, %v348, 0
        %v736 = vsel %vm365, %v349, 0
        %v739 = vsel %vm365, %v350, 0
        %v742 = vsel %vm365, %v351, 0
        %v745 = vsel %vm365, %v352, 0
        %v748 = vsel %vm365, %v353, 0
        %750 = vmatprep.subr.mxu0 0.0
        %751 = vmatpush1.msra.mxu0 %v354
        %752 = vmatprep.subr.mxu0 0.0
        %753 = vmatpush1.msra.mxu0 %v355
        %754 = vmatprep.subr.mxu0 0.0
        %755 = vmatpush1.msra.mxu0 %v356
        %756 = vmatprep.subr.mxu0 0.0
        %757 = vmatpush1.msra.mxu0 %v357
        %758 = vmatprep.subr.mxu0 0.0
        %759 = vmatpush1.msra.mxu0 0.0
        %760 = vmatprep.subr.mxu0 0.0
        %761 = vmatpush1.msra.mxu0 0.0
        %762 = vmatprep.subr.mxu0 0.0
        %763 = vmatpush1.msra.mxu0 0.0
        %764 = vmatprep.subr.mxu0 0.0
        %765 = vmatpush1.msra.mxu0 0.0
        %766 = vmatprep.subr.mxu0 0.0
        %767 = vmatpush1.msra.mxu0 0.0
        %768 = vmatprep.subr.mxu0 0.0
        %769 = vmatpush1.msra.mxu0 0.0
        %770 = vmatprep.subr.mxu0 0.0
        %771 = vmatpush1.msra.mxu0 0.0
        %772 = vmatprep.subr.mxu0 0.0
        %773 = vmatpush1.msra.mxu0 0.0
        %774 = vmatprep.subr.mxu0 0.0
        %775 = vmatpush1.msra.mxu0 0.0
        %776 = vmatprep.subr.mxu0 0.0
        %777 = vmatpush1.msra.mxu0 0.0
        %778 = vmatprep.subr.mxu0 0.0
        %779 = vmatpush1.msra.mxu0 0.0
        %780 = vmatprep.subr.mxu0 0.0
        %781 = vmatpush1.msra.mxu0 0.0
        %782 = vmatprep.subr.mxu0 0.0
        %783 = vmatpush1.msra.mxu0 0.0
        %784 = vmatprep.subr.mxu0 0.0
        %785 = vmatpush1.msra.mxu0 0.0
        %786 = vmatprep.subr.mxu0 0.0
        %787 = vmatpush1.msra.mxu0 0.0
        %788 = vmatprep.subr.mxu0 0.0
        %789 = vmatpush1.msra.mxu0 0.0
        %790 = vmatprep.subr.mxu0 0.0
        %791 = vmatpush1.msra.mxu0 0.0
        %792 = vmatprep.subr.mxu0 0.0
        %793 = vmatpush1.msra.mxu0 0.0
        %794 = vmatprep.subr.mxu0 0.0
        %795 = vmatpush1.msra.mxu0 0.0
        %796 = vmatprep.subr.mxu0 0.0
        %797 = vmatpush1.msra.mxu0 0.0
        %798 = vmatprep.subr.mxu0 0.0
        %799 = vmatpush1.msra.mxu0 0.0
        %800 = vmatprep.subr.mxu0 0.0
        %801 = vmatpush1.msra.mxu0 0.0
        %802 = vmatprep.subr.mxu0 0.0
        %803 = vmatpush1.msra.mxu0 0.0
        %804 = vmatprep.subr.mxu0 0.0
        %805 = vmatpush1.msra.mxu0 0.0
        %806 = vmatprep.subr.mxu0 0.0
        %807 = vmatpush1.msra.mxu0 0.0
        %808 = vmatprep.subr.mxu0 0.0
        %809 = vmatpush1.msra.mxu0 0.0
        %810 = vmatprep.subr.mxu0 0.0
        %811 = vmatpush1.msra.mxu0 0.0
        %812 = vmatprep.subr.mxu0 0.0
        %813 = vmatpush1.msra.mxu0 0.0
        %814 = vmatprep.mubr.f32.mxu0 0.0
        %815 = vmatmul.mubr.f32.gmra.mrb[0].mxu0 %v367
        %v816 = vpop.f32.mrb[0].mxu0
        %v817 = vadd.f32 %v363, %v816
        %v818 = vpop.f32.mrb[0].mxu0
        %819 = vmatprep.mubr.f32.mxu0 0.0
        %820 = vmatmul.mubr.f32.gmra.mrb[0].mxu0 %v370
        %v821 = vpop.f32.mrb[0].mxu0
        %v822 = vadd.f32 %v363, %v821
        %v823 = vpop.f32.mrb[0].mxu0
        %824 = vmatprep.mubr.f32.mxu0 0.0
        %825 = vmatmul.mubr.f32.gmra.mrb[0].mxu0 %v373
        %v826 = vpop.f32.mrb[0].mxu0
        %v827 = vadd.f32 %v363, %v826
        %v828 = vpop.f32.mrb[0].mxu0
        %829 = vmatprep.mubr.f32.mxu0 0.0
        %830 = vmatmul.mubr.f32.gmra.mrb[0].mxu0 %v376
        %v831 = vpop.f32.mrb[0].mxu0
        %v832 = vadd.f32 %v363, %v831
        %v833 = vpop.f32.mrb[0].mxu0
        %834 = vmatprep.mubr.f32.mxu0 0.0
        %835 = vmatmul.mubr.f32.gmra.mrb[0].mxu0 %v379
        %v836 = vpop.f32.mrb[0].mxu0
        %v837 = vadd.f32 %v363, %v836
        %v838 = vpop.f32.mrb[0].mxu0
        %839 = vmatprep.mubr.f32.mxu0 0.0
        %840 = vmatmul.mubr.f32.gmra.mrb[0].mxu0 %v382
        %v841 = vpop.f32.mrb[0].mxu0
        %v842 = vadd.f32 %v363, %v841
        %v843 = vpop.f32.mrb[0].mxu0
        %844 = vmatprep.mubr.f32.mxu0 0.0
        %845 = vmatmul.mubr.f32.gmra.mrb[0].mxu0 %v385
        %v846 = vpop.f32.mrb[0].mxu0
        %v847 = vadd.f32 %v363, %v846
        %v848 = vpop.f32.mrb[0].mxu0
        %849 = vmatprep.mubr.f32.mxu0 0.0
        %850 = vmatmul.mubr.f32.gmra.mrb[0].mxu0 %v388
        %v851 = vpop.f32.mrb[0].mxu0
        %v852 = vadd.f32 %v363, %v851
        %v853 = vpop.f32.mrb[0].mxu0
        %854 = vmatprep.mubr.f32.mxu0 0.0
        %855 = vmatmul.mubr.f32.gmra.mrb[0].mxu0 %v391
        %v856 = vpop.f32.mrb[0].mxu0
        %v857 = vadd.f32 %v363, %v856
        %v858 = vpop.f32.mrb[0].mxu0
        %859 = vmatprep.mubr.f32.mxu0 0.0
        %860 = vmatmul.mubr.f32.gmra.mrb[0].mxu0 %v394
        %v861 = vpop.f32.mrb[0].mxu0
        %v862 = vadd.f32 %v363, %v861
        %v863 = vpop.f32.mrb[0].mxu0
        %864 = vmatprep.mubr.f32.mxu0 0.0
        %865 = vmatmul.mubr.f32.gmra.mrb[0].mxu0 %v397
        %v866 = vpop.f32.mrb[0].mxu0
        %v867 = vadd.f32 %v363, %v866
        %v868 = vpop.f32.mrb[0].mxu0
        %869 = vmatprep.mubr.f32.mxu0 0.0
        %870 = vmatmul.mubr.f32.gmra.mrb[0].mxu0 %v400
        %v871 = vpop.f32.mrb[0].mxu0
        %v872 = vadd.f32 %v363, %v871
        %v873 = vpop.f32.mrb[0].mxu0
        %874 = vmatprep.mubr.f32.mxu0 0.0
        %875 = vmatmul.mubr.f32.gmra.mrb[0].mxu0 %v403
        %v876 = vpop.f32.mrb[0].mxu0
        %v877 = vadd.f32 %v363, %v876
        %v878 = vpop.f32.mrb[0].mxu0
        %879 = vmatprep.mubr.f32.mxu0 0.0
        %880 = vmatmul.mubr.f32.gmra.mrb[0].mxu0 %v406
        %v881 = vpop.f32.mrb[0].mxu0
        %v882 = vadd.f32 %v363, %v881
        %v883 = vpop.f32.mrb[0].mxu0
        %884 = vmatprep.mubr.f32.mxu0 0.0
        %885 = vmatmul.mubr.f32.gmra.mrb[0].mxu0 %v409
        %v886 = vpop.f32.mrb[0].mxu0
        %v887 = vadd.f32 %v363, %v886
        %v888 = vpop.f32.mrb[0].mxu0
        %889 = vmatprep.mubr.f32.mxu0 0.0
        %890 = vmatmul.mubr.f32.gmra.mrb[0].mxu0 %v412
        %v891 = vpop.f32.mrb[0].mxu0
        %v892 = vadd.f32 %v363, %v891
        %v893 = vpop.f32.mrb[0].mxu0
        %894 = vmatprep.mubr.f32.mxu0 0.0
        %895 = vmatmul.mubr.f32.gmra.mrb[0].mxu0 %v415
        %v896 = vpop.f32.mrb[0].mxu0
        %v897 = vadd.f32 %v363, %v896
        %v898 = vpop.f32.mrb[0].mxu0
        %899 = vmatprep.mubr.f32.mxu0 0.0
        %900 = vmatmul.mubr.f32.gmra.mrb[0].mxu0 %v418
        %v901 = vpop.f32.mrb[0].mxu0
        %v902 = vadd.f32 %v363, %v901
        %v903 = vpop.f32.mrb[0].mxu0
        %904 = vmatprep.mubr.f32.mxu0 0.0
        %905 = vmatmul.mubr.f32.gmra.mrb[0].mxu0 %v421
        %v906 = vpop.f32.mrb[0].mxu0
        %v907 = vadd.f32 %v363, %v906
        %v908 = vpop.f32.mrb[0].mxu0
        %909 = vmatprep.mubr.f32.mxu0 0.0
        %910 = vmatmul.mubr.f32.gmra.mrb[0].mxu0 %v424
        %v911 = vpop.f32.mrb[0].mxu0
        %v912 = vadd.f32 %v363, %v911
        %v913 = vpop.f32.mrb[0].mxu0
        %914 = vmatprep.mubr.f32.mxu0 0.0
        %915 = vmatmul.mubr.f32.gmra.mrb[0].mxu0 %v427
        %v916 = vpop.f32.mrb[0].mxu0
        %v917 = vadd.f32 %v363, %v916
        %v918 = vpop.f32.mrb[0].mxu0
        %919 = vmatprep.mubr.f32.mxu0 0.0
        %920 = vmatmul.mubr.f32.gmra.mrb[0].mxu0 %v430
        %v921 = vpop.f32.mrb[0].mxu0
        %v922 = vadd.f32 %v363, %v921
        %v923 = vpop.f32.mrb[0].mxu0
        %924 = vmatprep.mubr.f32.mxu0 0.0
        %925 = vmatmul.mubr.f32.gmra.mrb[0].mxu0 %v433
        %v926 = vpop.f32.mrb[0].mxu0
        %v927 = vadd.f32 %v363, %v926
        %v928 = vpop.f32.mrb[0].mxu0
        %929 = vmatprep.mubr.f32.mxu0 0.0
        %930 = vmatmul.mubr.f32.gmra.mrb[0].mxu0 %v436
        %v931 = vpop.f32.mrb[0].mxu0
        %v932 = vadd.f32 %v363, %v931
        %v933 = vpop.f32.mrb[0].mxu0
        %934 = vmatprep.mubr.f32.mxu0 0.0
        %935 = vmatmul.mubr.f32.gmra.mrb[0].mxu0 %v439
        %v936 = vpop.f32.mrb[0].mxu0
        %v937 = vadd.f32 %v363, %v936
        %v938 = vpop.f32.mrb[0].mxu0
        %939 = vmatprep.mubr.f32.mxu0 0.0
        %940 = vmatmul.mubr.f32.gmra.mrb[0].mxu0 %v442
        %v941 = vpop.f32.mrb[0].mxu0
        %v942 = vadd.f32 %v363, %v941
        %v943 = vpop.f32.mrb[0].mxu0
        %944 = vmatprep.mubr.f32.mxu0 0.0
        %945 = vmatmul.mubr.f32.gmra.mrb[0].mxu0 %v445
        %v946 = vpop.f32.mrb[0].mxu0
        %v947 = vadd.f32 %v363, %v946
        %v948 = vpop.f32.mrb[0].mxu0
        %949 = vmatprep.mubr.f32.mxu0 0.0
        %950 = vmatmul.mubr.f32.gmra.mrb[0].mxu0 %v448
        %v951 = vpop.f32.mrb[0].mxu0
        %v952 = vadd.f32 %v363, %v951
        %v953 = vpop.f32.mrb[0].mxu0
        %954 = vmatprep.mubr.f32.mxu0 0.0
        %955 = vmatmul.mubr.f32.gmra.mrb[0].mxu0 %v451
        %v956 = vpop.f32.mrb[0].mxu0
        %v957 = vadd.f32 %v363, %v956
        %v958 = vpop.f32.mrb[0].mxu0
        %959 = vmatprep.mubr.f32.mxu0 0.0
        %960 = vmatmul.mubr.f32.gmra.mrb[0].mxu0 %v454
        %v961 = vpop.f32.mrb[0].mxu0
        %v962 = vadd.f32 %v363, %v961
        %v963 = vpop.f32.mrb[0].mxu0
        %964 = vmatprep.mubr.f32.mxu0 0.0
        %965 = vmatmul.mubr.f32.gmra.mrb[0].mxu0 %v457
        %v966 = vpop.f32.mrb[0].mxu0
        %v967 = vadd.f32 %v363, %v966
        %v968 = vpop.f32.mrb[0].mxu0
        %969 = vmatprep.mubr.f32.mxu0 0.0
        %970 = vmatmul.mubr.f32.gmra.mrb[0].mxu0 %v460
        %v971 = vpop.f32.mrb[0].mxu0
        %v972 = vadd.f32 %v363, %v971
        %v973 = vpop.f32.mrb[0].mxu0
        %974 = vmatprep.mubr.f32.mxu0 0.0
        %975 = vmatmul.mubr.f32.gmra.mrb[0].mxu0 %v463
        %v976 = vpop.f32.mrb[0].mxu0
        %v977 = vadd.f32 %v363, %v976
        %v978 = vpop.f32.mrb[0].mxu0
        %979 = vmatprep.mubr.f32.mxu0 0.0
        %980 = vmatmul.mubr.f32.gmra.mrb[0].mxu0 %v466
        %v981 = vpop.f32.mrb[0].mxu0
        %v982 = vadd.f32 %v363, %v981
        %v983 = vpop.f32.mrb[0].mxu0
        %984 = vmatprep.mubr.f32.mxu0 0.0
        %985 = vmatmul.mubr.f32.gmra.mrb[0].mxu0 %v469
        %v986 = vpop.f32.mrb[0].mxu0
        %v987 = vadd.f32 %v363, %v986
        %v988 = vpop.f32.mrb[0].mxu0
        %989 = vmatprep.mubr.f32.mxu0 0.0
        %990 = vmatmul.mubr.f32.gmra.mrb[0].mxu0 %v472
        %v991 = vpop.f32.mrb[0].mxu0
        %v992 = vadd.f32 %v363, %v991
        %v993 = vpop.f32.mrb[0].mxu0
        %994 = vmatprep.mubr.f32.mxu0 0.0
        %995 = vmatmul.mubr.f32.gmra.mrb[0].mxu0 %v475
        %v996 = vpop.f32.mrb[0].mxu0
        %v997 = vadd.f32 %v363, %v996
        %v998 = vpop.f32.mrb[0].mxu0
        %999 = vmatprep.mubr.f32.mxu0 0.0
        %1000 = vmatmul.mubr.f32.gmra.mrb[0].mxu0 %v478
        %v1001 = vpop.f32.mrb[0].mxu0
        %v1002 = vadd.f32 %v363, %v1001
        %v1003 = vpop.f32.mrb[0].mxu0
        %1004 = vmatprep.mubr.f32.mxu0 0.0
        %1005 = vmatmul.mubr.f32.gmra.mrb[0].mxu0 %v481
        %v1006 = vpop.f32.mrb[0].mxu0
        %v1007 = vadd.f32 %v363, %v1006
        %v1008 = vpop.f32.mrb[0].mxu0
        %1009 = vmatprep.mubr.f32.mxu0 0.0
        %1010 = vmatmul.mubr.f32.gmra.mrb[0].mxu0 %v484
        %v1011 = vpop.f32.mrb[0].mxu0
        %v1012 = vadd.f32 %v363, %v1011
        %v1013 = vpop.f32.mrb[0].mxu0
        %1014 = vmatprep.mubr.f32.mxu0 0.0
        %1015 = vmatmul.mubr.f32.gmra.mrb[0].mxu0 %v487
        %v1016 = vpop.f32.mrb[0].mxu0
        %v1017 = vadd.f32 %v363, %v1016
        %v1018 = vpop.f32.mrb[0].mxu0
        %1019 = vmatprep.mubr.f32.mxu0 0.0
        %1020 = vmatmul.mubr.f32.gmra.mrb[0].mxu0 %v490
        %v1021 = vpop.f32.mrb[0].mxu0
        %v1022 = vadd.f32 %v363, %v1021
        %v1023 = vpop.f32.mrb[0].mxu0
        %1024 = vmatprep.mubr.f32.mxu0 0.0
        %1025 = vmatmul.mubr.f32.gmra.mrb[0].mxu0 %v493
        %v1026 = vpop.f32.mrb[0].mxu0
        %v1027 = vadd.f32 %v363, %v1026
        %v1028 = vpop.f32.mrb[0].mxu0
        %1029 = vmatprep.mubr.f32.mxu0 0.0
        %1030 = vmatmul.mubr.f32.gmra.mrb[0].mxu0 %v496
        %v1031 = vpop.f32.mrb[0].mxu0
        %v1032 = vadd.f32 %v363, %v1031
        %v1033 = vpop.f32.mrb[0].mxu0
        %1034 = vmatprep.mubr.f32.mxu0 0.0
        %1035 = vmatmul.mubr.f32.gmra.mrb[0].mxu0 %v499
        %v1036 = vpop.f32.mrb[0].mxu0
        %v1037 = vadd.f32 %v363, %v1036
        %v1038 = vpop.f32.mrb[0].mxu0
        %1039 = vmatprep.mubr.f32.mxu0 0.0
        %1040 = vmatmul.mubr.f32.gmra.mrb[0].mxu0 %v502
        %v1041 = vpop.f32.mrb[0].mxu0
        %v1042 = vadd.f32 %v363, %v1041
        %v1043 = vpop.f32.mrb[0].mxu0
        %1044 = vmatprep.mubr.f32.mxu0 0.0
        %1045 = vmatmul.mubr.f32.gmra.mrb[0].mxu0 %v505
        %v1046 = vpop.f32.mrb[0].mxu0
        %v1047 = vadd.f32 %v363, %v1046
        %v1048 = vpop.f32.mrb[0].mxu0
        %1049 = vmatprep.mubr.f32.mxu0 0.0
        %1050 = vmatmul.mubr.f32.gmra.mrb[0].mxu0 %v508
        %v1051 = vpop.f32.mrb[0].mxu0
        %v1052 = vadd.f32 %v363, %v1051
        %v1053 = vpop.f32.mrb[0].mxu0
        %1054 = vmatprep.mubr.f32.mxu0 0.0
        %1055 = vmatmul.mubr.f32.gmra.mrb[0].mxu0 %v511
        %v1056 = vpop.f32.mrb[0].mxu0
        %v1057 = vadd.f32 %v363, %v1056
        %v1058 = vpop.f32.mrb[0].mxu0
        %1059 = vmatprep.mubr.f32.mxu0 0.0
        %1060 = vmatmul.mubr.f32.gmra.mrb[0].mxu0 %v514
        %v1061 = vpop.f32.mrb[0].mxu0
        %v1062 = vadd.f32 %v363, %v1061
        %v1063 = vpop.f32.mrb[0].mxu0
        %1064 = vmatprep.mubr.f32.mxu0 0.0
        %1065 = vmatmul.mubr.f32.gmra.mrb[0].mxu0 %v517
        %v1066 = vpop.f32.mrb[0].mxu0
        %v1067 = vadd.f32 %v363, %v1066
        %v1068 = vpop.f32.mrb[0].mxu0
        %1069 = vmatprep.mubr.f32.mxu0 0.0
        %1070 = vmatmul.mubr.f32.gmra.mrb[0].mxu0 %v520
        %v1071 = vpop.f32.mrb[0].mxu0
        %v1072 = vadd.f32 %v363, %v1071
        %v1073 = vpop.f32.mrb[0].mxu0
        %1074 = vmatprep.mubr.f32.mxu0 0.0
        %1075 = vmatmul.mubr.f32.gmra.mrb[0].mxu0 %v523
        %v1076 = vpop.f32.mrb[0].mxu0
        %v1077 = vadd.f32 %v363, %v1076
        %v1078 = vpop.f32.mrb[0].mxu0
        %1079 = vmatprep.mubr.f32.mxu0 0.0
        %1080 = vmatmul.mubr.f32.gmra.mrb[0].mxu0 %v526
        %v1081 = vpop.f32.mrb[0].mxu0
        %v1082 = vadd.f32 %v363, %v1081
        %v1083 = vpop.f32.mrb[0].mxu0
        %1084 = vmatprep.mubr.f32.mxu0 0.0
        %1085 = vmatmul.mubr.f32.gmra.mrb[0].mxu0 %v529
        %v1086 = vpop.f32.mrb[0].mxu0
        %v1087 = vadd.f32 %v363, %v1086
        %v1088 = vpop.f32.mrb[0].mxu0
        %1089 = vmatprep.mubr.f32.mxu0 0.0
        %1090 = vmatmul.mubr.f32.gmra.mrb[0].mxu0 %v532
        %v1091 = vpop.f32.mrb[0].mxu0
        %v1092 = vadd.f32 %v363, %v1091
        %v1093 = vpop.f32.mrb[0].mxu0
        %1094 = vmatprep.mubr.f32.mxu0 0.0
        %1095 = vmatmul.mubr.f32.gmra.mrb[0].mxu0 %v535
        %v1096 = vpop.f32.mrb[0].mxu0
        %v1097 = vadd.f32 %v363, %v1096
        %v1098 = vpop.f32.mrb[0].mxu0
        %1099 = vmatprep.mubr.f32.mxu0 0.0
        %1100 = vmatmul.mubr.f32.gmra.mrb[0].mxu0 %v538
        %v1101 = vpop.f32.mrb[0].mxu0
        %v1102 = vadd.f32 %v363, %v1101
        %v1103 = vpop.f32.mrb[0].mxu0
        %1104 = vmatprep.mubr.f32.mxu0 0.0
        %1105 = vmatmul.mubr.f32.gmra.mrb[0].mxu0 %v541
        %v1106 = vpop.f32.mrb[0].mxu0
        %v1107 = vadd.f32 %v363, %v1106
        %v1108 = vpop.f32.mrb[0].mxu0
        %1109 = vmatprep.mubr.f32.mxu0 0.0
        %1110 = vmatmul.mubr.f32.gmra.mrb[0].mxu0 %v544
        %v1111 = vpop.f32.mrb[0].mxu0
        %v1112 = vadd.f32 %v363, %v1111
        %v1113 = vpop.f32.mrb[0].mxu0
        %1114 = vmatprep.mubr.f32.mxu0 0.0
        %1115 = vmatmul.mubr.f32.gmra.mrb[0].mxu0 %v547
        %v1116 = vpop.f32.mrb[0].mxu0
        %v1117 = vadd.f32 %v363, %v1116
        %v1118 = vpop.f32.mrb[0].mxu0
        %1119 = vmatprep.mubr.f32.mxu0 0.0
        %1120 = vmatmul.mubr.f32.gmra.mrb[0].mxu0 %v550
        %v1121 = vpop.f32.mrb[0].mxu0
        %v1122 = vadd.f32 %v363, %v1121
        %v1123 = vpop.f32.mrb[0].mxu0
        %1124 = vmatprep.mubr.f32.mxu0 0.0
        %1125 = vmatmul.mubr.f32.gmra.mrb[0].mxu0 %v553
        %v1126 = vpop.f32.mrb[0].mxu0
        %v1127 = vadd.f32 %v363, %v1126
        %v1128 = vpop.f32.mrb[0].mxu0
        %1129 = vmatprep.mubr.f32.mxu0 0.0
        %1130 = vmatmul.mubr.f32.gmra.mrb[0].mxu0 %v556
        %v1131 = vpop.f32.mrb[0].mxu0
        %v1132 = vadd.f32 %v363, %v1131
        %v1133 = vpop.f32.mrb[0].mxu0
        %1134 = vmatprep.mubr.f32.mxu0 0.0
        %1135 = vmatmul.mubr.f32.gmra.mrb[0].mxu0 %v559
        %v1136 = vpop.f32.mrb[0].mxu0
        %v1137 = vadd.f32 %v363, %v1136
        %v1138 = vpop.f32.mrb[0].mxu0
        %1139 = vmatprep.mubr.f32.mxu0 0.0
        %1140 = vmatmul.mubr.f32.gmra.mrb[0].mxu0 %v562
        %v1141 = vpop.f32.mrb[0].mxu0
        %v1142 = vadd.f32 %v363, %v1141
        %v1143 = vpop.f32.mrb[0].mxu0
        %1144 = vmatprep.mubr.f32.mxu0 0.0
        %1145 = vmatmul.mubr.f32.gmra.mrb[0].mxu0 %v565
        %v1146 = vpop.f32.mrb[0].mxu0
        %v1147 = vadd.f32 %v363, %v1146
        %v1148 = vpop.f32.mrb[0].mxu0
        %1149 = vmatprep.mubr.f32.mxu0 0.0
        %1150 = vmatmul.mubr.f32.gmra.mrb[0].mxu0 %v568
        %v1151 = vpop.f32.mrb[0].mxu0
        %v1152 = vadd.f32 %v363, %v1151
        %v1153 = vpop.f32.mrb[0].mxu0
        %1154 = vmatprep.mubr.f32.mxu0 0.0
        %1155 = vmatmul.mubr.f32.gmra.mrb[0].mxu0 %v571
        %v1156 = vpop.f32.mrb[0].mxu0
        %v1157 = vadd.f32 %v363, %v1156
        %v1158 = vpop.f32.mrb[0].mxu0
        %1159 = vmatprep.mubr.f32.mxu0 0.0
        %1160 = vmatmul.mubr.f32.gmra.mrb[0].mxu0 %v574
        %v1161 = vpop.f32.mrb[0].mxu0
        %v1162 = vadd.f32 %v363, %v1161
        %v1163 = vpop.f32.mrb[0].mxu0
        %1164 = vmatprep.mubr.f32.mxu0 0.0
        %1165 = vmatmul.mubr.f32.gmra.mrb[0].mxu0 %v577
        %v1166 = vpop.f32.mrb[0].mxu0
        %v1167 = vadd.f32 %v363, %v1166
        %v1168 = vpop.f32.mrb[0].mxu0
        %1169 = vmatprep.mubr.f32.mxu0 0.0
        %1170 = vmatmul.mubr.f32.gmra.mrb[0].mxu0 %v580
        %v1171 = vpop.f32.mrb[0].mxu0
        %v1172 = vadd.f32 %v363, %v1171
        %v1173 = vpop.f32.mrb[0].mxu0
        %1174 = vmatprep.mubr.f32.mxu0 0.0
        %1175 = vmatmul.mubr.f32.gmra.mrb[0].mxu0 %v583
        %v1176 = vpop.f32.mrb[0].mxu0
        %v1177 = vadd.f32 %v363, %v1176
        %v1178 = vpop.f32.mrb[0].mxu0
        %1179 = vmatprep.mubr.f32.mxu0 0.0
        %1180 = vmatmul.mubr.f32.gmra.mrb[0].mxu0 %v586
        %v1181 = vpop.f32.mrb[0].mxu0
        %v1182 = vadd.f32 %v363, %v1181
        %v1183 = vpop.f32.mrb[0].mxu0
        %1184 = vmatprep.mubr.f32.mxu0 0.0
        %1185 = vmatmul.mubr.f32.gmra.mrb[0].mxu0 %v589
        %v1186 = vpop.f32.mrb[0].mxu0
        %v1187 = vadd.f32 %v363, %v1186
        %v1188 = vpop.f32.mrb[0].mxu0
        %1189 = vmatprep.mubr.f32.mxu0 0.0
        %1190 = vmatmul.mubr.f32.gmra.mrb[0].mxu0 %v592
        %v1191 = vpop.f32.mrb[0].mxu0
        %v1192 = vadd.f32 %v363, %v1191
        %v1193 = vpop.f32.mrb[0].mxu0
        %1194 = vmatprep.mubr.f32.mxu0 0.0
        %1195 = vmatmul.mubr.f32.gmra.mrb[0].mxu0 %v595
        %v1196 = vpop.f32.mrb[0].mxu0
        %v1197 = vadd.f32 %v363, %v1196
        %v1198 = vpop.f32.mrb[0].mxu0
        %1199 = vmatprep.mubr.f32.mxu0 0.0
        %1200 = vmatmul.mubr.f32.gmra.mrb[0].mxu0 %v598
        %v1201 = vpop.f32.mrb[0].mxu0
        %v1202 = vadd.f32 %v363, %v1201
        %v1203 = vpop.f32.mrb[0].mxu0
        %1204 = vmatprep.mubr.f32.mxu0 0.0
        %1205 = vmatmul.mubr.f32.gmra.mrb[0].mxu0 %v601
        %v1206 = vpop.f32.mrb[0].mxu0
        %v1207 = vadd.f32 %v363, %v1206
        %v1208 = vpop.f32.mrb[0].mxu0
        %1209 = vmatprep.mubr.f32.mxu0 0.0
        %1210 = vmatmul.mubr.f32.gmra.mrb[0].mxu0 %v604
        %v1211 = vpop.f32.mrb[0].mxu0
        %v1212 = vadd.f32 %v363, %v1211
        %v1213 = vpop.f32.mrb[0].mxu0
        %1214 = vmatprep.mubr.f32.mxu0 0.0
        %1215 = vmatmul.mubr.f32.gmra.mrb[0].mxu0 %v607
        %v1216 = vpop.f32.mrb[0].mxu0
        %v1217 = vadd.f32 %v363, %v1216
        %v1218 = vpop.f32.mrb[0].mxu0
        %1219 = vmatprep.mubr.f32.mxu0 0.0
        %1220 = vmatmul.mubr.f32.gmra.mrb[0].mxu0 %v610
        %v1221 = vpop.f32.mrb[0].mxu0
        %v1222 = vadd.f32 %v363, %v1221
        %v1223 = vpop.f32.mrb[0].mxu0
        %1224 = vmatprep.mubr.f32.mxu0 0.0
        %1225 = vmatmul.mubr.f32.gmra.mrb[0].mxu0 %v613
        %v1226 = vpop.f32.mrb[0].mxu0
        %v1227 = vadd.f32 %v363, %v1226
        %v1228 = vpop.f32.mrb[0].mxu0
        %1229 = vmatprep.mubr.f32.mxu0 0.0
        %1230 = vmatmul.mubr.f32.gmra.mrb[0].mxu0 %v616
        %v1231 = vpop.f32.mrb[0].mxu0
        %v1232 = vadd.f32 %v363, %v1231
        %v1233 = vpop.f32.mrb[0].mxu0
        %1234 = vmatprep.mubr.f32.mxu0 0.0
        %1235 = vmatmul.mubr.f32.gmra.mrb[0].mxu0 %v619
        %v1236 = vpop.f32.mrb[0].mxu0
        %v1237 = vadd.f32 %v363, %v1236
        %v1238 = vpop.f32.mrb[0].mxu0
        %1239 = vmatprep.mubr.f32.mxu0 0.0
        %1240 = vmatmul.mubr.f32.gmra.mrb[0].mxu0 %v622
        %v1241 = vpop.f32.mrb[0].mxu0
        %v1242 = vadd.f32 %v363, %v1241
        %v1243 = vpop.f32.mrb[0].mxu0
        %1244 = vmatprep.mubr.f32.mxu0 0.0
        %1245 = vmatmul.mubr.f32.gmra.mrb[0].mxu0 %v625
        %v1246 = vpop.f32.mrb[0].mxu0
        %v1247 = vadd.f32 %v363, %v1246
        %v1248 = vpop.f32.mrb[0].mxu0
        %1249 = vmatprep.mubr.f32.mxu0 0.0
        %1250 = vmatmul.mubr.f32.gmra.mrb[0].mxu0 %v628
        %v1251 = vpop.f32.mrb[0].mxu0
        %v1252 = vadd.f32 %v363, %v1251
        %v1253 = vpop.f32.mrb[0].mxu0
        %1254 = vmatprep.mubr.f32.mxu0 0.0
        %1255 = vmatmul.mubr.f32.gmra.mrb[0].mxu0 %v631
        %v1256 = vpop.f32.mrb[0].mxu0
        %v1257 = vadd.f32 %v363, %v1256
        %v1258 = vpop.f32.mrb[0].mxu0
        %1259 = vmatprep.mubr.f32.mxu0 0.0
        %1260 = vmatmul.mubr.f32.gmra.mrb[0].mxu0 %v634
        %v1261 = vpop.f32.mrb[0].mxu0
        %v1262 = vadd.f32 %v363, %v1261
        %v1263 = vpop.f32.mrb[0].mxu0
        %1264 = vmatprep.mubr.f32.mxu0 0.0
        %1265 = vmatmul.mubr.f32.gmra.mrb[0].mxu0 %v637
        %v1266 = vpop.f32.mrb[0].mxu0
        %v1267 = vadd.f32 %v363, %v1266
        %v1268 = vpop.f32.mrb[0].mxu0
        %1269 = vmatprep.mubr.f32.mxu0 0.0
        %1270 = vmatmul.mubr.f32.gmra.mrb[0].mxu0 %v640
        %v1271 = vpop.f32.mrb[0].mxu0
        %v1272 = vadd.f32 %v363, %v1271
        %v1273 = vpop.f32.mrb[0].mxu0
        %1274 = vmatprep.mubr.f32.mxu0 0.0
        %1275 = vmatmul.mubr.f32.gmra.mrb[0].mxu0 %v643
        %v1276 = vpop.f32.mrb[0].mxu0
        %v1277 = vadd.f32 %v363, %v1276
        %v1278 = vpop.f32.mrb[0].mxu0
        %1279 = vmatprep.mubr.f32.mxu0 0.0
        %1280 = vmatmul.mubr.f32.gmra.mrb[0].mxu0 %v646
        %v1281 = vpop.f32.mrb[0].mxu0
        %v1282 = vadd.f32 %v363, %v1281
        %v1283 = vpop.f32.mrb[0].mxu0
        %1284 = vmatprep.mubr.f32.mxu0 0.0
        %1285 = vmatmul.mubr.f32.gmra.mrb[0].mxu0 %v649
        %v1286 = vpop.f32.mrb[0].mxu0
        %v1287 = vadd.f32 %v363, %v1286
        %v1288 = vpop.f32.mrb[0].mxu0
        %1289 = vmatprep.mubr.f32.mxu0 0.0
        %1290 = vmatmul.mubr.f32.gmra.mrb[0].mxu0 %v652
        %v1291 = vpop.f32.mrb[0].mxu0
        %v1292 = vadd.f32 %v363, %v1291
        %v1293 = vpop.f32.mrb[0].mxu0
        %1294 = vmatprep.mubr.f32.mxu0 0.0
        %1295 = vmatmul.mubr.f32.gmra.mrb[0].mxu0 %v655
        %v1296 = vpop.f32.mrb[0].mxu0
        %v1297 = vadd.f32 %v363, %v1296
        %v1298 = vpop.f32.mrb[0].mxu0
        %1299 = vmatprep.mubr.f32.mxu0 0.0
        %1300 = vmatmul.mubr.f32.gmra.mrb[0].mxu0 %v658
        %v1301 = vpop.f32.mrb[0].mxu0
        %v1302 = vadd.f32 %v363, %v1301
        %v1303 = vpop.f32.mrb[0].mxu0
        %1304 = vmatprep.mubr.f32.mxu0 0.0
        %1305 = vmatmul.mubr.f32.gmra.mrb[0].mxu0 %v661
        %v1306 = vpop.f32.mrb[0].mxu0
        %v1307 = vadd.f32 %v363, %v1306
        %v1308 = vpop.f32.mrb[0].mxu0
        %1309 = vmatprep.mubr.f32.mxu0 0.0
        %1310 = vmatmul.mubr.f32.gmra.mrb[0].mxu0 %v664
        %v1311 = vpop.f32.mrb[0].mxu0
        %v1312 = vadd.f32 %v363, %v1311
        %v1313 = vpop.f32.mrb[0].mxu0
        %1314 = vmatprep.mubr.f32.mxu0 0.0
        %1315 = vmatmul.mubr.f32.gmra.mrb[0].mxu0 %v667
        %v1316 = vpop.f32.mrb[0].mxu0
        %v1317 = vadd.f32 %v363, %v1316
        %v1318 = vpop.f32.mrb[0].mxu0
        %1319 = vmatprep.mubr.f32.mxu0 0.0
        %1320 = vmatmul.mubr.f32.gmra.mrb[0].mxu0 %v670
        %v1321 = vpop.f32.mrb[0].mxu0
        %v1322 = vadd.f32 %v363, %v1321
        %v1323 = vpop.f32.mrb[0].mxu0
        %1324 = vmatprep.mubr.f32.mxu0 0.0
        %1325 = vmatmul.mubr.f32.gmra.mrb[0].mxu0 %v673
        %v1326 = vpop.f32.mrb[0].mxu0
        %v1327 = vadd.f32 %v363, %v1326
        %v1328 = vpop.f32.mrb[0].mxu0
        %1329 = vmatprep.mubr.f32.mxu0 0.0
        %1330 = vmatmul.mubr.f32.gmra.mrb[0].mxu0 %v676
        %v1331 = vpop.f32.mrb[0].mxu0
        %v1332 = vadd.f32 %v363, %v1331
        %v1333 = vpop.f32.mrb[0].mxu0
        %1334 = vmatprep.mubr.f32.mxu0 0.0
        %1335 = vmatmul.mubr.f32.gmra.mrb[0].mxu0 %v679
        %v1336 = vpop.f32.mrb[0].mxu0
        %v1337 = vadd.f32 %v363, %v1336
        %v1338 = vpop.f32.mrb[0].mxu0
        %1339 = vmatprep.mubr.f32.mxu0 0.0
        %1340 = vmatmul.mubr.f32.gmra.mrb[0].mxu0 %v682
        %v1341 = vpop.f32.mrb[0].mxu0
        %v1342 = vadd.f32 %v363, %v1341
        %v1343 = vpop.f32.mrb[0].mxu0
        %1344 = vmatprep.mubr.f32.mxu0 0.0
        %1345 = vmatmul.mubr.f32.gmra.mrb[0].mxu0 %v685
        %v1346 = vpop.f32.mrb[0].mxu0
        %v1347 = vadd.f32 %v363, %v1346
        %v1348 = vpop.f32.mrb[0].mxu0
        %1349 = vmatprep.mubr.f32.mxu0 0.0
        %1350 = vmatmul.mubr.f32.gmra.mrb[0].mxu0 %v688
        %v1351 = vpop.f32.mrb[0].mxu0
        %v1352 = vadd.f32 %v363, %v1351
        %v1353 = vpop.f32.mrb[0].mxu0
        %1354 = vmatprep.mubr.f32.mxu0 0.0
        %1355 = vmatmul.mubr.f32.gmra.mrb[0].mxu0 %v691
        %v1356 = vpop.f32.mrb[0].mxu0
        %v1357 = vadd.f32 %v363, %v1356
        %v1358 = vpop.f32.mrb[0].mxu0
        %1359 = vmatprep.mubr.f32.mxu0 0.0
        %1360 = vmatmul.mubr.f32.gmra.mrb[0].mxu0 %v694
        %v1361 = vpop.f32.mrb[0].mxu0
        %v1362 = vadd.f32 %v363, %v1361
        %v1363 = vpop.f32.mrb[0].mxu0
        %1364 = vmatprep.mubr.f32.mxu0 0.0
        %1365 = vmatmul.mubr.f32.gmra.mrb[0].mxu0 %v697
        %v1366 = vpop.f32.mrb[0].mxu0
        %v1367 = vadd.f32 %v363, %v1366
        %v1368 = vpop.f32.mrb[0].mxu0
        %1369 = vmatprep.mubr.f32.mxu0 0.0
        %1370 = vmatmul.mubr.f32.gmra.mrb[0].mxu0 %v700
        %v1371 = vpop.f32.mrb[0].mxu0
        %v1372 = vadd.f32 %v363, %v1371
        %v1373 = vpop.f32.mrb[0].mxu0
        %1374 = vmatprep.mubr.f32.mxu0 0.0
        %1375 = vmatmul.mubr.f32.gmra.mrb[0].mxu0 %v703
        %v1376 = vpop.f32.mrb[0].mxu0
        %v1377 = vadd.f32 %v363, %v1376
        %v1378 = vpop.f32.mrb[0].mxu0
        %1379 = vmatprep.mubr.f32.mxu0 0.0
        %1380 = vmatmul.mubr.f32.gmra.mrb[0].mxu0 %v706
        %v1381 = vpop.f32.mrb[0].mxu0
        %v1382 = vadd.f32 %v363, %v1381
        %v1383 = vpop.f32.mrb[0].mxu0
        %1384 = vmatprep.mubr.f32.mxu0 0.0
        %1385 = vmatmul.mubr.f32.gmra.mrb[0].mxu0 %v709
        %v1386 = vpop.f32.mrb[0].mxu0
        %v1387 = vadd.f32 %v363, %v1386
        %v1388 = vpop.f32.mrb[0].mxu0
        %1389 = vmatprep.mubr.f32.mxu0 0.0
        %1390 = vmatmul.mubr.f32.gmra.mrb[0].mxu0 %v712
        %v1391 = vpop.f32.mrb[0].mxu0
        %v1392 = vadd.f32 %v363, %v1391
        %v1393 = vpop.f32.mrb[0].mxu0
        %1394 = vmatprep.mubr.f32.mxu0 0.0
        %1395 = vmatmul.mubr.f32.gmra.mrb[0].mxu0 %v715
        %v1396 = vpop.f32.mrb[0].mxu0
        %v1397 = vadd.f32 %v363, %v1396
        %v1398 = vpop.f32.mrb[0].mxu0
        %1399 = vmatprep.mubr.f32.mxu0 0.0
        %1400 = vmatmul.mubr.f32.gmra.mrb[0].mxu0 %v718
        %v1401 = vpop.f32.mrb[0].mxu0
        %v1402 = vadd.f32 %v363, %v1401
        %v1403 = vpop.f32.mrb[0].mxu0
        %1404 = vmatprep.mubr.f32.mxu0 0.0
        %1405 = vmatmul.mubr.f32.gmra.mrb[0].mxu0 %v721
        %v1406 = vpop.f32.mrb[0].mxu0
        %v1407 = vadd.f32 %v363, %v1406
        %v1408 = vpop.f32.mrb[0].mxu0
        %1409 = vmatprep.mubr.f32.mxu0 0.0
        %1410 = vmatmul.mubr.f32.gmra.mrb[0].mxu0 %v724
        %v1411 = vpop.f32.mrb[0].mxu0
        %v1412 = vadd.f32 %v363, %v1411
        %v1413 = vpop.f32.mrb[0].mxu0
        %1414 = vmatprep.mubr.f32.mxu0 0.0
        %1415 = vmatmul.mubr.f32.gmra.mrb[0].mxu0 %v727
        %v1416 = vpop.f32.mrb[0].mxu0
        %v1417 = vadd.f32 %v363, %v1416
        %v1418 = vpop.f32.mrb[0].mxu0
        %1419 = vmatprep.mubr.f32.mxu0 0.0
        %1420 = vmatmul.mubr.f32.gmra.mrb[0].mxu0 %v730
        %v1421 = vpop.f32.mrb[0].mxu0
        %v1422 = vadd.f32 %v363, %v1421
        %v1423 = vpop.f32.mrb[0].mxu0
        %1424 = vmatprep.mubr.f32.mxu0 0.0
        %1425 = vmatmul.mubr.f32.gmra.mrb[0].mxu0 %v733
        %v1426 = vpop.f32.mrb[0].mxu0
        %v1427 = vadd.f32 %v363, %v1426
        %v1428 = vpop.f32.mrb[0].mxu0
        %1429 = vmatprep.mubr.f32.mxu0 0.0
        %1430 = vmatmul.mubr.f32.gmra.mrb[0].mxu0 %v736
        %v1431 = vpop.f32.mrb[0].mxu0
        %v1432 = vadd.f32 %v363, %v1431
        %v1433 = vpop.f32.mrb[0].mxu0
        %1434 = vmatprep.mubr.f32.mxu0 0.0
        %1435 = vmatmul.mubr.f32.gmra.mrb[0].mxu0 %v739
        %v1436 = vpop.f32.mrb[0].mxu0
        %v1437 = vadd.f32 %v363, %v1436
        %v1438 = vpop.f32.mrb[0].mxu0
        %1439 = vmatprep.mubr.f32.mxu0 0.0
        %1440 = vmatmul.mubr.f32.gmra.mrb[0].mxu0 %v742
        %v1441 = vpop.f32.mrb[0].mxu0
        %v1442 = vadd.f32 %v363, %v1441
        %v1443 = vpop.f32.mrb[0].mxu0
        %1444 = vmatprep.mubr.f32.mxu0 0.0
        %1445 = vmatmul.mubr.f32.gmra.mrb[0].mxu0 %v745
        %v1446 = vpop.f32.mrb[0].mxu0
        %v1447 = vadd.f32 %v363, %v1446
        %v1448 = vpop.f32.mrb[0].mxu0
        %1449 = vmatprep.mubr.f32.mxu0 0.0
        %1450 = vmatmul.mubr.f32.gmra.mrb[0].mxu0 %v748
        %v1451 = vpop.f32.mrb[0].mxu0
        %v1452 = vadd.f32 %v363, %v1451
        %v1453 = vpop.f32.mrb[0].mxu0
        %1454 = vdwg.mxu0
        %v1455 = vtanh.pop %v817
        %v1456 = vtanh.pop %v822
        %v1457 = vtanh.pop %v827
        %v1458 = vtanh.pop %v832
        %v1459 = vtanh.pop %v837
        %v1460 = vtanh.pop %v842
        %v1461 = vtanh.pop %v847
        %v1462 = vtanh.pop %v852
        %v1463 = vtanh.pop %v857
        %v1464 = vtanh.pop %v862
        %v1465 = vtanh.pop %v867
        %v1466 = vtanh.pop %v872
        %v1467 = vtanh.pop %v877
        %v1468 = vtanh.pop %v882
        %v1469 = vtanh.pop %v887
        %v1470 = vtanh.pop %v892
        %v1471 = vtanh.pop %v897
        %v1472 = vtanh.pop %v902
        %v1473 = vtanh.pop %v907
        %v1474 = vtanh.pop %v912
        %v1475 = vtanh.pop %v917
        %v1476 = vtanh.pop %v922
        %v1477 = vtanh.pop %v927
        %v1478 = vtanh.pop %v932
        %v1479 = vtanh.pop %v937
        %v1480 = vtanh.pop %v942
        %v1481 = vtanh.pop %v947
        %v1482 = vtanh.pop %v952
        %v1483 = vtanh.pop %v957
        %v1484 = vtanh.pop %v962
        %v1485 = vtanh.pop %v967
        %v1486 = vtanh.pop %v972
        %v1487 = vtanh.pop %v977
        %v1488 = vtanh.pop %v982
        %v1489 = vtanh.pop %v987
        %v1490 = vtanh.pop %v992
        %v1491 = vtanh.pop %v997
        %v1492 = vtanh.pop %v1002
        %v1493 = vtanh.pop %v1007
        %v1494 = vtanh.pop %v1012
        %v1495 = vtanh.pop %v1017
        %v1496 = vtanh.pop %v1022
        %v1497 = vtanh.pop %v1027
        %v1498 = vtanh.pop %v1032
        %v1499 = vtanh.pop %v1037
        %v1500 = vtanh.pop %v1042
        %v1501 = vtanh.pop %v1047
        %v1502 = vtanh.pop %v1052
        %v1503 = vtanh.pop %v1057
        %v1504 = vtanh.pop %v1062
        %v1505 = vtanh.pop %v1067
        %v1506 = vtanh.pop %v1072
        %v1507 = vtanh.pop %v1077
        %v1508 = vtanh.pop %v1082
        %v1509 = vtanh.pop %v1087
        %v1510 = vtanh.pop %v1092
        %v1511 = vtanh.pop %v1097
        %v1512 = vtanh.pop %v1102
        %v1513 = vtanh.pop %v1107
        %v1514 = vtanh.pop %v1112
        %v1515 = vtanh.pop %v1117
        %v1516 = vtanh.pop %v1122
        %v1517 = vtanh.pop %v1127
        %v1518 = vtanh.pop %v1132
        %v1519 = vtanh.pop %v1137
        %v1520 = vtanh.pop %v1142
        %v1521 = vtanh.pop %v1147
        %v1522 = vtanh.pop %v1152
        %v1523 = vtanh.pop %v1157
        %v1524 = vtanh.pop %v1162
        %v1525 = vtanh.pop %v1167
        %v1526 = vtanh.pop %v1172
        %v1527 = vtanh.pop %v1177
        %v1528 = vtanh.pop %v1182
        %v1529 = vtanh.pop %v1187
        %v1530 = vtanh.pop %v1192
        %v1531 = vtanh.pop %v1197
        %v1532 = vtanh.pop %v1202
        %v1533 = vtanh.pop %v1207
        %v1534 = vtanh.pop %v1212
        %v1535 = vtanh.pop %v1217
        %v1536 = vtanh.pop %v1222
        %v1537 = vtanh.pop %v1227
        %v1538 = vtanh.pop %v1232
        %v1539 = vtanh.pop %v1237
        %v1540 = vtanh.pop %v1242
        %v1541 = vtanh.pop %v1247
        %v1542 = vtanh.pop %v1252
        %v1543 = vtanh.pop %v1257
        %v1544 = vtanh.pop %v1262
        %v1545 = vtanh.pop %v1267
        %v1546 = vtanh.pop %v1272
        %v1547 = vtanh.pop %v1277
        %v1548 = vtanh.pop %v1282
        %v1549 = vtanh.pop %v1287
        %v1550 = vtanh.pop %v1292
        %v1551 = vtanh.pop %v1297
        %v1552 = vtanh.pop %v1302
        %v1553 = vtanh.pop %v1307
        %v1554 = vtanh.pop %v1312
        %v1555 = vtanh.pop %v1317
        %v1556 = vtanh.pop %v1322
        %v1557 = vtanh.pop %v1327
        %v1558 = vtanh.pop %v1332
        %v1559 = vtanh.pop %v1337
        %v1560 = vtanh.pop %v1342
        %v1561 = vtanh.pop %v1347
        %v1562 = vtanh.pop %v1352
        %v1563 = vtanh.pop %v1357
        %v1564 = vtanh.pop %v1362
        %v1565 = vtanh.pop %v1367
        %v1566 = vtanh.pop %v1372
        %v1567 = vtanh.pop %v1377
        %v1568 = vtanh.pop %v1382
        %v1569 = vtanh.pop %v1387
        %v1570 = vtanh.pop %v1392
        %v1571 = vtanh.pop %v1397
        %v1572 = vtanh.pop %v1402
        %v1573 = vtanh.pop %v1407
        %v1574 = vtanh.pop %v1412
        %v1575 = vtanh.pop %v1417
        %v1576 = vtanh.pop %v1422
        %v1577 = vtanh.pop %v1427
        %v1578 = vtanh.pop %v1432
        %v1579 = vtanh.pop %v1437
        %v1580 = vtanh.pop %v1442
        %v1581 = vtanh.pop %v1447
        %v1582 = vtanh.pop %v1452
        %v1583 = vld [vmem:[%s3] sm:$0x1]
        %v1585 = vlaneseq
        %v1586 = vshrl.u32 %v1585, 7
        %v1587 = vsub.s32 0, %v1586
        %v1588 = vrot.slane %v1583, %v1587
        %v1590 = vmul.f32 %v1455, %v1588
        %v1591 = vmul.f32 %v1456, %v1588
        %v1592 = vmul.f32 %v1457, %v1588
        %v1593 = vmul.f32 %v1458, %v1588
        %v1594 = vmul.f32 %v1459, %v1588
        %v1595 = vmul.f32 %v1460, %v1588
        %v1596 = vmul.f32 %v1461, %v1588
        %v1597 = vmul.f32 %v1462, %v1588
        %v1598 = vmul.f32 %v1463, %v1588
        %v1599 = vmul.f32 %v1464, %v1588
        %v1600 = vmul.f32 %v1465, %v1588
        %v1601 = vmul.f32 %v1466, %v1588
        %v1602 = vmul.f32 %v1467, %v1588
        %v1603 = vmul.f32 %v1468, %v1588
        %v1604 = vmul.f32 %v1469, %v1588
        %v1605 = vmul.f32 %v1470, %v1588
        %v1606 = vmul.f32 %v1471, %v1588
        %v1607 = vmul.f32 %v1472, %v1588
        %v1608 = vmul.f32 %v1473, %v1588
        %v1609 = vmul.f32 %v1474, %v1588
        %v1610 = vmul.f32 %v1475, %v1588
        %v1611 = vmul.f32 %v1476, %v1588
        %v1612 = vmul.f32 %v1477, %v1588
        %v1613 = vmul.f32 %v1478, %v1588
        %v1614 = vmul.f32 %v1479, %v1588
        %v1615 = vmul.f32 %v1480, %v1588
        %v1616 = vmul.f32 %v1481, %v1588
        %v1617 = vmul.f32 %v1482, %v1588
        %v1618 = vmul.f32 %v1483, %v1588
        %v1619 = vmul.f32 %v1484, %v1588
        %v1620 = vmul.f32 %v1485, %v1588
        %v1621 = vmul.f32 %v1486, %v1588
        %v1622 = vmul.f32 %v1487, %v1588
        %v1623 = vmul.f32 %v1488, %v1588
        %v1624 = vmul.f32 %v1489, %v1588
        %v1625 = vmul.f32 %v1490, %v1588
        %v1626 = vmul.f32 %v1491, %v1588
        %v1627 = vmul.f32 %v1492, %v1588
        %v1628 = vmul.f32 %v1493, %v1588
        %v1629 = vmul.f32 %v1494, %v1588
        %v1630 = vmul.f32 %v1495, %v1588
        %v1631 = vmul.f32 %v1496, %v1588
        %v1632 = vmul.f32 %v1497, %v1588
        %v1633 = vmul.f32 %v1498, %v1588
        %v1634 = vmul.f32 %v1499, %v1588
        %v1635 = vmul.f32 %v1500, %v1588
        %v1636 = vmul.f32 %v1501, %v1588
        %v1637 = vmul.f32 %v1502, %v1588
        %v1638 = vmul.f32 %v1503, %v1588
        %v1639 = vmul.f32 %v1504, %v1588
        %v1640 = vmul.f32 %v1505, %v1588
        %v1641 = vmul.f32 %v1506, %v1588
        %v1642 = vmul.f32 %v1507, %v1588
        %v1643 = vmul.f32 %v1508, %v1588
        %v1644 = vmul.f32 %v1509, %v1588
        %v1645 = vmul.f32 %v1510, %v1588
        %v1646 = vmul.f32 %v1511, %v1588
        %v1647 = vmul.f32 %v1512, %v1588
        %v1648 = vmul.f32 %v1513, %v1588
        %v1649 = vmul.f32 %v1514, %v1588
        %v1650 = vmul.f32 %v1515, %v1588
        %v1651 = vmul.f32 %v1516, %v1588
        %v1652 = vmul.f32 %v1517, %v1588
        %v1653 = vmul.f32 %v1518, %v1588
        %v1654 = vmul.f32 %v1519, %v1588
        %v1655 = vmul.f32 %v1520, %v1588
        %v1656 = vmul.f32 %v1521, %v1588
        %v1657 = vmul.f32 %v1522, %v1588
        %v1658 = vmul.f32 %v1523, %v1588
        %v1659 = vmul.f32 %v1524, %v1588
        %v1660 = vmul.f32 %v1525, %v1588
        %v1661 = vmul.f32 %v1526, %v1588
        %v1662 = vmul.f32 %v1527, %v1588
        %v1663 = vmul.f32 %v1528, %v1588
        %v1664 = vmul.f32 %v1529, %v1588
        %v1665 = vmul.f32 %v1530, %v1588
        %v1666 = vmul.f32 %v1531, %v1588
        %v1667 = vmul.f32 %v1532, %v1588
        %v1668 = vmul.f32 %v1533, %v1588
        %v1669 = vmul.f32 %v1534, %v1588
        %v1670 = vmul.f32 %v1535, %v1588
        %v1671 = vmul.f32 %v1536, %v1588
        %v1672 = vmul.f32 %v1537, %v1588
        %v1673 = vmul.f32 %v1538, %v1588
        %v1674 = vmul.f32 %v1539, %v1588
        %v1675 = vmul.f32 %v1540, %v1588
        %v1676 = vmul.f32 %v1541, %v1588
        %v1677 = vmul.f32 %v1542, %v1588
        %v1678 = vmul.f32 %v1543, %v1588
        %v1679 = vmul.f32 %v1544, %v1588
        %v1680 = vmul.f32 %v1545, %v1588
        %v1681 = vmul.f32 %v1546, %v1588
        %v1682 = vmul.f32 %v1547, %v1588
        %v1683 = vmul.f32 %v1548, %v1588
        %v1684 = vmul.f32 %v1549, %v1588
        %v1685 = vmul.f32 %v1550, %v1588
        %v1686 = vmul.f32 %v1551, %v1588
        %v1687 = vmul.f32 %v1552, %v1588
        %v1688 = vmul.f32 %v1553, %v1588
        %v1689 = vmul.f32 %v1554, %v1588
        %v1690 = vmul.f32 %v1555, %v1588
        %v1691 = vmul.f32 %v1556, %v1588
        %v1692 = vmul.f32 %v1557, %v1588
        %v1693 = vmul.f32 %v1558, %v1588
        %v1694 = vmul.f32 %v1559, %v1588
        %v1695 = vmul.f32 %v1560, %v1588
        %v1696 = vmul.f32 %v1561, %v1588
        %v1697 = vmul.f32 %v1562, %v1588
        %v1698 = vmul.f32 %v1563, %v1588
        %v1699 = vmul.f32 %v1564, %v1588
        %v1700 = vmul.f32 %v1565, %v1588
        %v1701 = vmul.f32 %v1566, %v1588
        %v1702 = vmul.f32 %v1567, %v1588
        %v1703 = vmul.f32 %v1568, %v1588
        %v1704 = vmul.f32 %v1569, %v1588
        %v1705 = vmul.f32 %v1570, %v1588
        %v1706 = vmul.f32 %v1571, %v1588
        %v1707 = vmul.f32 %v1572, %v1588
        %v1708 = vmul.f32 %v1573, %v1588
        %v1709 = vmul.f32 %v1574, %v1588
        %v1710 = vmul.f32 %v1575, %v1588
        %v1711 = vmul.f32 %v1576, %v1588
        %v1712 = vmul.f32 %v1577, %v1588
        %v1713 = vmul.f32 %v1578, %v1588
        %v1714 = vmul.f32 %v1579, %v1588
        %v1715 = vmul.f32 %v1580, %v1588
        %v1716 = vmul.f32 %v1581, %v1588
        %v1717 = vmul.f32 %v1582, %v1588
        %vm1718 = vcmask 80896
        %v1719 = vsel %vm1718, %v1590, 0.0
        %1720 = vadd.xlane.f32.xlu0 %v1719
        %v1721 = vpop.xlane.xlu0 %1720
        %v1722 = vsel %vm1718, %v1591, 0.0
        %1723 = vadd.xlane.f32.xlu0 %v1722
        %v1724 = vpop.xlane.xlu0 %1723
        %v1725 = vsel %vm1718, %v1592, 0.0
        %1726 = vadd.xlane.f32.xlu0 %v1725
        %v1727 = vpop.xlane.xlu0 %1726
        %v1728 = vsel %vm1718, %v1593, 0.0
        %1729 = vadd.xlane.f32.xlu0 %v1728
        %v1730 = vpop.xlane.xlu0 %1729
        %v1731 = vsel %vm1718, %v1594, 0.0
        %1732 = vadd.xlane.f32.xlu0 %v1731
        %v1733 = vpop.xlane.xlu0 %1732
        %v1734 = vsel %vm1718, %v1595, 0.0
        %1735 = vadd.xlane.f32.xlu0 %v1734
        %v1736 = vpop.xlane.xlu0 %1735
        %v1737 = vsel %vm1718, %v1596, 0.0
        %1738 = vadd.xlane.f32.xlu0 %v1737
        %v1739 = vpop.xlane.xlu0 %1738
        %v1740 = vsel %vm1718, %v1597, 0.0
        %1741 = vadd.xlane.f32.xlu0 %v1740
        %v1742 = vpop.xlane.xlu0 %1741
        %v1743 = vsel %vm1718, %v1598, 0.0
        %1744 = vadd.xlane.f32.xlu0 %v1743
        %v1745 = vpop.xlane.xlu0 %1744
        %v1746 = vsel %vm1718, %v1599, 0.0
        %1747 = vadd.xlane.f32.xlu0 %v1746
        %v1748 = vpop.xlane.xlu0 %1747
        %v1749 = vsel %vm1718, %v1600, 0.0
        %1750 = vadd.xlane.f32.xlu0 %v1749
        %v1751 = vpop.xlane.xlu0 %1750
        %v1752 = vsel %vm1718, %v1601, 0.0
        %1753 = vadd.xlane.f32.xlu0 %v1752
        %v1754 = vpop.xlane.xlu0 %1753
        %v1755 = vsel %vm1718, %v1602, 0.0
        %1756 = vadd.xlane.f32.xlu0 %v1755
        %v1757 = vpop.xlane.xlu0 %1756
        %v1758 = vsel %vm1718, %v1603, 0.0
        %1759 = vadd.xlane.f32.xlu0 %v1758
        %v1760 = vpop.xlane.xlu0 %1759
        %v1761 = vsel %vm1718, %v1604, 0.0
        %1762 = vadd.xlane.f32.xlu0 %v1761
        %v1763 = vpop.xlane.xlu0 %1762
        %v1764 = vsel %vm1718, %v1605, 0.0
        %1765 = vadd.xlane.f32.xlu0 %v1764
        %v1766 = vpop.xlane.xlu0 %1765
        %v1767 = vsel %vm1718, %v1606, 0.0
        %1768 = vadd.xlane.f32.xlu0 %v1767
        %v1769 = vpop.xlane.xlu0 %1768
        %v1770 = vsel %vm1718, %v1607, 0.0
        %1771 = vadd.xlane.f32.xlu0 %v1770
        %v1772 = vpop.xlane.xlu0 %1771
        %v1773 = vsel %vm1718, %v1608, 0.0
        %1774 = vadd.xlane.f32.xlu0 %v1773
        %v1775 = vpop.xlane.xlu0 %1774
        %v1776 = vsel %vm1718, %v1609, 0.0
        %1777 = vadd.xlane.f32.xlu0 %v1776
        %v1778 = vpop.xlane.xlu0 %1777
        %v1779 = vsel %vm1718, %v1610, 0.0
        %1780 = vadd.xlane.f32.xlu0 %v1779
        %v1781 = vpop.xlane.xlu0 %1780
        %v1782 = vsel %vm1718, %v1611, 0.0
        %1783 = vadd.xlane.f32.xlu0 %v1782
        %v1784 = vpop.xlane.xlu0 %1783
        %v1785 = vsel %vm1718, %v1612, 0.0
        %1786 = vadd.xlane.f32.xlu0 %v1785
        %v1787 = vpop.xlane.xlu0 %1786
        %v1788 = vsel %vm1718, %v1613, 0.0
        %1789 = vadd.xlane.f32.xlu0 %v1788
        %v1790 = vpop.xlane.xlu0 %1789
        %v1791 = vsel %vm1718, %v1614, 0.0
        %1792 = vadd.xlane.f32.xlu0 %v1791
        %v1793 = vpop.xlane.xlu0 %1792
        %v1794 = vsel %vm1718, %v1615, 0.0
        %1795 = vadd.xlane.f32.xlu0 %v1794
        %v1796 = vpop.xlane.xlu0 %1795
        %v1797 = vsel %vm1718, %v1616, 0.0
        %1798 = vadd.xlane.f32.xlu0 %v1797
        %v1799 = vpop.xlane.xlu0 %1798
        %v1800 = vsel %vm1718, %v1617, 0.0
        %1801 = vadd.xlane.f32.xlu0 %v1800
        %v1802 = vpop.xlane.xlu0 %1801
        %v1803 = vsel %vm1718, %v1618, 0.0
        %1804 = vadd.xlane.f32.xlu0 %v1803
        %v1805 = vpop.xlane.xlu0 %1804
        %v1806 = vsel %vm1718, %v1619, 0.0
        %1807 = vadd.xlane.f32.xlu0 %v1806
        %v1808 = vpop.xlane.xlu0 %1807
        %v1809 = vsel %vm1718, %v1620, 0.0
        %1810 = vadd.xlane.f32.xlu0 %v1809
        %v1811 = vpop.xlane.xlu0 %1810
        %v1812 = vsel %vm1718, %v1621, 0.0
        %1813 = vadd.xlane.f32.xlu0 %v1812
        %v1814 = vpop.xlane.xlu0 %1813
        %v1815 = vsel %vm1718, %v1622, 0.0
        %1816 = vadd.xlane.f32.xlu0 %v1815
        %v1817 = vpop.xlane.xlu0 %1816
        %v1818 = vsel %vm1718, %v1623, 0.0
        %1819 = vadd.xlane.f32.xlu0 %v1818
        %v1820 = vpop.xlane.xlu0 %1819
        %v1821 = vsel %vm1718, %v1624, 0.0
        %1822 = vadd.xlane.f32.xlu0 %v1821
        %v1823 = vpop.xlane.xlu0 %1822
        %v1824 = vsel %vm1718, %v1625, 0.0
        %1825 = vadd.xlane.f32.xlu0 %v1824
        %v1826 = vpop.xlane.xlu0 %1825
        %v1827 = vsel %vm1718, %v1626, 0.0
        %1828 = vadd.xlane.f32.xlu0 %v1827
        %v1829 = vpop.xlane.xlu0 %1828
        %v1830 = vsel %vm1718, %v1627, 0.0
        %1831 = vadd.xlane.f32.xlu0 %v1830
        %v1832 = vpop.xlane.xlu0 %1831
        %v1833 = vsel %vm1718, %v1628, 0.0
        %1834 = vadd.xlane.f32.xlu0 %v1833
        %v1835 = vpop.xlane.xlu0 %1834
        %v1836 = vsel %vm1718, %v1629, 0.0
        %1837 = vadd.xlane.f32.xlu0 %v1836
        %v1838 = vpop.xlane.xlu0 %1837
        %v1839 = vsel %vm1718, %v1630, 0.0
        %1840 = vadd.xlane.f32.xlu0 %v1839
        %v1841 = vpop.xlane.xlu0 %1840
        %v1842 = vsel %vm1718, %v1631, 0.0
        %1843 = vadd.xlane.f32.xlu0 %v1842
        %v1844 = vpop.xlane.xlu0 %1843
        %v1845 = vsel %vm1718, %v1632, 0.0
        %1846 = vadd.xlane.f32.xlu0 %v1845
        %v1847 = vpop.xlane.xlu0 %1846
        %v1848 = vsel %vm1718, %v1633, 0.0
        %1849 = vadd.xlane.f32.xlu0 %v1848
        %v1850 = vpop.xlane.xlu0 %1849
        %v1851 = vsel %vm1718, %v1634, 0.0
        %1852 = vadd.xlane.f32.xlu0 %v1851
        %v1853 = vpop.xlane.xlu0 %1852
        %v1854 = vsel %vm1718, %v1635, 0.0
        %1855 = vadd.xlane.f32.xlu0 %v1854
        %v1856 = vpop.xlane.xlu0 %1855
        %v1857 = vsel %vm1718, %v1636, 0.0
        %1858 = vadd.xlane.f32.xlu0 %v1857
        %v1859 = vpop.xlane.xlu0 %1858
        %v1860 = vsel %vm1718, %v1637, 0.0
        %1861 = vadd.xlane.f32.xlu0 %v1860
        %v1862 = vpop.xlane.xlu0 %1861
        %v1863 = vsel %vm1718, %v1638, 0.0
        %1864 = vadd.xlane.f32.xlu0 %v1863
        %v1865 = vpop.xlane.xlu0 %1864
        %v1866 = vsel %vm1718, %v1639, 0.0
        %1867 = vadd.xlane.f32.xlu0 %v1866
        %v1868 = vpop.xlane.xlu0 %1867
        %v1869 = vsel %vm1718, %v1640, 0.0
        %1870 = vadd.xlane.f32.xlu0 %v1869
        %v1871 = vpop.xlane.xlu0 %1870
        %v1872 = vsel %vm1718, %v1641, 0.0
        %1873 = vadd.xlane.f32.xlu0 %v1872
        %v1874 = vpop.xlane.xlu0 %1873
        %v1875 = vsel %vm1718, %v1642, 0.0
        %1876 = vadd.xlane.f32.xlu0 %v1875
        %v1877 = vpop.xlane.xlu0 %1876
        %v1878 = vsel %vm1718, %v1643, 0.0
        %1879 = vadd.xlane.f32.xlu0 %v1878
        %v1880 = vpop.xlane.xlu0 %1879
        %v1881 = vsel %vm1718, %v1644, 0.0
        %1882 = vadd.xlane.f32.xlu0 %v1881
        %v1883 = vpop.xlane.xlu0 %1882
        %v1884 = vsel %vm1718, %v1645, 0.0
        %1885 = vadd.xlane.f32.xlu0 %v1884
        %v1886 = vpop.xlane.xlu0 %1885
        %v1887 = vsel %vm1718, %v1646, 0.0
        %1888 = vadd.xlane.f32.xlu0 %v1887
        %v1889 = vpop.xlane.xlu0 %1888
        %v1890 = vsel %vm1718, %v1647, 0.0
        %1891 = vadd.xlane.f32.xlu0 %v1890
        %v1892 = vpop.xlane.xlu0 %1891
        %v1893 = vsel %vm1718, %v1648, 0.0
        %1894 = vadd.xlane.f32.xlu0 %v1893
        %v1895 = vpop.xlane.xlu0 %1894
        %v1896 = vsel %vm1718, %v1649, 0.0
        %1897 = vadd.xlane.f32.xlu0 %v1896
        %v1898 = vpop.xlane.xlu0 %1897
        %v1899 = vsel %vm1718, %v1650, 0.0
        %1900 = vadd.xlane.f32.xlu0 %v1899
        %v1901 = vpop.xlane.xlu0 %1900
        %v1902 = vsel %vm1718, %v1651, 0.0
        %1903 = vadd.xlane.f32.xlu0 %v1902
        %v1904 = vpop.xlane.xlu0 %1903
        %v1905 = vsel %vm1718, %v1652, 0.0
        %1906 = vadd.xlane.f32.xlu0 %v1905
        %v1907 = vpop.xlane.xlu0 %1906
        %v1908 = vsel %vm1718, %v1653, 0.0
        %1909 = vadd.xlane.f32.xlu0 %v1908
        %v1910 = vpop.xlane.xlu0 %1909
        %v1911 = vsel %vm1718, %v1654, 0.0
        %1912 = vadd.xlane.f32.xlu0 %v1911
        %v1913 = vpop.xlane.xlu0 %1912
        %v1914 = vsel %vm1718, %v1655, 0.0
        %1915 = vadd.xlane.f32.xlu0 %v1914
        %v1916 = vpop.xlane.xlu0 %1915
        %v1917 = vsel %vm1718, %v1656, 0.0
        %1918 = vadd.xlane.f32.xlu0 %v1917
        %v1919 = vpop.xlane.xlu0 %1918
        %v1920 = vsel %vm1718, %v1657, 0.0
        %1921 = vadd.xlane.f32.xlu0 %v1920
        %v1922 = vpop.xlane.xlu0 %1921
        %v1923 = vsel %vm1718, %v1658, 0.0
        %1924 = vadd.xlane.f32.xlu0 %v1923
        %v1925 = vpop.xlane.xlu0 %1924
        %v1926 = vsel %vm1718, %v1659, 0.0
        %1927 = vadd.xlane.f32.xlu0 %v1926
        %v1928 = vpop.xlane.xlu0 %1927
        %v1929 = vsel %vm1718, %v1660, 0.0
        %1930 = vadd.xlane.f32.xlu0 %v1929
        %v1931 = vpop.xlane.xlu0 %1930
        %v1932 = vsel %vm1718, %v1661, 0.0
        %1933 = vadd.xlane.f32.xlu0 %v1932
        %v1934 = vpop.xlane.xlu0 %1933
        %v1935 = vsel %vm1718, %v1662, 0.0
        %1936 = vadd.xlane.f32.xlu0 %v1935
        %v1937 = vpop.xlane.xlu0 %1936
        %v1938 = vsel %vm1718, %v1663, 0.0
        %1939 = vadd.xlane.f32.xlu0 %v1938
        %v1940 = vpop.xlane.xlu0 %1939
        %v1941 = vsel %vm1718, %v1664, 0.0
        %1942 = vadd.xlane.f32.xlu0 %v1941
        %v1943 = vpop.xlane.xlu0 %1942
        %v1944 = vsel %vm1718, %v1665, 0.0
        %1945 = vadd.xlane.f32.xlu0 %v1944
        %v1946 = vpop.xlane.xlu0 %1945
        %v1947 = vsel %vm1718, %v1666, 0.0
        %1948 = vadd.xlane.f32.xlu0 %v1947
        %v1949 = vpop.xlane.xlu0 %1948
        %v1950 = vsel %vm1718, %v1667, 0.0
        %1951 = vadd.xlane.f32.xlu0 %v1950
        %v1952 = vpop.xlane.xlu0 %1951
        %v1953 = vsel %vm1718, %v1668, 0.0
        %1954 = vadd.xlane.f32.xlu0 %v1953
        %v1955 = vpop.xlane.xlu0 %1954
        %v1956 = vsel %vm1718, %v1669, 0.0
        %1957 = vadd.xlane.f32.xlu0 %v1956
        %v1958 = vpop.xlane.xlu0 %1957
        %v1959 = vsel %vm1718, %v1670, 0.0
        %1960 = vadd.xlane.f32.xlu0 %v1959
        %v1961 = vpop.xlane.xlu0 %1960
        %v1962 = vsel %vm1718, %v1671, 0.0
        %1963 = vadd.xlane.f32.xlu0 %v1962
        %v1964 = vpop.xlane.xlu0 %1963
        %v1965 = vsel %vm1718, %v1672, 0.0
        %1966 = vadd.xlane.f32.xlu0 %v1965
        %v1967 = vpop.xlane.xlu0 %1966
        %v1968 = vsel %vm1718, %v1673, 0.0
        %1969 = vadd.xlane.f32.xlu0 %v1968
        %v1970 = vpop.xlane.xlu0 %1969
        %v1971 = vsel %vm1718, %v1674, 0.0
        %1972 = vadd.xlane.f32.xlu0 %v1971
        %v1973 = vpop.xlane.xlu0 %1972
        %v1974 = vsel %vm1718, %v1675, 0.0
        %1975 = vadd.xlane.f32.xlu0 %v1974
        %v1976 = vpop.xlane.xlu0 %1975
        %v1977 = vsel %vm1718, %v1676, 0.0
        %1978 = vadd.xlane.f32.xlu0 %v1977
        %v1979 = vpop.xlane.xlu0 %1978
        %v1980 = vsel %vm1718, %v1677, 0.0
        %1981 = vadd.xlane.f32.xlu0 %v1980
        %v1982 = vpop.xlane.xlu0 %1981
        %v1983 = vsel %vm1718, %v1678, 0.0
        %1984 = vadd.xlane.f32.xlu0 %v1983
        %v1985 = vpop.xlane.xlu0 %1984
        %v1986 = vsel %vm1718, %v1679, 0.0
        %1987 = vadd.xlane.f32.xlu0 %v1986
        %v1988 = vpop.xlane.xlu0 %1987
        %v1989 = vsel %vm1718, %v1680, 0.0
        %1990 = vadd.xlane.f32.xlu0 %v1989
        %v1991 = vpop.xlane.xlu0 %1990
        %v1992 = vsel %vm1718, %v1681, 0.0
        %1993 = vadd.xlane.f32.xlu0 %v1992
        %v1994 = vpop.xlane.xlu0 %1993
        %v1995 = vsel %vm1718, %v1682, 0.0
        %1996 = vadd.xlane.f32.xlu0 %v1995
        %v1997 = vpop.xlane.xlu0 %1996
        %v1998 = vsel %vm1718, %v1683, 0.0
        %1999 = vadd.xlane.f32.xlu0 %v1998
        %v2000 = vpop.xlane.xlu0 %1999
        %v2001 = vsel %vm1718, %v1684, 0.0
        %2002 = vadd.xlane.f32.xlu0 %v2001
        %v2003 = vpop.xlane.xlu0 %2002
        %v2004 = vsel %vm1718, %v1685, 0.0
        %2005 = vadd.xlane.f32.xlu0 %v2004
        %v2006 = vpop.xlane.xlu0 %2005
        %v2007 = vsel %vm1718, %v1686, 0.0
        %2008 = vadd.xlane.f32.xlu0 %v2007
        %v2009 = vpop.xlane.xlu0 %2008
        %v2010 = vsel %vm1718, %v1687, 0.0
        %2011 = vadd.xlane.f32.xlu0 %v2010
        %v2012 = vpop.xlane.xlu0 %2011
        %v2013 = vsel %vm1718, %v1688, 0.0
        %2014 = vadd.xlane.f32.xlu0 %v2013
        %v2015 = vpop.xlane.xlu0 %2014
        %v2016 = vsel %vm1718, %v1689, 0.0
        %2017 = vadd.xlane.f32.xlu0 %v2016
        %v2018 = vpop.xlane.xlu0 %2017
        %v2019 = vsel %vm1718, %v1690, 0.0
        %2020 = vadd.xlane.f32.xlu0 %v2019
        %v2021 = vpop.xlane.xlu0 %2020
        %v2022 = vsel %vm1718, %v1691, 0.0
        %2023 = vadd.xlane.f32.xlu0 %v2022
        %v2024 = vpop.xlane.xlu0 %2023
        %v2025 = vsel %vm1718, %v1692, 0.0
        %2026 = vadd.xlane.f32.xlu0 %v2025
        %v2027 = vpop.xlane.xlu0 %2026
        %v2028 = vsel %vm1718, %v1693, 0.0
        %2029 = vadd.xlane.f32.xlu0 %v2028
        %v2030 = vpop.xlane.xlu0 %2029
        %v2031 = vsel %vm1718, %v1694, 0.0
        %2032 = vadd.xlane.f32.xlu0 %v2031
        %v2033 = vpop.xlane.xlu0 %2032
        %v2034 = vsel %vm1718, %v1695, 0.0
        %2035 = vadd.xlane.f32.xlu0 %v2034
        %v2036 = vpop.xlane.xlu0 %2035
        %v2037 = vsel %vm1718, %v1696, 0.0
        %2038 = vadd.xlane.f32.xlu0 %v2037
        %v2039 = vpop.xlane.xlu0 %2038
        %v2040 = vsel %vm1718, %v1697, 0.0
        %2041 = vadd.xlane.f32.xlu0 %v2040
        %v2042 = vpop.xlane.xlu0 %2041
        %v2043 = vsel %vm1718, %v1698, 0.0
        %2044 = vadd.xlane.f32.xlu0 %v2043
        %v2045 = vpop.xlane.xlu0 %2044
        %v2046 = vsel %vm1718, %v1699, 0.0
        %2047 = vadd.xlane.f32.xlu0 %v2046
        %v2048 = vpop.xlane.xlu0 %2047
        %v2049 = vsel %vm1718, %v1700, 0.0
        %2050 = vadd.xlane.f32.xlu0 %v2049
        %v2051 = vpop.xlane.xlu0 %2050
        %v2052 = vsel %vm1718, %v1701, 0.0
        %2053 = vadd.xlane.f32.xlu0 %v2052
        %v2054 = vpop.xlane.xlu0 %2053
        %v2055 = vsel %vm1718, %v1702, 0.0
        %2056 = vadd.xlane.f32.xlu0 %v2055
        %v2057 = vpop.xlane.xlu0 %2056
        %v2058 = vsel %vm1718, %v1703, 0.0
        %2059 = vadd.xlane.f32.xlu0 %v2058
        %v2060 = vpop.xlane.xlu0 %2059
        %v2061 = vsel %vm1718, %v1704, 0.0
        %2062 = vadd.xlane.f32.xlu0 %v2061
        %v2063 = vpop.xlane.xlu0 %2062
        %v2064 = vsel %vm1718, %v1705, 0.0
        %2065 = vadd.xlane.f32.xlu0 %v2064
        %v2066 = vpop.xlane.xlu0 %2065
        %v2067 = vsel %vm1718, %v1706, 0.0
        %2068 = vadd.xlane.f32.xlu0 %v2067
        %v2069 = vpop.xlane.xlu0 %2068
        %v2070 = vsel %vm1718, %v1707, 0.0
        %2071 = vadd.xlane.f32.xlu0 %v2070
        %v2072 = vpop.xlane.xlu0 %2071
        %v2073 = vsel %vm1718, %v1708, 0.0
        %2074 = vadd.xlane.f32.xlu0 %v2073
        %v2075 = vpop.xlane.xlu0 %2074
        %v2076 = vsel %vm1718, %v1709, 0.0
        %2077 = vadd.xlane.f32.xlu0 %v2076
        %v2078 = vpop.xlane.xlu0 %2077
        %v2079 = vsel %vm1718, %v1710, 0.0
        %2080 = vadd.xlane.f32.xlu0 %v2079
        %v2081 = vpop.xlane.xlu0 %2080
        %v2082 = vsel %vm1718, %v1711, 0.0
        %2083 = vadd.xlane.f32.xlu0 %v2082
        %v2084 = vpop.xlane.xlu0 %2083
        %v2085 = vsel %vm1718, %v1712, 0.0
        %2086 = vadd.xlane.f32.xlu0 %v2085
        %v2087 = vpop.xlane.xlu0 %2086
        %v2088 = vsel %vm1718, %v1713, 0.0
        %2089 = vadd.xlane.f32.xlu0 %v2088
        %v2090 = vpop.xlane.xlu0 %2089
        %v2091 = vsel %vm1718, %v1714, 0.0
        %2092 = vadd.xlane.f32.xlu0 %v2091
        %v2093 = vpop.xlane.xlu0 %2092
        %v2094 = vsel %vm1718, %v1715, 0.0
        %2095 = vadd.xlane.f32.xlu0 %v2094
        %v2096 = vpop.xlane.xlu0 %2095
        %v2097 = vsel %vm1718, %v1716, 0.0
        %2098 = vadd.xlane.f32.xlu0 %v2097
        %v2099 = vpop.xlane.xlu0 %2098
        %v2100 = vsel %vm1718, %v1717, 0.0
        %2101 = vadd.xlane.f32.xlu0 %v2100
        %v2102 = vpop.xlane.xlu0 %2101
        %s2103 = sld [smem:[#allocation2]]
        %v2104 = vstv %s2103
        %v2105 = vadd.f32 %v1721, %v2104
        %v2106 = vadd.f32 %v1724, %v2104
        %v2107 = vadd.f32 %v1727, %v2104
        %v2108 = vadd.f32 %v1730, %v2104
        %v2109 = vadd.f32 %v1733, %v2104
        %v2110 = vadd.f32 %v1736, %v2104
        %v2111 = vadd.f32 %v1739, %v2104
        %v2112 = vadd.f32 %v1742, %v2104
        %v2113 = vadd.f32 %v1745, %v2104
        %v2114 = vadd.f32 %v1748, %v2104
        %v2115 = vadd.f32 %v1751, %v2104
        %v2116 = vadd.f32 %v1754, %v2104
        %v2117 = vadd.f32 %v1757, %v2104
        %v2118 = vadd.f32 %v1760, %v2104
        %v2119 = vadd.f32 %v1763, %v2104
        %v2120 = vadd.f32 %v1766, %v2104
        %v2121 = vadd.f32 %v1769, %v2104
        %v2122 = vadd.f32 %v1772, %v2104
        %v2123 = vadd.f32 %v1775, %v2104
        %v2124 = vadd.f32 %v1778, %v2104
        %v2125 = vadd.f32 %v1781, %v2104
        %v2126 = vadd.f32 %v1784, %v2104
        %v2127 = vadd.f32 %v1787, %v2104
        %v2128 = vadd.f32 %v1790, %v2104
        %v2129 = vadd.f32 %v1793, %v2104
        %v2130 = vadd.f32 %v1796, %v2104
        %v2131 = vadd.f32 %v1799, %v2104
        %v2132 = vadd.f32 %v1802, %v2104
        %v2133 = vadd.f32 %v1805, %v2104
        %v2134 = vadd.f32 %v1808, %v2104
        %v2135 = vadd.f32 %v1811, %v2104
        %v2136 = vadd.f32 %v1814, %v2104
        %v2137 = vadd.f32 %v1817, %v2104
        %v2138 = vadd.f32 %v1820, %v2104
        %v2139 = vadd.f32 %v1823, %v2104
        %v2140 = vadd.f32 %v1826, %v2104
        %v2141 = vadd.f32 %v1829, %v2104
        %v2142 = vadd.f32 %v1832, %v2104
        %v2143 = vadd.f32 %v1835, %v2104
        %v2144 = vadd.f32 %v1838, %v2104
        %v2145 = vadd.f32 %v1841, %v2104
        %v2146 = vadd.f32 %v1844, %v2104
        %v2147 = vadd.f32 %v1847, %v2104
        %v2148 = vadd.f32 %v1850, %v2104
        %v2149 = vadd.f32 %v1853, %v2104
        %v2150 = vadd.f32 %v1856, %v2104
        %v2151 = vadd.f32 %v1859, %v2104
        %v2152 = vadd.f32 %v1862, %v2104
        %v2153 = vadd.f32 %v1865, %v2104
        %v2154 = vadd.f32 %v1868, %v2104
        %v2155 = vadd.f32 %v1871, %v2104
        %v2156 = vadd.f32 %v1874, %v2104
        %v2157 = vadd.f32 %v1877, %v2104
        %v2158 = vadd.f32 %v1880, %v2104
        %v2159 = vadd.f32 %v1883, %v2104
        %v2160 = vadd.f32 %v1886, %v2104
        %v2161 = vadd.f32 %v1889, %v2104
        %v2162 = vadd.f32 %v1892, %v2104
        %v2163 = vadd.f32 %v1895, %v2104
        %v2164 = vadd.f32 %v1898, %v2104
        %v2165 = vadd.f32 %v1901, %v2104
        %v2166 = vadd.f32 %v1904, %v2104
        %v2167 = vadd.f32 %v1907, %v2104
        %v2168 = vadd.f32 %v1910, %v2104
        %v2169 = vadd.f32 %v1913, %v2104
        %v2170 = vadd.f32 %v1916, %v2104
        %v2171 = vadd.f32 %v1919, %v2104
        %v2172 = vadd.f32 %v1922, %v2104
        %v2173 = vadd.f32 %v1925, %v2104
        %v2174 = vadd.f32 %v1928, %v2104
        %v2175 = vadd.f32 %v1931, %v2104
        %v2176 = vadd.f32 %v1934, %v2104
        %v2177 = vadd.f32 %v1937, %v2104
        %v2178 = vadd.f32 %v1940, %v2104
        %v2179 = vadd.f32 %v1943, %v2104
        %v2180 = vadd.f32 %v1946, %v2104
        %v2181 = vadd.f32 %v1949, %v2104
        %v2182 = vadd.f32 %v1952, %v2104
        %v2183 = vadd.f32 %v1955, %v2104
        %v2184 = vadd.f32 %v1958, %v2104
        %v2185 = vadd.f32 %v1961, %v2104
        %v2186 = vadd.f32 %v1964, %v2104
        %v2187 = vadd.f32 %v1967, %v2104
        %v2188 = vadd.f32 %v1970, %v2104
        %v2189 = vadd.f32 %v1973, %v2104
        %v2190 = vadd.f32 %v1976, %v2104
        %v2191 = vadd.f32 %v1979, %v2104
        %v2192 = vadd.f32 %v1982, %v2104
        %v2193 = vadd.f32 %v1985, %v2104
        %v2194 = vadd.f32 %v1988, %v2104
        %v2195 = vadd.f32 %v1991, %v2104
        %v2196 = vadd.f32 %v1994, %v2104
        %v2197 = vadd.f32 %v1997, %v2104
        %v2198 = vadd.f32 %v2000, %v2104
        %v2199 = vadd.f32 %v2003, %v2104
        %v2200 = vadd.f32 %v2006, %v2104
        %v2201 = vadd.f32 %v2009, %v2104
        %v2202 = vadd.f32 %v2012, %v2104
        %v2203 = vadd.f32 %v2015, %v2104
        %v2204 = vadd.f32 %v2018, %v2104
        %v2205 = vadd.f32 %v2021, %v2104
        %v2206 = vadd.f32 %v2024, %v2104
        %v2207 = vadd.f32 %v2027, %v2104
        %v2208 = vadd.f32 %v2030, %v2104
        %v2209 = vadd.f32 %v2033, %v2104
        %v2210 = vadd.f32 %v2036, %v2104
        %v2211 = vadd.f32 %v2039, %v2104
        %v2212 = vadd.f32 %v2042, %v2104
        %v2213 = vadd.f32 %v2045, %v2104
        %v2214 = vadd.f32 %v2048, %v2104
        %v2215 = vadd.f32 %v2051, %v2104
        %v2216 = vadd.f32 %v2054, %v2104
        %v2217 = vadd.f32 %v2057, %v2104
        %v2218 = vadd.f32 %v2060, %v2104
        %v2219 = vadd.f32 %v2063, %v2104
        %v2220 = vadd.f32 %v2066, %v2104
        %v2221 = vadd.f32 %v2069, %v2104
        %v2222 = vadd.f32 %v2072, %v2104
        %v2223 = vadd.f32 %v2075, %v2104
        %v2224 = vadd.f32 %v2078, %v2104
        %v2225 = vadd.f32 %v2081, %v2104
        %v2226 = vadd.f32 %v2084, %v2104
        %v2227 = vadd.f32 %v2087, %v2104
        %v2228 = vadd.f32 %v2090, %v2104
        %v2229 = vadd.f32 %v2093, %v2104
        %v2230 = vadd.f32 %v2096, %v2104
        %v2231 = vadd.f32 %v2099, %v2104
        %v2232 = vadd.f32 %v2102, %v2104
        %v2233 = vxor.u32 %v2105, 2147483648
        %v2234 = vxor.u32 %v2106, 2147483648
        %v2235 = vxor.u32 %v2107, 2147483648
        %v2236 = vxor.u32 %v2108, 2147483648
        %v2237 = vxor.u32 %v2109, 2147483648
        %v2238 = vxor.u32 %v2110, 2147483648
        %v2239 = vxor.u32 %v2111, 2147483648
        %v2240 = vxor.u32 %v2112, 2147483648
        %v2241 = vxor.u32 %v2113, 2147483648
        %v2242 = vxor.u32 %v2114, 2147483648
        %v2243 = vxor.u32 %v2115, 2147483648
        %v2244 = vxor.u32 %v2116, 2147483648
        %v2245 = vxor.u32 %v2117, 2147483648
        %v2246 = vxor.u32 %v2118, 2147483648
        %v2247 = vxor.u32 %v2119, 2147483648
        %v2248 = vxor.u32 %v2120, 2147483648
        %v2249 = vxor.u32 %v2121, 2147483648
        %v2250 = vxor.u32 %v2122, 2147483648
        %v2251 = vxor.u32 %v2123, 2147483648
        %v2252 = vxor.u32 %v2124, 2147483648
        %v2253 = vxor.u32 %v2125, 2147483648
        %v2254 = vxor.u32 %v2126, 2147483648
        %v2255 = vxor.u32 %v2127, 2147483648
        %v2256 = vxor.u32 %v2128, 2147483648
        %v2257 = vxor.u32 %v2129, 2147483648
        %v2258 = vxor.u32 %v2130, 2147483648
        %v2259 = vxor.u32 %v2131, 2147483648
        %v2260 = vxor.u32 %v2132, 2147483648
        %v2261 = vxor.u32 %v2133, 2147483648
        %v2262 = vxor.u32 %v2134, 2147483648
        %v2263 = vxor.u32 %v2135, 2147483648
        %v2264 = vxor.u32 %v2136, 2147483648
        %v2265 = vxor.u32 %v2137, 2147483648
        %v2266 = vxor.u32 %v2138, 2147483648
        %v2267 = vxor.u32 %v2139, 2147483648
        %v2268 = vxor.u32 %v2140, 2147483648
        %v2269 = vxor.u32 %v2141, 2147483648
        %v2270 = vxor.u32 %v2142, 2147483648
        %v2271 = vxor.u32 %v2143, 2147483648
        %v2272 = vxor.u32 %v2144, 2147483648
        %v2273 = vxor.u32 %v2145, 2147483648
        %v2274 = vxor.u32 %v2146, 2147483648
        %v2275 = vxor.u32 %v2147, 2147483648
        %v2276 = vxor.u32 %v2148, 2147483648
        %v2277 = vxor.u32 %v2149, 2147483648
        %v2278 = vxor.u32 %v2150, 2147483648
        %v2279 = vxor.u32 %v2151, 2147483648
        %v2280 = vxor.u32 %v2152, 2147483648
        %v2281 = vxor.u32 %v2153, 2147483648
        %v2282 = vxor.u32 %v2154, 2147483648
        %v2283 = vxor.u32 %v2155, 2147483648
        %v2284 = vxor.u32 %v2156, 2147483648
        %v2285 = vxor.u32 %v2157, 2147483648
        %v2286 = vxor.u32 %v2158, 2147483648
        %v2287 = vxor.u32 %v2159, 2147483648
        %v2288 = vxor.u32 %v2160, 2147483648
        %v2289 = vxor.u32 %v2161, 2147483648
        %v2290 = vxor.u32 %v2162, 2147483648
        %v2291 = vxor.u32 %v2163, 2147483648
        %v2292 = vxor.u32 %v2164, 2147483648
        %v2293 = vxor.u32 %v2165, 2147483648
        %v2294 = vxor.u32 %v2166, 2147483648
        %v2295 = vxor.u32 %v2167, 2147483648
        %v2296 = vxor.u32 %v2168, 2147483648
        %v2297 = vxor.u32 %v2169, 2147483648
        %v2298 = vxor.u32 %v2170, 2147483648
        %v2299 = vxor.u32 %v2171, 2147483648
        %v2300 = vxor.u32 %v2172, 2147483648
        %v2301 = vxor.u32 %v2173, 2147483648
        %v2302 = vxor.u32 %v2174, 2147483648
        %v2303 = vxor.u32 %v2175, 2147483648
        %v2304 = vxor.u32 %v2176, 2147483648
        %v2305 = vxor.u32 %v2177, 2147483648
        %v2306 = vxor.u32 %v2178, 2147483648
        %v2307 = vxor.u32 %v2179, 2147483648
        %v2308 = vxor.u32 %v2180, 2147483648
        %v2309 = vxor.u32 %v2181, 2147483648
        %v2310 = vxor.u32 %v2182, 2147483648
        %v2311 = vxor.u32 %v2183, 2147483648
        %v2312 = vxor.u32 %v2184, 2147483648
        %v2313 = vxor.u32 %v2185, 2147483648
        %v2314 = vxor.u32 %v2186, 2147483648
        %v2315 = vxor.u32 %v2187, 2147483648
        %v2316 = vxor.u32 %v2188, 2147483648
        %v2317 = vxor.u32 %v2189, 2147483648
        %v2318 = vxor.u32 %v2190, 2147483648
        %v2319 = vxor.u32 %v2191, 2147483648
        %v2320 = vxor.u32 %v2192, 2147483648
        %v2321 = vxor.u32 %v2193, 2147483648
        %v2322 = vxor.u32 %v2194, 2147483648
        %v2323 = vxor.u32 %v2195, 2147483648
        %v2324 = vxor.u32 %v2196, 2147483648
        %v2325 = vxor.u32 %v2197, 2147483648
        %v2326 = vxor.u32 %v2198, 2147483648
        %v2327 = vxor.u32 %v2199, 2147483648
        %v2328 = vxor.u32 %v2200, 2147483648
        %v2329 = vxor.u32 %v2201, 2147483648
        %v2330 = vxor.u32 %v2202, 2147483648
        %v2331 = vxor.u32 %v2203, 2147483648
        %v2332 = vxor.u32 %v2204, 2147483648
        %v2333 = vxor.u32 %v2205, 2147483648
        %v2334 = vxor.u32 %v2206, 2147483648
        %v2335 = vxor.u32 %v2207, 2147483648
        %v2336 = vxor.u32 %v2208, 2147483648
        %v2337 = vxor.u32 %v2209, 2147483648
        %v2338 = vxor.u32 %v2210, 2147483648
        %v2339 = vxor.u32 %v2211, 2147483648
        %v2340 = vxor.u32 %v2212, 2147483648
        %v2341 = vxor.u32 %v2213, 2147483648
        %v2342 = vxor.u32 %v2214, 2147483648
        %v2343 = vxor.u32 %v2215, 2147483648
        %v2344 = vxor.u32 %v2216, 2147483648
        %v2345 = vxor.u32 %v2217, 2147483648
        %v2346 = vxor.u32 %v2218, 2147483648
        %v2347 = vxor.u32 %v2219, 2147483648
        %v2348 = vxor.u32 %v2220, 2147483648
        %v2349 = vxor.u32 %v2221, 2147483648
        %v2350 = vxor.u32 %v2222, 2147483648
        %v2351 = vxor.u32 %v2223, 2147483648
        %v2352 = vxor.u32 %v2224, 2147483648
        %v2353 = vxor.u32 %v2225, 2147483648
        %v2354 = vxor.u32 %v2226, 2147483648
        %v2355 = vxor.u32 %v2227, 2147483648
        %v2356 = vxor.u32 %v2228, 2147483648
        %v2357 = vxor.u32 %v2229, 2147483648
        %v2358 = vxor.u32 %v2230, 2147483648
        %v2359 = vxor.u32 %v2231, 2147483648
        %v2360 = vxor.u32 %v2232, 2147483648
        %v2361 = vmul.f32 %v2233, 1.442695
        %v2362 = vpow.pop %v2361
        %v2363 = vmul.f32 %v2234, 1.442695
        %v2364 = vpow.pop %v2363
        %v2365 = vmul.f32 %v2235, 1.442695
        %v2366 = vpow.pop %v2365
        %v2367 = vmul.f32 %v2236, 1.442695
        %v2368 = vpow.pop %v2367
        %v2369 = vmul.f32 %v2237, 1.442695
        %v2370 = vpow.pop %v2369
        %v2371 = vmul.f32 %v2238, 1.442695
        %v2372 = vpow.pop %v2371
        %v2373 = vmul.f32 %v2239, 1.442695
        %v2374 = vpow.pop %v2373
        %v2375 = vmul.f32 %v2240, 1.442695
        %v2376 = vpow.pop %v2375
        %v2377 = vmul.f32 %v2241, 1.442695
        %v2378 = vpow.pop %v2377
        %v2379 = vmul.f32 %v2242, 1.442695
        %v2380 = vpow.pop %v2379
        %v2381 = vmul.f32 %v2243, 1.442695
        %v2382 = vpow.pop %v2381
        %v2383 = vmul.f32 %v2244, 1.442695
        %v2384 = vpow.pop %v2383
        %v2385 = vmul.f32 %v2245, 1.442695
        %v2386 = vpow.pop %v2385
        %v2387 = vmul.f32 %v2246, 1.442695
        %v2388 = vpow.pop %v2387
        %v2389 = vmul.f32 %v2247, 1.442695
        %v2390 = vpow.pop %v2389
        %v2391 = vmul.f32 %v2248, 1.442695
        %v2392 = vpow.pop %v2391
        %v2393 = vmul.f32 %v2249, 1.442695
        %v2394 = vpow.pop %v2393
        %v2395 = vmul.f32 %v2250, 1.442695
        %v2396 = vpow.pop %v2395
        %v2397 = vmul.f32 %v2251, 1.442695
        %v2398 = vpow.pop %v2397
        %v2399 = vmul.f32 %v2252, 1.442695
        %v2400 = vpow.pop %v2399
        %v2401 = vmul.f32 %v2253, 1.442695
        %v2402 = vpow.pop %v2401
        %v2403 = vmul.f32 %v2254, 1.442695
        %v2404 = vpow.pop %v2403
        %v2405 = vmul.f32 %v2255, 1.442695
        %v2406 = vpow.pop %v2405
        %v2407 = vmul.f32 %v2256, 1.442695
        %v2408 = vpow.pop %v2407
        %v2409 = vmul.f32 %v2257, 1.442695
        %v2410 = vpow.pop %v2409
        %v2411 = vmul.f32 %v2258, 1.442695
        %v2412 = vpow.pop %v2411
        %v2413 = vmul.f32 %v2259, 1.442695
        %v2414 = vpow.pop %v2413
        %v2415 = vmul.f32 %v2260, 1.442695
        %v2416 = vpow.pop %v2415
        %v2417 = vmul.f32 %v2261, 1.442695
        %v2418 = vpow.pop %v2417
        %v2419 = vmul.f32 %v2262, 1.442695
        %v2420 = vpow.pop %v2419
        %v2421 = vmul.f32 %v2263, 1.442695
        %v2422 = vpow.pop %v2421
        %v2423 = vmul.f32 %v2264, 1.442695
        %v2424 = vpow.pop %v2423
        %v2425 = vmul.f32 %v2265, 1.442695
        %v2426 = vpow.pop %v2425
        %v2427 = vmul.f32 %v2266, 1.442695
        %v2428 = vpow.pop %v2427
        %v2429 = vmul.f32 %v2267, 1.442695
        %v2430 = vpow.pop %v2429
        %v2431 = vmul.f32 %v2268, 1.442695
        %v2432 = vpow.pop %v2431
        %v2433 = vmul.f32 %v2269, 1.442695
        %v2434 = vpow.pop %v2433
        %v2435 = vmul.f32 %v2270, 1.442695
        %v2436 = vpow.pop %v2435
        %v2437 = vmul.f32 %v2271, 1.442695
        %v2438 = vpow.pop %v2437
        %v2439 = vmul.f32 %v2272, 1.442695
        %v2440 = vpow.pop %v2439
        %v2441 = vmul.f32 %v2273, 1.442695
        %v2442 = vpow.pop %v2441
        %v2443 = vmul.f32 %v2274, 1.442695
        %v2444 = vpow.pop %v2443
        %v2445 = vmul.f32 %v2275, 1.442695
        %v2446 = vpow.pop %v2445
        %v2447 = vmul.f32 %v2276, 1.442695
        %v2448 = vpow.pop %v2447
        %v2449 = vmul.f32 %v2277, 1.442695
        %v2450 = vpow.pop %v2449
        %v2451 = vmul.f32 %v2278, 1.442695
        %v2452 = vpow.pop %v2451
        %v2453 = vmul.f32 %v2279, 1.442695
        %v2454 = vpow.pop %v2453
        %v2455 = vmul.f32 %v2280, 1.442695
        %v2456 = vpow.pop %v2455
        %v2457 = vmul.f32 %v2281, 1.442695
        %v2458 = vpow.pop %v2457
        %v2459 = vmul.f32 %v2282, 1.442695
        %v2460 = vpow.pop %v2459
        %v2461 = vmul.f32 %v2283, 1.442695
        %v2462 = vpow.pop %v2461
        %v2463 = vmul.f32 %v2284, 1.442695
        %v2464 = vpow.pop %v2463
        %v2465 = vmul.f32 %v2285, 1.442695
        %v2466 = vpow.pop %v2465
        %v2467 = vmul.f32 %v2286, 1.442695
        %v2468 = vpow.pop %v2467
        %v2469 = vmul.f32 %v2287, 1.442695
        %v2470 = vpow.pop %v2469
        %v2471 = vmul.f32 %v2288, 1.442695
        %v2472 = vpow.pop %v2471
        %v2473 = vmul.f32 %v2289, 1.442695
        %v2474 = vpow.pop %v2473
        %v2475 = vmul.f32 %v2290, 1.442695
        %v2476 = vpow.pop %v2475
        %v2477 = vmul.f32 %v2291, 1.442695
        %v2478 = vpow.pop %v2477
        %v2479 = vmul.f32 %v2292, 1.442695
        %v2480 = vpow.pop %v2479
        %v2481 = vmul.f32 %v2293, 1.442695
        %v2482 = vpow.pop %v2481
        %v2483 = vmul.f32 %v2294, 1.442695
        %v2484 = vpow.pop %v2483
        %v2485 = vmul.f32 %v2295, 1.442695
        %v2486 = vpow.pop %v2485
        %v2487 = vmul.f32 %v2296, 1.442695
        %v2488 = vpow.pop %v2487
        %v2489 = vmul.f32 %v2297, 1.442695
        %v2490 = vpow.pop %v2489
        %v2491 = vmul.f32 %v2298, 1.442695
        %v2492 = vpow.pop %v2491
        %v2493 = vmul.f32 %v2299, 1.442695
        %v2494 = vpow.pop %v2493
        %v2495 = vmul.f32 %v2300, 1.442695
        %v2496 = vpow.pop %v2495
        %v2497 = vmul.f32 %v2301, 1.442695
        %v2498 = vpow.pop %v2497
        %v2499 = vmul.f32 %v2302, 1.442695
        %v2500 = vpow.pop %v2499
        %v2501 = vmul.f32 %v2303, 1.442695
        %v2502 = vpow.pop %v2501
        %v2503 = vmul.f32 %v2304, 1.442695
        %v2504 = vpow.pop %v2503
        %v2505 = vmul.f32 %v2305, 1.442695
        %v2506 = vpow.pop %v2505
        %v2507 = vmul.f32 %v2306, 1.442695
        %v2508 = vpow.pop %v2507
        %v2509 = vmul.f32 %v2307, 1.442695
        %v2510 = vpow.pop %v2509
        %v2511 = vmul.f32 %v2308, 1.442695
        %v2512 = vpow.pop %v2511
        %v2513 = vmul.f32 %v2309, 1.442695
        %v2514 = vpow.pop %v2513
        %v2515 = vmul.f32 %v2310, 1.442695
        %v2516 = vpow.pop %v2515
        %v2517 = vmul.f32 %v2311, 1.442695
        %v2518 = vpow.pop %v2517
        %v2519 = vmul.f32 %v2312, 1.442695
        %v2520 = vpow.pop %v2519
        %v2521 = vmul.f32 %v2313, 1.442695
        %v2522 = vpow.pop %v2521
        %v2523 = vmul.f32 %v2314, 1.442695
        %v2524 = vpow.pop %v2523
        %v2525 = vmul.f32 %v2315, 1.442695
        %v2526 = vpow.pop %v2525
        %v2527 = vmul.f32 %v2316, 1.442695
        %v2528 = vpow.pop %v2527
        %v2529 = vmul.f32 %v2317, 1.442695
        %v2530 = vpow.pop %v2529
        %v2531 = vmul.f32 %v2318, 1.442695
        %v2532 = vpow.pop %v2531
        %v2533 = vmul.f32 %v2319, 1.442695
        %v2534 = vpow.pop %v2533
        %v2535 = vmul.f32 %v2320, 1.442695
        %v2536 = vpow.pop %v2535
        %v2537 = vmul.f32 %v2321, 1.442695
        %v2538 = vpow.pop %v2537
        %v2539 = vmul.f32 %v2322, 1.442695
        %v2540 = vpow.pop %v2539
        %v2541 = vmul.f32 %v2323, 1.442695
        %v2542 = vpow.pop %v2541
        %v2543 = vmul.f32 %v2324, 1.442695
        %v2544 = vpow.pop %v2543
        %v2545 = vmul.f32 %v2325, 1.442695
        %v2546 = vpow.pop %v2545
        %v2547 = vmul.f32 %v2326, 1.442695
        %v2548 = vpow.pop %v2547
        %v2549 = vmul.f32 %v2327, 1.442695
        %v2550 = vpow.pop %v2549
        %v2551 = vmul.f32 %v2328, 1.442695
        %v2552 = vpow.pop %v2551
        %v2553 = vmul.f32 %v2329, 1.442695
        %v2554 = vpow.pop %v2553
        %v2555 = vmul.f32 %v2330, 1.442695
        %v2556 = vpow.pop %v2555
        %v2557 = vmul.f32 %v2331, 1.442695
        %v2558 = vpow.pop %v2557
        %v2559 = vmul.f32 %v2332, 1.442695
        %v2560 = vpow.pop %v2559
        %v2561 = vmul.f32 %v2333, 1.442695
        %v2562 = vpow.pop %v2561
        %v2563 = vmul.f32 %v2334, 1.442695
        %v2564 = vpow.pop %v2563
        %v2565 = vmul.f32 %v2335, 1.442695
        %v2566 = vpow.pop %v2565
        %v2567 = vmul.f32 %v2336, 1.442695
        %v2568 = vpow.pop %v2567
        %v2569 = vmul.f32 %v2337, 1.442695
        %v2570 = vpow.pop %v2569
        %v2571 = vmul.f32 %v2338, 1.442695
        %v2572 = vpow.pop %v2571
        %v2573 = vmul.f32 %v2339, 1.442695
        %v2574 = vpow.pop %v2573
        %v2575 = vmul.f32 %v2340, 1.442695
        %v2576 = vpow.pop %v2575
        %v2577 = vmul.f32 %v2341, 1.442695
        %v2578 = vpow.pop %v2577
        %v2579 = vmul.f32 %v2342, 1.442695
        %v2580 = vpow.pop %v2579
        %v2581 = vmul.f32 %v2343, 1.442695
        %v2582 = vpow.pop %v2581
        %v2583 = vmul.f32 %v2344, 1.442695
        %v2584 = vpow.pop %v2583
        %v2585 = vmul.f32 %v2345, 1.442695
        %v2586 = vpow.pop %v2585
        %v2587 = vmul.f32 %v2346, 1.442695
        %v2588 = vpow.pop %v2587
        %v2589 = vmul.f32 %v2347, 1.442695
        %v2590 = vpow.pop %v2589
        %v2591 = vmul.f32 %v2348, 1.442695
        %v2592 = vpow.pop %v2591
        %v2593 = vmul.f32 %v2349, 1.442695
        %v2594 = vpow.pop %v2593
        %v2595 = vmul.f32 %v2350, 1.442695
        %v2596 = vpow.pop %v2595
        %v2597 = vmul.f32 %v2351, 1.442695
        %v2598 = vpow.pop %v2597
        %v2599 = vmul.f32 %v2352, 1.442695
        %v2600 = vpow.pop %v2599
        %v2601 = vmul.f32 %v2353, 1.442695
        %v2602 = vpow.pop %v2601
        %v2603 = vmul.f32 %v2354, 1.442695
        %v2604 = vpow.pop %v2603
        %v2605 = vmul.f32 %v2355, 1.442695
        %v2606 = vpow.pop %v2605
        %v2607 = vmul.f32 %v2356, 1.442695
        %v2608 = vpow.pop %v2607
        %v2609 = vmul.f32 %v2357, 1.442695
        %v2610 = vpow.pop %v2609
        %v2611 = vmul.f32 %v2358, 1.442695
        %v2612 = vpow.pop %v2611
        %v2613 = vmul.f32 %v2359, 1.442695
        %v2614 = vpow.pop %v2613
        %v2615 = vmul.f32 %v2360, 1.442695
        %v2616 = vpow.pop %v2615
        %v2617 = vadd.f32 %v2362, 1.0
        %v2618 = vadd.f32 %v2364, 1.0
        %v2619 = vadd.f32 %v2366, 1.0
        %v2620 = vadd.f32 %v2368, 1.0
        %v2621 = vadd.f32 %v2370, 1.0
        %v2622 = vadd.f32 %v2372, 1.0
        %v2623 = vadd.f32 %v2374, 1.0
        %v2624 = vadd.f32 %v2376, 1.0
        %v2625 = vadd.f32 %v2378, 1.0
        %v2626 = vadd.f32 %v2380, 1.0
        %v2627 = vadd.f32 %v2382, 1.0
        %v2628 = vadd.f32 %v2384, 1.0
        %v2629 = vadd.f32 %v2386, 1.0
        %v2630 = vadd.f32 %v2388, 1.0
        %v2631 = vadd.f32 %v2390, 1.0
        %v2632 = vadd.f32 %v2392, 1.0
        %v2633 = vadd.f32 %v2394, 1.0
        %v2634 = vadd.f32 %v2396, 1.0
        %v2635 = vadd.f32 %v2398, 1.0
        %v2636 = vadd.f32 %v2400, 1.0
        %v2637 = vadd.f32 %v2402, 1.0
        %v2638 = vadd.f32 %v2404, 1.0
        %v2639 = vadd.f32 %v2406, 1.0
        %v2640 = vadd.f32 %v2408, 1.0
        %v2641 = vadd.f32 %v2410, 1.0
        %v2642 = vadd.f32 %v2412, 1.0
        %v2643 = vadd.f32 %v2414, 1.0
        %v2644 = vadd.f32 %v2416, 1.0
        %v2645 = vadd.f32 %v2418, 1.0
        %v2646 = vadd.f32 %v2420, 1.0
        %v2647 = vadd.f32 %v2422, 1.0
        %v2648 = vadd.f32 %v2424, 1.0
        %v2649 = vadd.f32 %v2426, 1.0
        %v2650 = vadd.f32 %v2428, 1.0
        %v2651 = vadd.f32 %v2430, 1.0
        %v2652 = vadd.f32 %v2432, 1.0
        %v2653 = vadd.f32 %v2434, 1.0
        %v2654 = vadd.f32 %v2436, 1.0
        %v2655 = vadd.f32 %v2438, 1.0
        %v2656 = vadd.f32 %v2440, 1.0
        %v2657 = vadd.f32 %v2442, 1.0
        %v2658 = vadd.f32 %v2444, 1.0
        %v2659 = vadd.f32 %v2446, 1.0
        %v2660 = vadd.f32 %v2448, 1.0
        %v2661 = vadd.f32 %v2450, 1.0
        %v2662 = vadd.f32 %v2452, 1.0
        %v2663 = vadd.f32 %v2454, 1.0
        %v2664 = vadd.f32 %v2456, 1.0
        %v2665 = vadd.f32 %v2458, 1.0
        %v2666 = vadd.f32 %v2460, 1.0
        %v2667 = vadd.f32 %v2462, 1.0
        %v2668 = vadd.f32 %v2464, 1.0
        %v2669 = vadd.f32 %v2466, 1.0
        %v2670 = vadd.f32 %v2468, 1.0
        %v2671 = vadd.f32 %v2470, 1.0
        %v2672 = vadd.f32 %v2472, 1.0
        %v2673 = vadd.f32 %v2474, 1.0
        %v2674 = vadd.f32 %v2476, 1.0
        %v2675 = vadd.f32 %v2478, 1.0
        %v2676 = vadd.f32 %v2480, 1.0
        %v2677 = vadd.f32 %v2482, 1.0
        %v2678 = vadd.f32 %v2484, 1.0
        %v2679 = vadd.f32 %v2486, 1.0
        %v2680 = vadd.f32 %v2488, 1.0
        %v2681 = vadd.f32 %v2490, 1.0
        %v2682 = vadd.f32 %v2492, 1.0
        %v2683 = vadd.f32 %v2494, 1.0
        %v2684 = vadd.f32 %v2496, 1.0
        %v2685 = vadd.f32 %v2498, 1.0
        %v2686 = vadd.f32 %v2500, 1.0
        %v2687 = vadd.f32 %v2502, 1.0
        %v2688 = vadd.f32 %v2504, 1.0
        %v2689 = vadd.f32 %v2506, 1.0
        %v2690 = vadd.f32 %v2508, 1.0
        %v2691 = vadd.f32 %v2510, 1.0
        %v2692 = vadd.f32 %v2512, 1.0
        %v2693 = vadd.f32 %v2514, 1.0
        %v2694 = vadd.f32 %v2516, 1.0
        %v2695 = vadd.f32 %v2518, 1.0
        %v2696 = vadd.f32 %v2520, 1.0
        %v2697 = vadd.f32 %v2522, 1.0
        %v2698 = vadd.f32 %v2524, 1.0
        %v2699 = vadd.f32 %v2526, 1.0
        %v2700 = vadd.f32 %v2528, 1.0
        %v2701 = vadd.f32 %v2530, 1.0
        %v2702 = vadd.f32 %v2532, 1.0
        %v2703 = vadd.f32 %v2534, 1.0
        %v2704 = vadd.f32 %v2536, 1.0
        %v2705 = vadd.f32 %v2538, 1.0
        %v2706 = vadd.f32 %v2540, 1.0
        %v2707 = vadd.f32 %v2542, 1.0
        %v2708 = vadd.f32 %v2544, 1.0
        %v2709 = vadd.f32 %v2546, 1.0
        %v2710 = vadd.f32 %v2548, 1.0
        %v2711 = vadd.f32 %v2550, 1.0
        %v2712 = vadd.f32 %v2552, 1.0
        %v2713 = vadd.f32 %v2554, 1.0
        %v2714 = vadd.f32 %v2556, 1.0
        %v2715 = vadd.f32 %v2558, 1.0
        %v2716 = vadd.f32 %v2560, 1.0
        %v2717 = vadd.f32 %v2562, 1.0
        %v2718 = vadd.f32 %v2564, 1.0
        %v2719 = vadd.f32 %v2566, 1.0
        %v2720 = vadd.f32 %v2568, 1.0
        %v2721 = vadd.f32 %v2570, 1.0
        %v2722 = vadd.f32 %v2572, 1.0
        %v2723 = vadd.f32 %v2574, 1.0
        %v2724 = vadd.f32 %v2576, 1.0
        %v2725 = vadd.f32 %v2578, 1.0
        %v2726 = vadd.f32 %v2580, 1.0
        %v2727 = vadd.f32 %v2582, 1.0
        %v2728 = vadd.f32 %v2584, 1.0
        %v2729 = vadd.f32 %v2586, 1.0
        %v2730 = vadd.f32 %v2588, 1.0
        %v2731 = vadd.f32 %v2590, 1.0
        %v2732 = vadd.f32 %v2592, 1.0
        %v2733 = vadd.f32 %v2594, 1.0
        %v2734 = vadd.f32 %v2596, 1.0
        %v2735 = vadd.f32 %v2598, 1.0
        %v2736 = vadd.f32 %v2600, 1.0
        %v2737 = vadd.f32 %v2602, 1.0
        %v2738 = vadd.f32 %v2604, 1.0
        %v2739 = vadd.f32 %v2606, 1.0
        %v2740 = vadd.f32 %v2608, 1.0
        %v2741 = vadd.f32 %v2610, 1.0
        %v2742 = vadd.f32 %v2612, 1.0
        %v2743 = vadd.f32 %v2614, 1.0
        %v2744 = vadd.f32 %v2616, 1.0
        %v2745 = vrcp.pop %v2617
        %v2746 = vmul.f32 1.0, %v2745
        %v2747 = vrcp.pop %v2618
        %v2748 = vmul.f32 1.0, %v2747
        %v2749 = vrcp.pop %v2619
        %v2750 = vmul.f32 1.0, %v2749
        %v2751 = vrcp.pop %v2620
        %v2752 = vmul.f32 1.0, %v2751
        %v2753 = vrcp.pop %v2621
        %v2754 = vmul.f32 1.0, %v2753
        %v2755 = vrcp.pop %v2622
        %v2756 = vmul.f32 1.0, %v2755
        %v2757 = vrcp.pop %v2623
        %v2758 = vmul.f32 1.0, %v2757
        %v2759 = vrcp.pop %v2624
        %v2760 = vmul.f32 1.0, %v2759
        %v2761 = vrcp.pop %v2625
        %v2762 = vmul.f32 1.0, %v2761
        %v2763 = vrcp.pop %v2626
        %v2764 = vmul.f32 1.0, %v2763
        %v2765 = vrcp.pop %v2627
        %v2766 = vmul.f32 1.0, %v2765
        %v2767 = vrcp.pop %v2628
        %v2768 = vmul.f32 1.0, %v2767
        %v2769 = vrcp.pop %v2629
        %v2770 = vmul.f32 1.0, %v2769
        %v2771 = vrcp.pop %v2630
        %v2772 = vmul.f32 1.0, %v2771
        %v2773 = vrcp.pop %v2631
        %v2774 = vmul.f32 1.0, %v2773
        %v2775 = vrcp.pop %v2632
        %v2776 = vmul.f32 1.0, %v2775
        %v2777 = vrcp.pop %v2633
        %v2778 = vmul.f32 1.0, %v2777
        %v2779 = vrcp.pop %v2634
        %v2780 = vmul.f32 1.0, %v2779
        %v2781 = vrcp.pop %v2635
        %v2782 = vmul.f32 1.0, %v2781
        %v2783 = vrcp.pop %v2636
        %v2784 = vmul.f32 1.0, %v2783
        %v2785 = vrcp.pop %v2637
        %v2786 = vmul.f32 1.0, %v2785
        %v2787 = vrcp.pop %v2638
        %v2788 = vmul.f32 1.0, %v2787
        %v2789 = vrcp.pop %v2639
        %v2790 = vmul.f32 1.0, %v2789
        %v2791 = vrcp.pop %v2640
        %v2792 = vmul.f32 1.0, %v2791
        %v2793 = vrcp.pop %v2641
        %v2794 = vmul.f32 1.0, %v2793
        %v2795 = vrcp.pop %v2642
        %v2796 = vmul.f32 1.0, %v2795
        %v2797 = vrcp.pop %v2643
        %v2798 = vmul.f32 1.0, %v2797
        %v2799 = vrcp.pop %v2644
        %v2800 = vmul.f32 1.0, %v2799
        %v2801 = vrcp.pop %v2645
        %v2802 = vmul.f32 1.0, %v2801
        %v2803 = vrcp.pop %v2646
        %v2804 = vmul.f32 1.0, %v2803
        %v2805 = vrcp.pop %v2647
        %v2806 = vmul.f32 1.0, %v2805
        %v2807 = vrcp.pop %v2648
        %v2808 = vmul.f32 1.0, %v2807
        %v2809 = vrcp.pop %v2649
        %v2810 = vmul.f32 1.0, %v2809
        %v2811 = vrcp.pop %v2650
        %v2812 = vmul.f32 1.0, %v2811
        %v2813 = vrcp.pop %v2651
        %v2814 = vmul.f32 1.0, %v2813
        %v2815 = vrcp.pop %v2652
        %v2816 = vmul.f32 1.0, %v2815
        %v2817 = vrcp.pop %v2653
        %v2818 = vmul.f32 1.0, %v2817
        %v2819 = vrcp.pop %v2654
        %v2820 = vmul.f32 1.0, %v2819
        %v2821 = vrcp.pop %v2655
        %v2822 = vmul.f32 1.0, %v2821
        %v2823 = vrcp.pop %v2656
        %v2824 = vmul.f32 1.0, %v2823
        %v2825 = vrcp.pop %v2657
        %v2826 = vmul.f32 1.0, %v2825
        %v2827 = vrcp.pop %v2658
        %v2828 = vmul.f32 1.0, %v2827
        %v2829 = vrcp.pop %v2659
        %v2830 = vmul.f32 1.0, %v2829
        %v2831 = vrcp.pop %v2660
        %v2832 = vmul.f32 1.0, %v2831
        %v2833 = vrcp.pop %v2661
        %v2834 = vmul.f32 1.0, %v2833
        %v2835 = vrcp.pop %v2662
        %v2836 = vmul.f32 1.0, %v2835
        %v2837 = vrcp.pop %v2663
        %v2838 = vmul.f32 1.0, %v2837
        %v2839 = vrcp.pop %v2664
        %v2840 = vmul.f32 1.0, %v2839
        %v2841 = vrcp.pop %v2665
        %v2842 = vmul.f32 1.0, %v2841
        %v2843 = vrcp.pop %v2666
        %v2844 = vmul.f32 1.0, %v2843
        %v2845 = vrcp.pop %v2667
        %v2846 = vmul.f32 1.0, %v2845
        %v2847 = vrcp.pop %v2668
        %v2848 = vmul.f32 1.0, %v2847
        %v2849 = vrcp.pop %v2669
        %v2850 = vmul.f32 1.0, %v2849
        %v2851 = vrcp.pop %v2670
        %v2852 = vmul.f32 1.0, %v2851
        %v2853 = vrcp.pop %v2671
        %v2854 = vmul.f32 1.0, %v2853
        %v2855 = vrcp.pop %v2672
        %v2856 = vmul.f32 1.0, %v2855
        %v2857 = vrcp.pop %v2673
        %v2858 = vmul.f32 1.0, %v2857
        %v2859 = vrcp.pop %v2674
        %v2860 = vmul.f32 1.0, %v2859
        %v2861 = vrcp.pop %v2675
        %v2862 = vmul.f32 1.0, %v2861
        %v2863 = vrcp.pop %v2676
        %v2864 = vmul.f32 1.0, %v2863
        %v2865 = vrcp.pop %v2677
        %v2866 = vmul.f32 1.0, %v2865
        %v2867 = vrcp.pop %v2678
        %v2868 = vmul.f32 1.0, %v2867
        %v2869 = vrcp.pop %v2679
        %v2870 = vmul.f32 1.0, %v2869
        %v2871 = vrcp.pop %v2680
        %v2872 = vmul.f32 1.0, %v2871
        %v2873 = vrcp.pop %v2681
        %v2874 = vmul.f32 1.0, %v2873
        %v2875 = vrcp.pop %v2682
        %v2876 = vmul.f32 1.0, %v2875
        %v2877 = vrcp.pop %v2683
        %v2878 = vmul.f32 1.0, %v2877
        %v2879 = vrcp.pop %v2684
        %v2880 = vmul.f32 1.0, %v2879
        %v2881 = vrcp.pop %v2685
        %v2882 = vmul.f32 1.0, %v2881
        %v2883 = vrcp.pop %v2686
        %v2884 = vmul.f32 1.0, %v2883
        %v2885 = vrcp.pop %v2687
        %v2886 = vmul.f32 1.0, %v2885
        %v2887 = vrcp.pop %v2688
        %v2888 = vmul.f32 1.0, %v2887
        %v2889 = vrcp.pop %v2689
        %v2890 = vmul.f32 1.0, %v2889
        %v2891 = vrcp.pop %v2690
        %v2892 = vmul.f32 1.0, %v2891
        %v2893 = vrcp.pop %v2691
        %v2894 = vmul.f32 1.0, %v2893
        %v2895 = vrcp.pop %v2692
        %v2896 = vmul.f32 1.0, %v2895
        %v2897 = vrcp.pop %v2693
        %v2898 = vmul.f32 1.0, %v2897
        %v2899 = vrcp.pop %v2694
        %v2900 = vmul.f32 1.0, %v2899
        %v2901 = vrcp.pop %v2695
        %v2902 = vmul.f32 1.0, %v2901
        %v2903 = vrcp.pop %v2696
        %v2904 = vmul.f32 1.0, %v2903
        %v2905 = vrcp.pop %v2697
        %v2906 = vmul.f32 1.0, %v2905
        %v2907 = vrcp.pop %v2698
        %v2908 = vmul.f32 1.0, %v2907
        %v2909 = vrcp.pop %v2699
        %v2910 = vmul.f32 1.0, %v2909
        %v2911 = vrcp.pop %v2700
        %v2912 = vmul.f32 1.0, %v2911
        %v2913 = vrcp.pop %v2701
        %v2914 = vmul.f32 1.0, %v2913
        %v2915 = vrcp.pop %v2702
        %v2916 = vmul.f32 1.0, %v2915
        %v2917 = vrcp.pop %v2703
        %v2918 = vmul.f32 1.0, %v2917
        %v2919 = vrcp.pop %v2704
        %v2920 = vmul.f32 1.0, %v2919
        %v2921 = vrcp.pop %v2705
        %v2922 = vmul.f32 1.0, %v2921
        %v2923 = vrcp.pop %v2706
        %v2924 = vmul.f32 1.0, %v2923
        %v2925 = vrcp.pop %v2707
        %v2926 = vmul.f32 1.0, %v2925
        %v2927 = vrcp.pop %v2708
        %v2928 = vmul.f32 1.0, %v2927
        %v2929 = vrcp.pop %v2709
        %v2930 = vmul.f32 1.0, %v2929
        %v2931 = vrcp.pop %v2710
        %v2932 = vmul.f32 1.0, %v2931
        %v2933 = vrcp.pop %v2711
        %v2934 = vmul.f32 1.0, %v2933
        %v2935 = vrcp.pop %v2712
        %v2936 = vmul.f32 1.0, %v2935
        %v2937 = vrcp.pop %v2713
        %v2938 = vmul.f32 1.0, %v2937
        %v2939 = vrcp.pop %v2714
        %v2940 = vmul.f32 1.0, %v2939
        %v2941 = vrcp.pop %v2715
        %v2942 = vmul.f32 1.0, %v2941
        %v2943 = vrcp.pop %v2716
        %v2944 = vmul.f32 1.0, %v2943
        %v2945 = vrcp.pop %v2717
        %v2946 = vmul.f32 1.0, %v2945
        %v2947 = vrcp.pop %v2718
        %v2948 = vmul.f32 1.0, %v2947
        %v2949 = vrcp.pop %v2719
        %v2950 = vmul.f32 1.0, %v2949
        %v2951 = vrcp.pop %v2720
        %v2952 = vmul.f32 1.0, %v2951
        %v2953 = vrcp.pop %v2721
        %v2954 = vmul.f32 1.0, %v2953
        %v2955 = vrcp.pop %v2722
        %v2956 = vmul.f32 1.0, %v2955
        %v2957 = vrcp.pop %v2723
        %v2958 = vmul.f32 1.0, %v2957
        %v2959 = vrcp.pop %v2724
        %v2960 = vmul.f32 1.0, %v2959
        %v2961 = vrcp.pop %v2725
        %v2962 = vmul.f32 1.0, %v2961
        %v2963 = vrcp.pop %v2726
        %v2964 = vmul.f32 1.0, %v2963
        %v2965 = vrcp.pop %v2727
        %v2966 = vmul.f32 1.0, %v2965
        %v2967 = vrcp.pop %v2728
        %v2968 = vmul.f32 1.0, %v2967
        %v2969 = vrcp.pop %v2729
        %v2970 = vmul.f32 1.0, %v2969
        %v2971 = vrcp.pop %v2730
        %v2972 = vmul.f32 1.0, %v2971
        %v2973 = vrcp.pop %v2731
        %v2974 = vmul.f32 1.0, %v2973
        %v2975 = vrcp.pop %v2732
        %v2976 = vmul.f32 1.0, %v2975
        %v2977 = vrcp.pop %v2733
        %v2978 = vmul.f32 1.0, %v2977
        %v2979 = vrcp.pop %v2734
        %v2980 = vmul.f32 1.0, %v2979
        %v2981 = vrcp.pop %v2735
        %v2982 = vmul.f32 1.0, %v2981
        %v2983 = vrcp.pop %v2736
        %v2984 = vmul.f32 1.0, %v2983
        %v2985 = vrcp.pop %v2737
        %v2986 = vmul.f32 1.0, %v2985
        %v2987 = vrcp.pop %v2738
        %v2988 = vmul.f32 1.0, %v2987
        %v2989 = vrcp.pop %v2739
        %v2990 = vmul.f32 1.0, %v2989
        %v2991 = vrcp.pop %v2740
        %v2992 = vmul.f32 1.0, %v2991
        %v2993 = vrcp.pop %v2741
        %v2994 = vmul.f32 1.0, %v2993
        %v2995 = vrcp.pop %v2742
        %v2996 = vmul.f32 1.0, %v2995
        %v2997 = vrcp.pop %v2743
        %v2998 = vmul.f32 1.0, %v2997
        %v2999 = vrcp.pop %v2744
        %v3000 = vmul.f32 1.0, %v2999
        %v3129 = vlaneseq
        %v3130 = vand.u32 %v3129, 127
        %v3131 = vlaneseq
        %v3132 = vshrl.u32 %v3131, 7
        %v3133 = vsub.s32 %v3130, %v3132
        %v3134 = vrot.slane %v2746, %v3133
        %v3135 = vadd.s32 %v3130, 4294967288
        %v3136 = vlaneseq
        %v3137 = vshrl.u32 %v3136, 7
        %v3138 = vsub.s32 %v3135, %v3137
        %v3139 = vrot.slane %v2748, %v3138
        %vm3140 = vcmask 130112
        %v3141 = vsel %vm3140, %v3139, %v3134
        %v3142 = vadd.s32 %v3130, 4294967280
        %v3143 = vlaneseq
        %v3144 = vshrl.u32 %v3143, 7
        %v3145 = vsub.s32 %v3142, %v3144
        %v3146 = vrot.slane %v2750, %v3145
        %vm3147 = vcmask 195712
        %v3148 = vsel %vm3147, %v3146, %v3141
        %v3149 = vadd.s32 %v3130, 4294967272
        %v3150 = vlaneseq
        %v3151 = vshrl.u32 %v3150, 7
        %v3152 = vsub.s32 %v3149, %v3151
        %v3153 = vrot.slane %v2752, %v3152
        %vm3154 = vcmask 261312
        %v3155 = vsel %vm3154, %v3153, %v3148
        %v3156 = vadd.s32 %v3130, 4294967264
        %v3157 = vlaneseq
        %v3158 = vshrl.u32 %v3157, 7
        %v3159 = vsub.s32 %v3156, %v3158
        %v3160 = vrot.slane %v2754, %v3159
        %vm3161 = vcmask 326912
        %v3162 = vsel %vm3161, %v3160, %v3155
        %v3163 = vadd.s32 %v3130, 4294967256
        %v3164 = vlaneseq
        %v3165 = vshrl.u32 %v3164, 7
        %v3166 = vsub.s32 %v3163, %v3165
        %v3167 = vrot.slane %v2756, %v3166
        %vm3168 = vcmask 392512
        %v3169 = vsel %vm3168, %v3167, %v3162
        %v3170 = vadd.s32 %v3130, 4294967248
        %v3171 = vlaneseq
        %v3172 = vshrl.u32 %v3171, 7
        %v3173 = vsub.s32 %v3170, %v3172
        %v3174 = vrot.slane %v2758, %v3173
        %vm3175 = vcmask 458112
        %v3176 = vsel %vm3175, %v3174, %v3169
        %v3177 = vadd.s32 %v3130, 4294967240
        %v3178 = vlaneseq
        %v3179 = vshrl.u32 %v3178, 7
        %v3180 = vsub.s32 %v3177, %v3179
        %v3181 = vrot.slane %v2760, %v3180
        %vm3182 = vcmask 523712
        %v3183 = vsel %vm3182, %v3181, %v3176
        %v3184 = vadd.s32 %v3130, 4294967232
        %v3185 = vlaneseq
        %v3186 = vshrl.u32 %v3185, 7
        %v3187 = vsub.s32 %v3184, %v3186
        %v3188 = vrot.slane %v2762, %v3187
        %vm3189 = vcmask 589312
        %v3190 = vsel %vm3189, %v3188, %v3183
        %v3191 = vadd.s32 %v3130, 4294967224
        %v3192 = vlaneseq
        %v3193 = vshrl.u32 %v3192, 7
        %v3194 = vsub.s32 %v3191, %v3193
        %v3195 = vrot.slane %v2764, %v3194
        %vm3196 = vcmask 654912
        %v3197 = vsel %vm3196, %v3195, %v3190
        %v3198 = vadd.s32 %v3130, 4294967216
        %v3199 = vlaneseq
        %v3200 = vshrl.u32 %v3199, 7
        %v3201 = vsub.s32 %v3198, %v3200
        %v3202 = vrot.slane %v2766, %v3201
        %vm3203 = vcmask 720512
        %v3204 = vsel %vm3203, %v3202, %v3197
        %v3205 = vadd.s32 %v3130, 4294967208
        %v3206 = vlaneseq
        %v3207 = vshrl.u32 %v3206, 7
        %v3208 = vsub.s32 %v3205, %v3207
        %v3209 = vrot.slane %v2768, %v3208
        %vm3210 = vcmask 786112
        %v3211 = vsel %vm3210, %v3209, %v3204
        %v3212 = vadd.s32 %v3130, 4294967200
        %v3213 = vlaneseq
        %v3214 = vshrl.u32 %v3213, 7
        %v3215 = vsub.s32 %v3212, %v3214
        %v3216 = vrot.slane %v2770, %v3215
        %vm3217 = vcmask 851712
        %v3218 = vsel %vm3217, %v3216, %v3211
        %v3219 = vadd.s32 %v3130, 4294967192
        %v3220 = vlaneseq
        %v3221 = vshrl.u32 %v3220, 7
        %v3222 = vsub.s32 %v3219, %v3221
        %v3223 = vrot.slane %v2772, %v3222
        %vm3224 = vcmask 917312
        %v3225 = vsel %vm3224, %v3223, %v3218
        %v3226 = vadd.s32 %v3130, 4294967184
        %v3227 = vlaneseq
        %v3228 = vshrl.u32 %v3227, 7
        %v3229 = vsub.s32 %v3226, %v3228
        %v3230 = vrot.slane %v2774, %v3229
        %vm3231 = vcmask 982912
        %v3232 = vsel %vm3231, %v3230, %v3225
        %v3233 = vadd.s32 %v3130, 4294967176
        %v3234 = vlaneseq
        %v3235 = vshrl.u32 %v3234, 7
        %v3236 = vsub.s32 %v3233, %v3235
        %v3237 = vrot.slane %v2776, %v3236
        %vm3238 = vcmask 1048512
        %v3239 = vsel %vm3238, %v3237, %v3232
        %v3240 = vlaneseq
        %v3241 = vshrl.u32 %v3240, 7
        %v3242 = vsub.s32 %v3130, %v3241
        %v3243 = vrot.slane %v2778, %v3242
        %v3244 = vlaneseq
        %v3245 = vshrl.u32 %v3244, 7
        %v3246 = vsub.s32 %v3135, %v3245
        %v3247 = vrot.slane %v2780, %v3246
        %v3248 = vsel %vm3140, %v3247, %v3243
        %v3249 = vlaneseq
        %v3250 = vshrl.u32 %v3249, 7
        %v3251 = vsub.s32 %v3142, %v3250
        %v3252 = vrot.slane %v2782, %v3251
        %v3253 = vsel %vm3147, %v3252, %v3248
        %v3254 = vlaneseq
        %v3255 = vshrl.u32 %v3254, 7
        %v3256 = vsub.s32 %v3149, %v3255
        %v3257 = vrot.slane %v2784, %v3256
        %v3258 = vsel %vm3154, %v3257, %v3253
        %v3259 = vlaneseq
        %v3260 = vshrl.u32 %v3259, 7
        %v3261 = vsub.s32 %v3156, %v3260
        %v3262 = vrot.slane %v2786, %v3261
        %v3263 = vsel %vm3161, %v3262, %v3258
        %v3264 = vlaneseq
        %v3265 = vshrl.u32 %v3264, 7
        %v3266 = vsub.s32 %v3163, %v3265
        %v3267 = vrot.slane %v2788, %v3266
        %v3268 = vsel %vm3168, %v3267, %v3263
        %v3269 = vlaneseq
        %v3270 = vshrl.u32 %v3269, 7
        %v3271 = vsub.s32 %v3170, %v3270
        %v3272 = vrot.slane %v2790, %v3271
        %v3273 = vsel %vm3175, %v3272, %v3268
        %v3274 = vlaneseq
        %v3275 = vshrl.u32 %v3274, 7
        %v3276 = vsub.s32 %v3177, %v3275
        %v3277 = vrot.slane %v2792, %v3276
        %v3278 = vsel %vm3182, %v3277, %v3273
        %v3279 = vlaneseq
        %v3280 = vshrl.u32 %v3279, 7
        %v3281 = vsub.s32 %v3184, %v3280
        %v3282 = vrot.slane %v2794, %v3281
        %v3283 = vsel %vm3189, %v3282, %v3278
        %v3284 = vlaneseq
        %v3285 = vshrl.u32 %v3284, 7
        %v3286 = vsub.s32 %v3191, %v3285
        %v3287 = vrot.slane %v2796, %v3286
        %v3288 = vsel %vm3196, %v3287, %v3283
        %v3289 = vlaneseq
        %v3290 = vshrl.u32 %v3289, 7
        %v3291 = vsub.s32 %v3198, %v3290
        %v3292 = vrot.slane %v2798, %v3291
        %v3293 = vsel %vm3203, %v3292, %v3288
        %v3294 = vlaneseq
        %v3295 = vshrl.u32 %v3294, 7
        %v3296 = vsub.s32 %v3205, %v3295
        %v3297 = vrot.slane %v2800, %v3296
        %v3298 = vsel %vm3210, %v3297, %v3293
        %v3299 = vlaneseq
        %v3300 = vshrl.u32 %v3299, 7
        %v3301 = vsub.s32 %v3212, %v3300
        %v3302 = vrot.slane %v2802, %v3301
        %v3303 = vsel %vm3217, %v3302, %v3298
        %v3304 = vlaneseq
        %v3305 = vshrl.u32 %v3304, 7
        %v3306 = vsub.s32 %v3219, %v3305
        %v3307 = vrot.slane %v2804, %v3306
        %v3308 = vsel %vm3224, %v3307, %v3303
        %v3309 = vlaneseq
        %v3310 = vshrl.u32 %v3309, 7
        %v3311 = vsub.s32 %v3226, %v3310
        %v3312 = vrot.slane %v2806, %v3311
        %v3313 = vsel %vm3231, %v3312, %v3308
        %v3314 = vlaneseq
        %v3315 = vshrl.u32 %v3314, 7
        %v3316 = vsub.s32 %v3233, %v3315
        %v3317 = vrot.slane %v2808, %v3316
        %v3318 = vsel %vm3238, %v3317, %v3313
        %v3319 = vlaneseq
        %v3320 = vshrl.u32 %v3319, 7
        %v3321 = vsub.s32 %v3130, %v3320
        %v3322 = vrot.slane %v2810, %v3321
        %v3323 = vlaneseq
        %v3324 = vshrl.u32 %v3323, 7
        %v3325 = vsub.s32 %v3135, %v3324
        %v3326 = vrot.slane %v2812, %v3325
        %v3327 = vsel %vm3140, %v3326, %v3322
        %v3328 = vlaneseq
        %v3329 = vshrl.u32 %v3328, 7
        %v3330 = vsub.s32 %v3142, %v3329
        %v3331 = vrot.slane %v2814, %v3330
        %v3332 = vsel %vm3147, %v3331, %v3327
        %v3333 = vlaneseq
        %v3334 = vshrl.u32 %v3333, 7
        %v3335 = vsub.s32 %v3149, %v3334
        %v3336 = vrot.slane %v2816, %v3335
        %v3337 = vsel %vm3154, %v3336, %v3332
        %v3338 = vlaneseq
        %v3339 = vshrl.u32 %v3338, 7
        %v3340 = vsub.s32 %v3156, %v3339
        %v3341 = vrot.slane %v2818, %v3340
        %v3342 = vsel %vm3161, %v3341, %v3337
        %v3343 = vlaneseq
        %v3344 = vshrl.u32 %v3343, 7
        %v3345 = vsub.s32 %v3163, %v3344
        %v3346 = vrot.slane %v2820, %v3345
        %v3347 = vsel %vm3168, %v3346, %v3342
        %v3348 = vlaneseq
        %v3349 = vshrl.u32 %v3348, 7
        %v3350 = vsub.s32 %v3170, %v3349
        %v3351 = vrot.slane %v2822, %v3350
        %v3352 = vsel %vm3175, %v3351, %v3347
        %v3353 = vlaneseq
        %v3354 = vshrl.u32 %v3353, 7
        %v3355 = vsub.s32 %v3177, %v3354
        %v3356 = vrot.slane %v2824, %v3355
        %v3357 = vsel %vm3182, %v3356, %v3352
        %v3358 = vlaneseq
        %v3359 = vshrl.u32 %v3358, 7
        %v3360 = vsub.s32 %v3184, %v3359
        %v3361 = vrot.slane %v2826, %v3360
        %v3362 = vsel %vm3189, %v3361, %v3357
        %v3363 = vlaneseq
        %v3364 = vshrl.u32 %v3363, 7
        %v3365 = vsub.s32 %v3191, %v3364
        %v3366 = vrot.slane %v2828, %v3365
        %v3367 = vsel %vm3196, %v3366, %v3362
        %v3368 = vlaneseq
        %v3369 = vshrl.u32 %v3368, 7
        %v3370 = vsub.s32 %v3198, %v3369
        %v3371 = vrot.slane %v2830, %v3370
        %v3372 = vsel %vm3203, %v3371, %v3367
        %v3373 = vlaneseq
        %v3374 = vshrl.u32 %v3373, 7
        %v3375 = vsub.s32 %v3205, %v3374
        %v3376 = vrot.slane %v2832, %v3375
        %v3377 = vsel %vm3210, %v3376, %v3372
        %v3378 = vlaneseq
        %v3379 = vshrl.u32 %v3378, 7
        %v3380 = vsub.s32 %v3212, %v3379
        %v3381 = vrot.slane %v2834, %v3380
        %v3382 = vsel %vm3217, %v3381, %v3377
        %v3383 = vlaneseq
        %v3384 = vshrl.u32 %v3383, 7
        %v3385 = vsub.s32 %v3219, %v3384
        %v3386 = vrot.slane %v2836, %v3385
        %v3387 = vsel %vm3224, %v3386, %v3382
        %v3388 = vlaneseq
        %v3389 = vshrl.u32 %v3388, 7
        %v3390 = vsub.s32 %v3226, %v3389
        %v3391 = vrot.slane %v2838, %v3390
        %v3392 = vsel %vm3231, %v3391, %v3387
        %v3393 = vlaneseq
        %v3394 = vshrl.u32 %v3393, 7
        %v3395 = vsub.s32 %v3233, %v3394
        %v3396 = vrot.slane %v2840, %v3395
        %v3397 = vsel %vm3238, %v3396, %v3392
        %v3398 = vlaneseq
        %v3399 = vshrl.u32 %v3398, 7
        %v3400 = vsub.s32 %v3130, %v3399
        %v3401 = vrot.slane %v2842, %v3400
        %v3402 = vlaneseq
        %v3403 = vshrl.u32 %v3402, 7
        %v3404 = vsub.s32 %v3135, %v3403
        %v3405 = vrot.slane %v2844, %v3404
        %v3406 = vsel %vm3140, %v3405, %v3401
        %v3407 = vlaneseq
        %v3408 = vshrl.u32 %v3407, 7
        %v3409 = vsub.s32 %v3142, %v3408
        %v3410 = vrot.slane %v2846, %v3409
        %v3411 = vsel %vm3147, %v3410, %v3406
        %v3412 = vlaneseq
        %v3413 = vshrl.u32 %v3412, 7
        %v3414 = vsub.s32 %v3149, %v3413
        %v3415 = vrot.slane %v2848, %v3414
        %v3416 = vsel %vm3154, %v3415, %v3411
        %v3417 = vlaneseq
        %v3418 = vshrl.u32 %v3417, 7
        %v3419 = vsub.s32 %v3156, %v3418
        %v3420 = vrot.slane %v2850, %v3419
        %v3421 = vsel %vm3161, %v3420, %v3416
        %v3422 = vlaneseq
        %v3423 = vshrl.u32 %v3422, 7
        %v3424 = vsub.s32 %v3163, %v3423
        %v3425 = vrot.slane %v2852, %v3424
        %v3426 = vsel %vm3168, %v3425, %v3421
        %v3427 = vlaneseq
        %v3428 = vshrl.u32 %v3427, 7
        %v3429 = vsub.s32 %v3170, %v3428
        %v3430 = vrot.slane %v2854, %v3429
        %v3431 = vsel %vm3175, %v3430, %v3426
        %v3432 = vlaneseq
        %v3433 = vshrl.u32 %v3432, 7
        %v3434 = vsub.s32 %v3177, %v3433
        %v3435 = vrot.slane %v2856, %v3434
        %v3436 = vsel %vm3182, %v3435, %v3431
        %v3437 = vlaneseq
        %v3438 = vshrl.u32 %v3437, 7
        %v3439 = vsub.s32 %v3184, %v3438
        %v3440 = vrot.slane %v2858, %v3439
        %v3441 = vsel %vm3189, %v3440, %v3436
        %v3442 = vlaneseq
        %v3443 = vshrl.u32 %v3442, 7
        %v3444 = vsub.s32 %v3191, %v3443
        %v3445 = vrot.slane %v2860, %v3444
        %v3446 = vsel %vm3196, %v3445, %v3441
        %v3447 = vlaneseq
        %v3448 = vshrl.u32 %v3447, 7
        %v3449 = vsub.s32 %v3198, %v3448
        %v3450 = vrot.slane %v2862, %v3449
        %v3451 = vsel %vm3203, %v3450, %v3446
        %v3452 = vlaneseq
        %v3453 = vshrl.u32 %v3452, 7
        %v3454 = vsub.s32 %v3205, %v3453
        %v3455 = vrot.slane %v2864, %v3454
        %v3456 = vsel %vm3210, %v3455, %v3451
        %v3457 = vlaneseq
        %v3458 = vshrl.u32 %v3457, 7
        %v3459 = vsub.s32 %v3212, %v3458
        %v3460 = vrot.slane %v2866, %v3459
        %v3461 = vsel %vm3217, %v3460, %v3456
        %v3462 = vlaneseq
        %v3463 = vshrl.u32 %v3462, 7
        %v3464 = vsub.s32 %v3219, %v3463
        %v3465 = vrot.slane %v2868, %v3464
        %v3466 = vsel %vm3224, %v3465, %v3461
        %v3467 = vlaneseq
        %v3468 = vshrl.u32 %v3467, 7
        %v3469 = vsub.s32 %v3226, %v3468
        %v3470 = vrot.slane %v2870, %v3469
        %v3471 = vsel %vm3231, %v3470, %v3466
        %v3472 = vlaneseq
        %v3473 = vshrl.u32 %v3472, 7
        %v3474 = vsub.s32 %v3233, %v3473
        %v3475 = vrot.slane %v2872, %v3474
        %v3476 = vsel %vm3238, %v3475, %v3471
        %v3477 = vlaneseq
        %v3478 = vshrl.u32 %v3477, 7
        %v3479 = vsub.s32 %v3130, %v3478
        %v3480 = vrot.slane %v2874, %v3479
        %v3481 = vlaneseq
        %v3482 = vshrl.u32 %v3481, 7
        %v3483 = vsub.s32 %v3135, %v3482
        %v3484 = vrot.slane %v2876, %v3483
        %v3485 = vsel %vm3140, %v3484, %v3480
        %v3486 = vlaneseq
        %v3487 = vshrl.u32 %v3486, 7
        %v3488 = vsub.s32 %v3142, %v3487
        %v3489 = vrot.slane %v2878, %v3488
        %v3490 = vsel %vm3147, %v3489, %v3485
        %v3491 = vlaneseq
        %v3492 = vshrl.u32 %v3491, 7
        %v3493 = vsub.s32 %v3149, %v3492
        %v3494 = vrot.slane %v2880, %v3493
        %v3495 = vsel %vm3154, %v3494, %v3490
        %v3496 = vlaneseq
        %v3497 = vshrl.u32 %v3496, 7
        %v3498 = vsub.s32 %v3156, %v3497
        %v3499 = vrot.slane %v2882, %v3498
        %v3500 = vsel %vm3161, %v3499, %v3495
        %v3501 = vlaneseq
        %v3502 = vshrl.u32 %v3501, 7
        %v3503 = vsub.s32 %v3163, %v3502
        %v3504 = vrot.slane %v2884, %v3503
        %v3505 = vsel %vm3168, %v3504, %v3500
        %v3506 = vlaneseq
        %v3507 = vshrl.u32 %v3506, 7
        %v3508 = vsub.s32 %v3170, %v3507
        %v3509 = vrot.slane %v2886, %v3508
        %v3510 = vsel %vm3175, %v3509, %v3505
        %v3511 = vlaneseq
        %v3512 = vshrl.u32 %v3511, 7
        %v3513 = vsub.s32 %v3177, %v3512
        %v3514 = vrot.slane %v2888, %v3513
        %v3515 = vsel %vm3182, %v3514, %v3510
        %v3516 = vlaneseq
        %v3517 = vshrl.u32 %v3516, 7
        %v3518 = vsub.s32 %v3184, %v3517
        %v3519 = vrot.slane %v2890, %v3518
        %v3520 = vsel %vm3189, %v3519, %v3515
        %v3521 = vlaneseq
        %v3522 = vshrl.u32 %v3521, 7
        %v3523 = vsub.s32 %v3191, %v3522
        %v3524 = vrot.slane %v2892, %v3523
        %v3525 = vsel %vm3196, %v3524, %v3520
        %v3526 = vlaneseq
        %v3527 = vshrl.u32 %v3526, 7
        %v3528 = vsub.s32 %v3198, %v3527
        %v3529 = vrot.slane %v2894, %v3528
        %v3530 = vsel %vm3203, %v3529, %v3525
        %v3531 = vlaneseq
        %v3532 = vshrl.u32 %v3531, 7
        %v3533 = vsub.s32 %v3205, %v3532
        %v3534 = vrot.slane %v2896, %v3533
        %v3535 = vsel %vm3210, %v3534, %v3530
        %v3536 = vlaneseq
        %v3537 = vshrl.u32 %v3536, 7
        %v3538 = vsub.s32 %v3212, %v3537
        %v3539 = vrot.slane %v2898, %v3538
        %v3540 = vsel %vm3217, %v3539, %v3535
        %v3541 = vlaneseq
        %v3542 = vshrl.u32 %v3541, 7
        %v3543 = vsub.s32 %v3219, %v3542
        %v3544 = vrot.slane %v2900, %v3543
        %v3545 = vsel %vm3224, %v3544, %v3540
        %v3546 = vlaneseq
        %v3547 = vshrl.u32 %v3546, 7
        %v3548 = vsub.s32 %v3226, %v3547
        %v3549 = vrot.slane %v2902, %v3548
        %v3550 = vsel %vm3231, %v3549, %v3545
        %v3551 = vlaneseq
        %v3552 = vshrl.u32 %v3551, 7
        %v3553 = vsub.s32 %v3233, %v3552
        %v3554 = vrot.slane %v2904, %v3553
        %v3555 = vsel %vm3238, %v3554, %v3550
        %v3556 = vlaneseq
        %v3557 = vshrl.u32 %v3556, 7
        %v3558 = vsub.s32 %v3130, %v3557
        %v3559 = vrot.slane %v2906, %v3558
        %v3560 = vlaneseq
        %v3561 = vshrl.u32 %v3560, 7
        %v3562 = vsub.s32 %v3135, %v3561
        %v3563 = vrot.slane %v2908, %v3562
        %v3564 = vsel %vm3140, %v3563, %v3559
        %v3565 = vlaneseq
        %v3566 = vshrl.u32 %v3565, 7
        %v3567 = vsub.s32 %v3142, %v3566
        %v3568 = vrot.slane %v2910, %v3567
        %v3569 = vsel %vm3147, %v3568, %v3564
        %v3570 = vlaneseq
        %v3571 = vshrl.u32 %v3570, 7
        %v3572 = vsub.s32 %v3149, %v3571
        %v3573 = vrot.slane %v2912, %v3572
        %v3574 = vsel %vm3154, %v3573, %v3569
        %v3575 = vlaneseq
        %v3576 = vshrl.u32 %v3575, 7
        %v3577 = vsub.s32 %v3156, %v3576
        %v3578 = vrot.slane %v2914, %v3577
        %v3579 = vsel %vm3161, %v3578, %v3574
        %v3580 = vlaneseq
        %v3581 = vshrl.u32 %v3580, 7
        %v3582 = vsub.s32 %v3163, %v3581
        %v3583 = vrot.slane %v2916, %v3582
        %v3584 = vsel %vm3168, %v3583, %v3579
        %v3585 = vlaneseq
        %v3586 = vshrl.u32 %v3585, 7
        %v3587 = vsub.s32 %v3170, %v3586
        %v3588 = vrot.slane %v2918, %v3587
        %v3589 = vsel %vm3175, %v3588, %v3584
        %v3590 = vlaneseq
        %v3591 = vshrl.u32 %v3590, 7
        %v3592 = vsub.s32 %v3177, %v3591
        %v3593 = vrot.slane %v2920, %v3592
        %v3594 = vsel %vm3182, %v3593, %v3589
        %v3595 = vlaneseq
        %v3596 = vshrl.u32 %v3595, 7
        %v3597 = vsub.s32 %v3184, %v3596
        %v3598 = vrot.slane %v2922, %v3597
        %v3599 = vsel %vm3189, %v3598, %v3594
        %v3600 = vlaneseq
        %v3601 = vshrl.u32 %v3600, 7
        %v3602 = vsub.s32 %v3191, %v3601
        %v3603 = vrot.slane %v2924, %v3602
        %v3604 = vsel %vm3196, %v3603, %v3599
        %v3605 = vlaneseq
        %v3606 = vshrl.u32 %v3605, 7
        %v3607 = vsub.s32 %v3198, %v3606
        %v3608 = vrot.slane %v2926, %v3607
        %v3609 = vsel %vm3203, %v3608, %v3604
        %v3610 = vlaneseq
        %v3611 = vshrl.u32 %v3610, 7
        %v3612 = vsub.s32 %v3205, %v3611
        %v3613 = vrot.slane %v2928, %v3612
        %v3614 = vsel %vm3210, %v3613, %v3609
        %v3615 = vlaneseq
        %v3616 = vshrl.u32 %v3615, 7
        %v3617 = vsub.s32 %v3212, %v3616
        %v3618 = vrot.slane %v2930, %v3617
        %v3619 = vsel %vm3217, %v3618, %v3614
        %v3620 = vlaneseq
        %v3621 = vshrl.u32 %v3620, 7
        %v3622 = vsub.s32 %v3219, %v3621
        %v3623 = vrot.slane %v2932, %v3622
        %v3624 = vsel %vm3224, %v3623, %v3619
        %v3625 = vlaneseq
        %v3626 = vshrl.u32 %v3625, 7
        %v3627 = vsub.s32 %v3226, %v3626
        %v3628 = vrot.slane %v2934, %v3627
        %v3629 = vsel %vm3231, %v3628, %v3624
        %v3630 = vlaneseq
        %v3631 = vshrl.u32 %v3630, 7
        %v3632 = vsub.s32 %v3233, %v3631
        %v3633 = vrot.slane %v2936, %v3632
        %v3634 = vsel %vm3238, %v3633, %v3629
        %v3635 = vlaneseq
        %v3636 = vshrl.u32 %v3635, 7
        %v3637 = vsub.s32 %v3130, %v3636
        %v3638 = vrot.slane %v2938, %v3637
        %v3639 = vlaneseq
        %v3640 = vshrl.u32 %v3639, 7
        %v3641 = vsub.s32 %v3135, %v3640
        %v3642 = vrot.slane %v2940, %v3641
        %v3643 = vsel %vm3140, %v3642, %v3638
        %v3644 = vlaneseq
        %v3645 = vshrl.u32 %v3644, 7
        %v3646 = vsub.s32 %v3142, %v3645
        %v3647 = vrot.slane %v2942, %v3646
        %v3648 = vsel %vm3147, %v3647, %v3643
        %v3649 = vlaneseq
        %v3650 = vshrl.u32 %v3649, 7
        %v3651 = vsub.s32 %v3149, %v3650
        %v3652 = vrot.slane %v2944, %v3651
        %v3653 = vsel %vm3154, %v3652, %v3648
        %v3654 = vlaneseq
        %v3655 = vshrl.u32 %v3654, 7
        %v3656 = vsub.s32 %v3156, %v3655
        %v3657 = vrot.slane %v2946, %v3656
        %v3658 = vsel %vm3161, %v3657, %v3653
        %v3659 = vlaneseq
        %v3660 = vshrl.u32 %v3659, 7
        %v3661 = vsub.s32 %v3163, %v3660
        %v3662 = vrot.slane %v2948, %v3661
        %v3663 = vsel %vm3168, %v3662, %v3658
        %v3664 = vlaneseq
        %v3665 = vshrl.u32 %v3664, 7
        %v3666 = vsub.s32 %v3170, %v3665
        %v3667 = vrot.slane %v2950, %v3666
        %v3668 = vsel %vm3175, %v3667, %v3663
        %v3669 = vlaneseq
        %v3670 = vshrl.u32 %v3669, 7
        %v3671 = vsub.s32 %v3177, %v3670
        %v3672 = vrot.slane %v2952, %v3671
        %v3673 = vsel %vm3182, %v3672, %v3668
        %v3674 = vlaneseq
        %v3675 = vshrl.u32 %v3674, 7
        %v3676 = vsub.s32 %v3184, %v3675
        %v3677 = vrot.slane %v2954, %v3676
        %v3678 = vsel %vm3189, %v3677, %v3673
        %v3679 = vlaneseq
        %v3680 = vshrl.u32 %v3679, 7
        %v3681 = vsub.s32 %v3191, %v3680
        %v3682 = vrot.slane %v2956, %v3681
        %v3683 = vsel %vm3196, %v3682, %v3678
        %v3684 = vlaneseq
        %v3685 = vshrl.u32 %v3684, 7
        %v3686 = vsub.s32 %v3198, %v3685
        %v3687 = vrot.slane %v2958, %v3686
        %v3688 = vsel %vm3203, %v3687, %v3683
        %v3689 = vlaneseq
        %v3690 = vshrl.u32 %v3689, 7
        %v3691 = vsub.s32 %v3205, %v3690
        %v3692 = vrot.slane %v2960, %v3691
        %v3693 = vsel %vm3210, %v3692, %v3688
        %v3694 = vlaneseq
        %v3695 = vshrl.u32 %v3694, 7
        %v3696 = vsub.s32 %v3212, %v3695
        %v3697 = vrot.slane %v2962, %v3696
        %v3698 = vsel %vm3217, %v3697, %v3693
        %v3699 = vlaneseq
        %v3700 = vshrl.u32 %v3699, 7
        %v3701 = vsub.s32 %v3219, %v3700
        %v3702 = vrot.slane %v2964, %v3701
        %v3703 = vsel %vm3224, %v3702, %v3698
        %v3704 = vlaneseq
        %v3705 = vshrl.u32 %v3704, 7
        %v3706 = vsub.s32 %v3226, %v3705
        %v3707 = vrot.slane %v2966, %v3706
        %v3708 = vsel %vm3231, %v3707, %v3703
        %v3709 = vlaneseq
        %v3710 = vshrl.u32 %v3709, 7
        %v3711 = vsub.s32 %v3233, %v3710
        %v3712 = vrot.slane %v2968, %v3711
        %v3713 = vsel %vm3238, %v3712, %v3708
        %v3714 = vlaneseq
        %v3715 = vshrl.u32 %v3714, 7
        %v3716 = vsub.s32 %v3130, %v3715
        %v3717 = vrot.slane %v2970, %v3716
        %v3718 = vlaneseq
        %v3719 = vshrl.u32 %v3718, 7
        %v3720 = vsub.s32 %v3135, %v3719
        %v3721 = vrot.slane %v2972, %v3720
        %v3722 = vsel %vm3140, %v3721, %v3717
        %v3723 = vlaneseq
        %v3724 = vshrl.u32 %v3723, 7
        %v3725 = vsub.s32 %v3142, %v3724
        %v3726 = vrot.slane %v2974, %v3725
        %v3727 = vsel %vm3147, %v3726, %v3722
        %v3728 = vlaneseq
        %v3729 = vshrl.u32 %v3728, 7
        %v3730 = vsub.s32 %v3149, %v3729
        %v3731 = vrot.slane %v2976, %v3730
        %v3732 = vsel %vm3154, %v3731, %v3727
        %v3733 = vlaneseq
        %v3734 = vshrl.u32 %v3733, 7
        %v3735 = vsub.s32 %v3156, %v3734
        %v3736 = vrot.slane %v2978, %v3735
        %v3737 = vsel %vm3161, %v3736, %v3732
        %v3738 = vlaneseq
        %v3739 = vshrl.u32 %v3738, 7
        %v3740 = vsub.s32 %v3163, %v3739
        %v3741 = vrot.slane %v2980, %v3740
        %v3742 = vsel %vm3168, %v3741, %v3737
        %v3743 = vlaneseq
        %v3744 = vshrl.u32 %v3743, 7
        %v3745 = vsub.s32 %v3170, %v3744
        %v3746 = vrot.slane %v2982, %v3745
        %v3747 = vsel %vm3175, %v3746, %v3742
        %v3748 = vlaneseq
        %v3749 = vshrl.u32 %v3748, 7
        %v3750 = vsub.s32 %v3177, %v3749
        %v3751 = vrot.slane %v2984, %v3750
        %v3752 = vsel %vm3182, %v3751, %v3747
        %v3753 = vlaneseq
        %v3754 = vshrl.u32 %v3753, 7
        %v3755 = vsub.s32 %v3184, %v3754
        %v3756 = vrot.slane %v2986, %v3755
        %v3757 = vsel %vm3189, %v3756, %v3752
        %v3758 = vlaneseq
        %v3759 = vshrl.u32 %v3758, 7
        %v3760 = vsub.s32 %v3191, %v3759
        %v3761 = vrot.slane %v2988, %v3760
        %v3762 = vsel %vm3196, %v3761, %v3757
        %v3763 = vlaneseq
        %v3764 = vshrl.u32 %v3763, 7
        %v3765 = vsub.s32 %v3198, %v3764
        %v3766 = vrot.slane %v2990, %v3765
        %v3767 = vsel %vm3203, %v3766, %v3762
        %v3768 = vlaneseq
        %v3769 = vshrl.u32 %v3768, 7
        %v3770 = vsub.s32 %v3205, %v3769
        %v3771 = vrot.slane %v2992, %v3770
        %v3772 = vsel %vm3210, %v3771, %v3767
        %v3773 = vlaneseq
        %v3774 = vshrl.u32 %v3773, 7
        %v3775 = vsub.s32 %v3212, %v3774
        %v3776 = vrot.slane %v2994, %v3775
        %v3777 = vsel %vm3217, %v3776, %v3772
        %v3778 = vlaneseq
        %v3779 = vshrl.u32 %v3778, 7
        %v3780 = vsub.s32 %v3219, %v3779
        %v3781 = vrot.slane %v2996, %v3780
        %v3782 = vsel %vm3224, %v3781, %v3777
        %v3783 = vlaneseq
        %v3784 = vshrl.u32 %v3783, 7
        %v3785 = vsub.s32 %v3226, %v3784
        %v3786 = vrot.slane %v2998, %v3785
        %v3787 = vsel %vm3231, %v3786, %v3782
        %v3788 = vlaneseq
        %v3789 = vshrl.u32 %v3788, 7
        %v3790 = vsub.s32 %v3233, %v3789
        %v3791 = vrot.slane %v3000, %v3790
        %v3792 = vsel %vm3238, %v3791, %v3787
        %vm3793 = vcmask 1041409
        %v3794 = vsel %vm3793, %v3318, %v3239
        %vm3795 = vcmask 1042434
        %v3796 = vsel %vm3795, %v3397, %v3794
        %vm3797 = vcmask 1043459
        %v3798 = vsel %vm3797, %v3476, %v3796
        %vm3799 = vcmask 1044484
        %v3800 = vsel %vm3799, %v3555, %v3798
        %vm3801 = vcmask 1045509
        %v3802 = vsel %vm3801, %v3634, %v3800
        %vm3803 = vcmask 1046534
        %v3804 = vsel %vm3803, %v3713, %v3802
        %vm3805 = vcmask 1047559
        %v3806 = vsel %vm3805, %v3792, %v3804
        %3808 = vst [vmem:[%s219] sm:$0xff] %v3806
        %s3809 = sand.u32 %s138, 1
        %s3810 = scalar_lea.sflag [#allocation4], %s3809
        %s3811 = sand.u32 %s138, 1
        %s3812 = smul.addr %s3811, 8
        %s3813 = scalar_lea.vmem [#allocation3], %s3812
        // Predicated region
        $region41: #{tpu_custom_call.1} parent=39 // pred_check
          %p3814 = pneg %p148
        $region42: #{tpu_custom_call.1} parent=39 // pred_check_branch
          %3816 = sbr.rel (%p3814) target = $region44
        $region43: #{tpu_custom_call.1} parent=39 // pred_region
          %s3818 = ssub.s32 128, 128
          %3819 = vsyncadd %s3810, %s3818
          %s3820 = smul.addr %s20, 128
          %s3821 = scalar_lea.hbm %s5, %s3820
          %s3823 = sshll.u32 %s3813, 4
          %s3824 = int_to_ptr.vmem [resolvable:$true] %s3823
          %3826 = dma.vmem_to_hbm [thread:$0]  %s3824, 128, %s3821, %s3810
        $region44: #{tpu_custom_call.1} parent=39 // pred_fallthru
          _
      $region40: #{tpu_custom_call.1} parent=5 // pred_fallthru
        _
      %p3827 = scmp.le.s32.totalorder 2, %s15
      // Predicated region
      $region45: #{tpu_custom_call.1} parent=5 // pred_check
        %p3828 = pneg %p3827
      $region46: #{tpu_custom_call.1} parent=5 // pred_check_branch
        %3830 = sbr.rel (%p3828) target = $region48
      $region47: #{tpu_custom_call.1} parent=5 // pred_region
        %s3831 = ssub.s32 %s15, 2
        // Predicated region
        $region49: #{tpu_custom_call.1} parent=47 // pred_check
          %p3832 = pneg %p154
        $region50: #{tpu_custom_call.1} parent=47 // pred_check_branch
          %3834 = sbr.rel (%p3832) target = $region52
        $region51: #{tpu_custom_call.1} parent=47 // pred_region
          %s3835 = sand.u32 %s139, 1
          %s3836 = scalar_lea.sflag [#allocation4], %s3835
          %s3837 = sand.u32 %s139, 1
          %s3838 = smul.addr %s3837, 8
          %s3839 = scalar_lea.vmem [#allocation3], %s3838
          %3840 = dma.done %s3836, 128
        $region52: #{tpu_custom_call.1} parent=47 // pred_fallthru
          _
      $region48: #{tpu_custom_call.1} parent=5 // pred_fallthru
        _
    $region6: #{tpu_custom_call.1} parent=1 // loop_footer
      %s19 = sadd.s32 1, %s15
    $region7: #{tpu_custom_call.1} parent=1 // loop_footer_branch
      %14 = sbr.rel target = $region3
    $region8: #{tpu_custom_call.1} parent=1 // loop_exit
      _
    %3841 = vsyncpa [#allocation4], 1
    %s3842 = scalar_lea.sflag [#allocation4], 1
    %3843 = vsyncpa %s3842, 1

</llo_original>
